<compile_context>
chip_gen: v7x
topology: tpu7x:2x2x1
jax: 0.10.0
libtpu: 0.0.40
codegen_flags: <defaults>
</compile_context>

<pallas_src>
import functools
import math

import jax
import jax.numpy as jnp
import numpy as np
from jax.experimental import pallas as pl
from jax.experimental.pallas import tpu as pltpu

# ---------------- synthetic "rp" configuration ----------------
IAB_NUM = 10
MAX_UE_PER_BS = 5
BACKHAUL_NUM = 1
TRAIN_FEATURE = 6
EPS = 1e-8

UNIT_INPUT = 6
EMB_SIZE = 30
SMALL_IN = EMB_SIZE * MAX_UE_PER_BS + 1            # 151
SMALL_HID = SMALL_IN                               # 151
SMALL_OUT = (MAX_UE_PER_BS + BACKHAUL_NUM) * 2     # 12
BIG_IN = EMB_SIZE * IAB_NUM                        # 300 (big MLP dead in forward)
GCN_H1 = 2 * 16                                    # 32
GCN_H2 = 4 * 16                                    # 64
UEIDX_W = MAX_UE_PER_BS * 2                        # 10 indicator cols per node

# ---------------- padded / kernel-facing sizes ----------------
NODE_FEAT_P = 8                                    # graph node feats 7 -> 8
UE_IN_P = 32                                       # raw per-node UE feats 30 -> 32
EMB_P = 32                                         # per-UE embedding 30 -> 32
E_P = MAX_UE_PER_BS * EMB_P                        # 160
SMALL_HID_P = 152                                  # 151 -> 152
LANE = 128                                         # lane-dense logit width
OUT_P = 16                                         # stored output lanes (12 valid)
NEG = -1e30                                        # softmax "masked" bias

_SQRT1_2 = 1.0 / math.sqrt(2.0)
APPROX_GELU = False   # True trades exact-erf parity for EUP-slot tanh GELU


def _gelu(x):
    if APPROX_GELU:
        return jax.nn.gelu(x, approximate=True)
    # exact GELU (PyTorch nn.GELU / F.gelu default), kept in f32.
    return 0.5 * x * (1.0 + jax.lax.erf(x * _SQRT1_2))


# ---------------- BlockSpec helpers ----------------
def _bblock_spec(bb, full_shape):
    """Block over the batch dim (dim 1 in node-leading layout)."""
    n, _, last = (int(s) for s in full_shape)
    return pl.BlockSpec((n, bb, last), lambda g: (0, g, 0))


def _resident_spec(full_shape):
    """Full-array block with constant index_map -> stays VMEM-resident."""
    shape = tuple(int(s) for s in full_shape)
    if len(shape) == 2:
        return pl.BlockSpec(shape, lambda g: (0, 0))
    return pl.BlockSpec(shape, lambda g: (0, 0, 0))


def _pick_batch_block(b):
    """Samples per grid step.

    * bb == B (block == full array) is always legal, used for small batches.
    * When splitting, bb must be a multiple of 32 (batch is the second-minor
      dim in the node-leading layout) and we prefer an even number of steps so
      a v7x "parallel" grid can shard across both TensorCores.
    * Cap 256 keeps per-step intermediates well under v7x's 64 MiB VMEM (and
      the 48 MiB scoped limit set below) on all of v5e/v6e/v7x.
    """
    if b < 64:
        return b
    for cand in (256, 128, 64, 32):
        if b % cand == 0 and (b // cand) % 2 == 0:
            return cand
    for cand in (256, 128, 64, 32):
        if b % cand == 0:
            return cand
    return b


# ---------------- the single fused kernel ----------------
def _fused_kernel(a_ref, gx_ref, ue_ref, idx_ref,
                  c1w_ref, c1b_ref, c2w_ref, c2b_ref, fcw_ref, fcb_ref,
                  ew1_ref, eb1_ref, ew2_ref, eb2_ref,
                  sw1_ref, sw1i_ref, sb1_ref, sw2_ref, sb2_ref, sw3_ref, sb3_ref,
                  sel_ref, selb_ref, diag_ref,
                  o_ref, *, eps):
    n, bb, _ = gx_ref.shape                                   # (10, bb, 8)
    r = n * bb

    # ---------------- big_gcn branch ----------------
    a = a_ref[...]                                            # (10, bb, 10) f32
    x = gx_ref[...]                                           # (10, bb, 8)  bf16

    # GCNConv1: XW on the MXU, A_hat aggregation as unrolled VPU FMA in f32.
    xw = jnp.dot(x.reshape(r, NODE_FEAT_P), c1w_ref[...],
                 preferred_element_type=jnp.float32).reshape(n, bb, GCN_H1)
    h = a[:, :, 0:1] * xw[0]
    for j in range(1, n):
        h = h + a[:, :, j:j + 1] * xw[j]
    h = _gelu(h + c1b_ref[...])                               # (10, bb, 32) f32

    # GCNConv2
    xw = jnp.dot(h.reshape(r, GCN_H1).astype(jnp.bfloat16), c2w_ref[...],
                 preferred_element_type=jnp.float32).reshape(n, bb, GCN_H2)
    h = a[:, :, 0:1] * xw[0]
    for j in range(1, n):
        h = h + a[:, :, j:j + 1] * xw[j]
    h = _gelu(h + c2b_ref[...])                               # (10, bb, 64) f32

    # fc1 over the node-major flattened features: 10 relayout-free leading-dim
    # dots (h[i] is a free index in the node-leading layout), f32 accumulate.
    logits = fcb_ref[...]                                     # (1, 128) f32, pads = -1e30
    for i in range(n):
        logits = logits + jnp.dot(h[i].astype(jnp.bfloat16), fcw_ref[i],
                                  preferred_element_type=jnp.float32)

    # softmax over the (padded) 10 IAB logits
    logits = logits - jnp.max(logits, axis=-1, keepdims=True)
    e = jnp.exp(logits)
    x_iabs = e * pl.reciprocal(jnp.sum(e, axis=-1, keepdims=True), approx=True)

    # per-(node, batch) scalar: iab[i, b, 0] = x_iabs[b, i]
    # (diag-mask multiply + lane reduce; stays in VMEM, no HBM round trip)
    iab = jnp.sum(x_iabs[None, :, :] * diag_ref[...], axis=-1, keepdims=True)
    iab = iab.reshape(r, 1)                                   # (r, 1) f32

    # ---------------- UE embedding + small MLP + alloc head ----------------
    ue = ue_ref[...].reshape(r, UE_IN_P)                      # (r, 32) bf16

    # shared per-UE embedding (block-diagonal weights, 6-row input stride)
    e1 = jnp.dot(ue, ew1_ref[...], preferred_element_type=jnp.float32) + eb1_ref[...]
    e1 = _gelu(e1)                                            # (r, 160) f32
    e2 = jnp.dot(e1.astype(jnp.bfloat16), ew2_ref[...],
                 preferred_element_type=jnp.float32) + eb2_ref[...]       # (r, 160)

    # small MLP; concat([embedding, iab]) @ W1 == e2 @ W1_e + iab * w1_iab_row
    h1 = jnp.dot(e2.astype(jnp.bfloat16), sw1_ref[...],
                 preferred_element_type=jnp.float32)
    h1 = _gelu(h1 + iab * sw1i_ref[...] + sb1_ref[...])       # (r, 152)
    h2 = _gelu(jnp.dot(h1.astype(jnp.bfloat16), sw2_ref[...],
                       preferred_element_type=jnp.float32) + sb2_ref[...])
    lg = jnp.dot(h2.astype(jnp.bfloat16), sw3_ref[...],
                 preferred_element_type=jnp.float32) + sb3_ref[...]       # (r, 128)

    # softmax over the (padded) 12 outputs
    lg = lg - jnp.max(lg, axis=-1, keepdims=True)
    p = jnp.exp(lg)
    p = p * pl.reciprocal(jnp.sum(p, axis=-1, keepdims=True), approx=True)

    # 128-lane indicator built in-kernel from UEIdx (selector matmul + const row);
    # lanes >= 12 are irrelevant because p is exactly 0 there.
    ind = jnp.dot(idx_ref[...].reshape(r, UEIDX_W), sel_ref[...],
                  preferred_element_type=jnp.float32) + selb_ref[...]     # (r, 128)

    # indicator-normalised allocation head: p*ind / (sum(p*ind)+eps) * iab
    w = p * ind
    out = w * pl.reciprocal(jnp.sum(w, axis=-1, keepdims=True) + eps,
                            approx=True) * iab
    o_ref[...] = out[:, :OUT_P].reshape(n, bb, OUT_P).astype(o_ref.dtype)


def fused_call(a_t, gx, ue, idx, kp, bb):
    B = gx.shape[1]
    weights = (kp["conv1_w"], kp["conv1_b"], kp["conv2_w"], kp["conv2_b"],
               kp["fc1_w"], kp["fc1_b"],
               kp["embed_w1"], kp["embed_b1"], kp["embed_w2"], kp["embed_b2"],
               kp["small_w1e"], kp["small_w1i"], kp["small_b1"],
               kp["small_w2"], kp["small_b2"], kp["small_w3"], kp["small_b3"],
               kp["sel"], kp["sel_b"], kp["diag"])
    in_specs = ([_bblock_spec(bb, a_t.shape), _bblock_spec(bb, gx.shape),
                 _bblock_spec(bb, ue.shape), _bblock_spec(bb, idx.shape)]
                + [_resident_spec(w.shape) for w in weights])
    return pl.pallas_call(
        functools.partial(_fused_kernel, eps=EPS),
        out_shape=jax.ShapeDtypeStruct((IAB_NUM, B, OUT_P), jnp.float32),
        grid=(B // bb,),
        in_specs=in_specs,
        out_specs=pl.BlockSpec((IAB_NUM, bb, OUT_P), lambda g: (0, g, 0)),
        compiler_params=pltpu.CompilerParams(
            dimension_semantics=("parallel",),
            vmem_limit_bytes=48 * 1024 * 1024),
    )(a_t, gx, ue, idx, *weights)


# ---------------- host-side preprocessing ----------------
def build_norm_adj_per_sample(edge_index, batch, n):
    """Per-sample D^-1/2 (A + I) D^-1/2 from a batched edge_index (host numpy)."""
    ei = np.asarray(edge_index)
    a = np.zeros((batch, n, n), np.float32)
    for s, d in zip(ei[0], ei[1]):
        b = int(s) // n
        assert int(d) // n == b, "edge_index must not cross samples"
        a[b, int(d) % n, int(s) % n] += 1.0
    a += np.eye(n, dtype=np.float32)[None]
    deg = a.sum(axis=2)
    d_is = 1.0 / np.sqrt(deg)
    return a * d_is[:, :, None] * d_is[:, None, :]


def init_params(key):
    """PyTorch-style (uniform +-1/sqrt(fan_in)) init of all module parameters."""
    def lin(k, fan_in, fan_out):
        k1, k2 = jax.random.split(k)
        bound = 1.0 / math.sqrt(fan_in)
        w = jax.random.uniform(k1, (fan_in, fan_out), jnp.float32, -bound, bound)
        b = jax.random.uniform(k2, (fan_out,), jnp.float32, -bound, bound)
        return w, b

    ks = jax.random.split(key, 16)
    p = {}
    p["embed_w1"], p["embed_b1"] = lin(ks[0], UNIT_INPUT, EMB_SIZE)
    p["embed_w2"], p["embed_b2"] = lin(ks[1], EMB_SIZE, EMB_SIZE)
    p["small_w1"], p["small_b1"] = lin(ks[2], SMALL_IN, SMALL_HID)
    p["small_w2"], p["small_b2"] = lin(ks[3], SMALL_HID, SMALL_HID)
    p["small_w3"], p["small_b3"] = lin(ks[4], SMALL_HID, SMALL_OUT)
    # Present in __init__ but dead in forward (IABnode is always 1; big/fc2 unused):
    p["smallD_w1"], p["smallD_b1"] = lin(ks[5], SMALL_IN, SMALL_HID)
    p["smallD_w2"], p["smallD_b2"] = lin(ks[6], SMALL_HID, SMALL_HID)
    p["smallD_w3"], p["smallD_b3"] = lin(ks[7], SMALL_HID, SMALL_OUT)
    p["big_w1"], p["big_b1"] = lin(ks[8], BIG_IN, BIG_IN)
    p["big_w2"], p["big_b2"] = lin(ks[9], BIG_IN, BIG_IN)
    p["big_w3"], p["big_b3"] = lin(ks[10], BIG_IN, 10)
    p["fc2_w"], p["fc2_b"] = lin(ks[11], 10, 10)
    # Used:
    p["conv1_w"], p["conv1_b"] = lin(ks[12], 7, GCN_H1)
    p["conv2_w"], p["conv2_b"] = lin(ks[13], GCN_H1, GCN_H2)
    p["fc1_w"], p["fc1_b"] = lin(ks[14], GCN_H2 * IAB_NUM, 10)
    return p


def prepare_params(p):
    """One-time host-side padding / layout rearrangement / bf16 cast of weights."""
    f32, bf16 = jnp.float32, jnp.bfloat16

    def pad2(w, rows, cols):
        return jnp.zeros((rows, cols), f32).at[:w.shape[0], :w.shape[1]].set(w)

    k = {}
    # --- GCN branch ---
    k["conv1_w"] = pad2(p["conv1_w"], NODE_FEAT_P, GCN_H1).astype(bf16)       # (8,32)
    k["conv1_b"] = p["conv1_b"].reshape(1, 1, GCN_H1).astype(f32)
    k["conv2_w"] = p["conv2_w"].astype(bf16)                                  # (32,64)
    k["conv2_b"] = p["conv2_b"].reshape(1, 1, GCN_H2).astype(f32)
    fcw = jnp.zeros((IAB_NUM, GCN_H2, LANE), f32)
    fcw = fcw.at[:, :, :IAB_NUM].set(p["fc1_w"].reshape(IAB_NUM, GCN_H2, IAB_NUM))
    k["fc1_w"] = fcw.astype(bf16)                                             # (10,64,128)
    k["fc1_b"] = jnp.full((1, LANE), NEG, f32).at[0, :IAB_NUM].set(p["fc1_b"])

    # --- shared UE embedding as block-diagonal over the 5 UEs (6-row stride in) ---
    ew1 = jnp.zeros((UE_IN_P, E_P), f32)                                      # (32,160)
    ew2 = jnp.zeros((E_P, E_P), f32)                                          # (160,160)
    eb1 = jnp.zeros((1, E_P), f32)
    eb2 = jnp.zeros((1, E_P), f32)
    for u in range(MAX_UE_PER_BS):
        ew1 = ew1.at[u * TRAIN_FEATURE:(u + 1) * TRAIN_FEATURE,
                     u * EMB_P:u * EMB_P + EMB_SIZE].set(p["embed_w1"])
        ew2 = ew2.at[u * EMB_P:u * EMB_P + EMB_SIZE,
                     u * EMB_P:u * EMB_P + EMB_SIZE].set(p["embed_w2"])
        eb1 = eb1.at[0, u * EMB_P:u * EMB_P + EMB_SIZE].set(p["embed_b1"])
        eb2 = eb2.at[0, u * EMB_P:u * EMB_P + EMB_SIZE].set(p["embed_b2"])
    k["embed_w1"] = ew1.astype(bf16)
    k["embed_w2"] = ew2.astype(bf16)
    k["embed_b1"] = eb1
    k["embed_b2"] = eb2

    # --- small MLP: W1 rows rearranged to the padded embedding layout;
    #     the iab row (row 150) is split out so no concat is needed in-kernel ---
    w1 = p["small_w1"]                                                        # (151,151)
    sw1 = jnp.zeros((E_P, SMALL_HID_P), f32)
    for u in range(MAX_UE_PER_BS):
        sw1 = sw1.at[u * EMB_P:u * EMB_P + EMB_SIZE, :SMALL_HID].set(
            w1[u * EMB_SIZE:(u + 1) * EMB_SIZE, :])
    k["small_w1e"] = sw1.astype(bf16)                                         # (160,152)
    k["small_w1i"] = (jnp.zeros((1, SMALL_HID_P), f32)
                      .at[0, :SMALL_HID].set(w1[SMALL_IN - 1, :]))
    k["small_b1"] = jnp.zeros((1, SMALL_HID_P), f32).at[0, :SMALL_HID].set(p["small_b1"])
    k["small_w2"] = pad2(p["small_w2"], SMALL_HID_P, SMALL_HID_P).astype(bf16)
    k["small_b2"] = jnp.zeros((1, SMALL_HID_P), f32).at[0, :SMALL_HID].set(p["small_b2"])
    sw3 = jnp.zeros((SMALL_HID_P, LANE), f32).at[:SMALL_HID, :SMALL_OUT].set(p["small_w3"])
    k["small_w3"] = sw3.astype(bf16)                                          # (152,128)
    k["small_b3"] = jnp.full((1, LANE), NEG, f32).at[0, :SMALL_OUT].set(p["small_b3"])

    # --- in-kernel indicator expansion / iab extraction constants ---
    sel = jnp.zeros((UEIDX_W, LANE), f32)
    sel = sel.at[jnp.arange(UEIDX_W), jnp.arange(UEIDX_W)].set(1.0)
    k["sel"] = sel.astype(bf16)                                               # (10,128)
    k["sel_b"] = (jnp.zeros((1, LANE), f32)
                  .at[0, UEIDX_W:UEIDX_W + 2].set(1.0))                       # lanes 10,11 = 1
    diag = jnp.zeros((IAB_NUM, 1, LANE), f32)
    diag = diag.at[jnp.arange(IAB_NUM), 0, jnp.arange(IAB_NUM)].set(1.0)
    k["diag"] = diag                                                          # (10,1,128)
    return k


# ---------------- forward (thin JAX glue around the single fused kernel) ----------------
def forward(kparams, x, ue_idx, graph_x, a_hat_t):
    B = x.shape[0]
    bb = _pick_batch_block(B)

    # graph node features -> node-leading (10, B, 8) bf16
    gx = graph_x.reshape(B, IAB_NUM, 7).transpose(1, 0, 2)
    gx = jnp.pad(gx, ((0, 0), (0, 0), (0, NODE_FEAT_P - 7))).astype(jnp.bfloat16)

    # UE features: single 30->32 pad; per-UE 6-stride handled by the weights
    ue = x[:, TRAIN_FEATURE * IAB_NUM:].reshape(B, IAB_NUM, EMB_SIZE)
    ue = ue.transpose(1, 0, 2)
    ue = jnp.pad(ue, ((0, 0), (0, 0), (0, UE_IN_P - EMB_SIZE))).astype(jnp.bfloat16)

    idx = ue_idx.transpose(1, 0, 2).astype(jnp.bfloat16)       # (10, B, 10)

    out = fused_call(a_hat_t, gx, ue, idx, kparams, bb)        # (10, B, 16) f32
    return out.transpose(1, 0, 2)[:, :, :SMALL_OUT]            # (B, 10, 12)


if __name__ == "__main__":
    key = jax.random.PRNGKey(0)
    kparam, kx, ku, kg = jax.random.split(key, 4)
    params = init_params(kparam)
    kparams = prepare_params(params)

    B = 2
    # x: (B, 60 IAB features + 6*5*10 UE features) = (2, 360)
    x = jax.random.normal(
        kx, (B, TRAIN_FEATURE * IAB_NUM + TRAIN_FEATURE * MAX_UE_PER_BS * IAB_NUM),
        jnp.float32)
    # UEIdx: per IAB node, 2 indicator entries per UE -> (B, 10, 10)
    ue_idx = (jax.random.uniform(ku, (B, IAB_NUM, UEIDX_W)) > 0.5).astype(jnp.float32)
    # iab_graph: 10 nodes per sample, 7 features, batched undirected ring topology
    graph_x = jax.random.normal(kg, (B * IAB_NUM, 7), jnp.float32)
    edges = []
    for s in range(B):
        for node in range(IAB_NUM):
            a0 = s * IAB_NUM + node
            a1 = s * IAB_NUM + (node + 1) % IAB_NUM
            edges.append((a0, a1))
            edges.append((a1, a0))
    edge_index = np.array(edges, dtype=np.int32).T                      # (2, 40)
    # A_hat precomputed host-side (static topology), already in the node-leading
    # layout a_hat_t[i, b, j] = A_hat[b, i, j] -> no scatter / transpose inside jit.
    a_hat = build_norm_adj_per_sample(edge_index, B, IAB_NUM)           # (B,10,10)
    a_hat_t = jnp.asarray(np.transpose(a_hat, (1, 0, 2)), jnp.float32)  # (10,B,10)

    y = jax.jit(forward)(kparams, x, ue_idx, graph_x, a_hat_t)
    jax.block_until_ready(y)
    assert y.shape == (B, IAB_NUM, SMALL_OUT)
    assert bool(jnp.all(jnp.isfinite(y)))
    print("KERNEL_OK")
</pallas_src>

<mosaic_0001>
module attributes {stable_mosaic.version = 11 : i64} {
  func.func @_fused_kernel(%arg0: i32, %arg1: memref<10x2x10xf32, #tpu.memory_space<vmem>>, %arg2: memref<10x2x8xbf16, #tpu.memory_space<vmem>>, %arg3: memref<10x2x32xbf16, #tpu.memory_space<vmem>>, %arg4: memref<10x2x10xbf16, #tpu.memory_space<vmem>>, %arg5: memref<8x32xbf16, #tpu.memory_space<vmem>>, %arg6: memref<1x1x32xf32, #tpu.memory_space<vmem>>, %arg7: memref<32x64xbf16, #tpu.memory_space<vmem>>, %arg8: memref<1x1x64xf32, #tpu.memory_space<vmem>>, %arg9: memref<10x64x128xbf16, #tpu.memory_space<vmem>>, %arg10: memref<1x128xf32, #tpu.memory_space<vmem>>, %arg11: memref<32x160xbf16, #tpu.memory_space<vmem>>, %arg12: memref<1x160xf32, #tpu.memory_space<vmem>>, %arg13: memref<160x160xbf16, #tpu.memory_space<vmem>>, %arg14: memref<1x160xf32, #tpu.memory_space<vmem>>, %arg15: memref<160x152xbf16, #tpu.memory_space<vmem>>, %arg16: memref<1x152xf32, #tpu.memory_space<vmem>>, %arg17: memref<1x152xf32, #tpu.memory_space<vmem>>, %arg18: memref<152x152xbf16, #tpu.memory_space<vmem>>, %arg19: memref<1x152xf32, #tpu.memory_space<vmem>>, %arg20: memref<152x128xbf16, #tpu.memory_space<vmem>>, %arg21: memref<1x128xf32, #tpu.memory_space<vmem>>, %arg22: memref<10x128xbf16, #tpu.memory_space<vmem>>, %arg23: memref<1x128xf32, #tpu.memory_space<vmem>>, %arg24: memref<10x1x128xf32, #tpu.memory_space<vmem>>, %arg25: memref<10x2x16xf32, #tpu.memory_space<vmem>>) attributes {dimension_semantics = [#tpu.dimension_semantics<parallel>], iteration_bounds = array<i64: 1>, scalar_prefetch = 0 : i64, scratch_operands = 0 : i64, tpu.core_type = #tpu.core_type<tc>, window_params = [{transform_indices = @transform_0, window_bounds = array<i64: 10, 2, 10>}, {transform_indices = @transform_1, window_bounds = array<i64: 10, 2, 8>}, {transform_indices = @transform_2, window_bounds = array<i64: 10, 2, 32>}, {transform_indices = @transform_3, window_bounds = array<i64: 10, 2, 10>}, {pipeline_mode = #tpu.pipeline_mode<synchronous>, transform_indices = @transform_4, window_bounds = array<i64: 8, 32>}, {pipeline_mode = #tpu.pipeline_mode<synchronous>, transform_indices = @transform_5, window_bounds = array<i64: 1, 1, 32>}, {pipeline_mode = #tpu.pipeline_mode<synchronous>, transform_indices = @transform_6, window_bounds = array<i64: 32, 64>}, {pipeline_mode = #tpu.pipeline_mode<synchronous>, transform_indices = @transform_7, window_bounds = array<i64: 1, 1, 64>}, {pipeline_mode = #tpu.pipeline_mode<synchronous>, transform_indices = @transform_8, window_bounds = array<i64: 10, 64, 128>}, {pipeline_mode = #tpu.pipeline_mode<synchronous>, transform_indices = @transform_9, window_bounds = array<i64: 1, 128>}, {pipeline_mode = #tpu.pipeline_mode<synchronous>, transform_indices = @transform_10, window_bounds = array<i64: 32, 160>}, {pipeline_mode = #tpu.pipeline_mode<synchronous>, transform_indices = @transform_11, window_bounds = array<i64: 1, 160>}, {pipeline_mode = #tpu.pipeline_mode<synchronous>, transform_indices = @transform_12, window_bounds = array<i64: 160, 160>}, {pipeline_mode = #tpu.pipeline_mode<synchronous>, transform_indices = @transform_13, window_bounds = array<i64: 1, 160>}, {pipeline_mode = #tpu.pipeline_mode<synchronous>, transform_indices = @transform_14, window_bounds = array<i64: 160, 152>}, {pipeline_mode = #tpu.pipeline_mode<synchronous>, transform_indices = @transform_15, window_bounds = array<i64: 1, 152>}, {pipeline_mode = #tpu.pipeline_mode<synchronous>, transform_indices = @transform_16, window_bounds = array<i64: 1, 152>}, {pipeline_mode = #tpu.pipeline_mode<synchronous>, transform_indices = @transform_17, window_bounds = array<i64: 152, 152>}, {pipeline_mode = #tpu.pipeline_mode<synchronous>, transform_indices = @transform_18, window_bounds = array<i64: 1, 152>}, {pipeline_mode = #tpu.pipeline_mode<synchronous>, transform_indices = @transform_19, window_bounds = array<i64: 152, 128>}, {pipeline_mode = #tpu.pipeline_mode<synchronous>, transform_indices = @transform_20, window_bounds = array<i64: 1, 128>}, {pipeline_mode = #tpu.pipeline_mode<synchronous>, transform_indices = @transform_21, window_bounds = array<i64: 10, 128>}, {pipeline_mode = #tpu.pipeline_mode<synchronous>, transform_indices = @transform_22, window_bounds = array<i64: 1, 128>}, {pipeline_mode = #tpu.pipeline_mode<synchronous>, transform_indices = @transform_23, window_bounds = array<i64: 10, 1, 128>}, {transform_indices = @transform_24, window_bounds = array<i64: 10, 2, 16>}]} {
    %c0 = arith.constant 0 : index
    %c0_0 = arith.constant 0 : index
    %c0_1 = arith.constant 0 : index
    %0 = vector.load %arg1[%c0, %c0_0, %c0_1] : memref<10x2x10xf32, #tpu.memory_space<vmem>>, vector<10x2x10xf32>
    %c0_2 = arith.constant 0 : index
    %c0_3 = arith.constant 0 : index
    %c0_4 = arith.constant 0 : index
    %1 = vector.load %arg2[%c0_2, %c0_3, %c0_4] : memref<10x2x8xbf16, #tpu.memory_space<vmem>>, vector<10x2x8xbf16>
    %2 = vector.shape_cast %1 : vector<10x2x8xbf16> to vector<20x8xbf16>
    %c0_5 = arith.constant 0 : index
    %c0_6 = arith.constant 0 : index
    %3 = vector.load %arg5[%c0_5, %c0_6] : memref<8x32xbf16, #tpu.memory_space<vmem>>, vector<8x32xbf16>
    %cst = arith.constant dense<0.000000e+00> : vector<20x32xf32>
    %4 = tpu.matmul %2, %3, %cst {dimension_numbers = #tpu.dot_dimension_numbers<[1], [0], [0], [1], [0, 0, 1, 1], [], []>} : vector<20x8xbf16>, vector<8x32xbf16>, vector<20x32xf32> -> vector<20x32xf32>
    %5 = vector.shape_cast %4 : vector<20x32xf32> to vector<10x2x32xf32>
    %6 = vector.extract_strided_slice %0 {offsets = [0, 0, 0], sizes = [10, 2, 1], strides = [1, 1, 1]} : vector<10x2x10xf32> to vector<10x2x1xf32>
    %7 = vector.extract_strided_slice %5 {offsets = [0, 0, 0], sizes = [1, 2, 32], strides = [1, 1, 1]} : vector<10x2x32xf32> to vector<1x2x32xf32>
    %8 = vector.shape_cast %7 : vector<1x2x32xf32> to vector<2x32xf32>
    %9 = vector.shape_cast %8 : vector<2x32xf32> to vector<1x2x32xf32>
    %10 = vector.broadcast %6 : vector<10x2x1xf32> to vector<10x2x32xf32>
    %11 = vector.broadcast %9 : vector<1x2x32xf32> to vector<10x2x32xf32>
    %12 = arith.mulf %10, %11 : vector<10x2x32xf32>
    %13 = vector.extract_strided_slice %0 {offsets = [0, 0, 1], sizes = [10, 2, 1], strides = [1, 1, 1]} : vector<10x2x10xf32> to vector<10x2x1xf32>
    %14 = vector.extract_strided_slice %5 {offsets = [1, 0, 0], sizes = [1, 2, 32], strides = [1, 1, 1]} : vector<10x2x32xf32> to vector<1x2x32xf32>
    %15 = vector.shape_cast %14 : vector<1x2x32xf32> to vector<2x32xf32>
    %16 = vector.shape_cast %15 : vector<2x32xf32> to vector<1x2x32xf32>
    %17 = vector.broadcast %13 : vector<10x2x1xf32> to vector<10x2x32xf32>
    %18 = vector.broadcast %16 : vector<1x2x32xf32> to vector<10x2x32xf32>
    %19 = arith.mulf %17, %18 : vector<10x2x32xf32>
    %20 = arith.addf %12, %19 : vector<10x2x32xf32>
    %21 = vector.extract_strided_slice %0 {offsets = [0, 0, 2], sizes = [10, 2, 1], strides = [1, 1, 1]} : vector<10x2x10xf32> to vector<10x2x1xf32>
    %22 = vector.extract_strided_slice %5 {offsets = [2, 0, 0], sizes = [1, 2, 32], strides = [1, 1, 1]} : vector<10x2x32xf32> to vector<1x2x32xf32>
    %23 = vector.shape_cast %22 : vector<1x2x32xf32> to vector<2x32xf32>
    %24 = vector.shape_cast %23 : vector<2x32xf32> to vector<1x2x32xf32>
    %25 = vector.broadcast %21 : vector<10x2x1xf32> to vector<10x2x32xf32>
    %26 = vector.broadcast %24 : vector<1x2x32xf32> to vector<10x2x32xf32>
    %27 = arith.mulf %25, %26 : vector<10x2x32xf32>
    %28 = arith.addf %20, %27 : vector<10x2x32xf32>
    %29 = vector.extract_strided_slice %0 {offsets = [0, 0, 3], sizes = [10, 2, 1], strides = [1, 1, 1]} : vector<10x2x10xf32> to vector<10x2x1xf32>
    %30 = vector.extract_strided_slice %5 {offsets = [3, 0, 0], sizes = [1, 2, 32], strides = [1, 1, 1]} : vector<10x2x32xf32> to vector<1x2x32xf32>
    %31 = vector.shape_cast %30 : vector<1x2x32xf32> to vector<2x32xf32>
    %32 = vector.shape_cast %31 : vector<2x32xf32> to vector<1x2x32xf32>
    %33 = vector.broadcast %29 : vector<10x2x1xf32> to vector<10x2x32xf32>
    %34 = vector.broadcast %32 : vector<1x2x32xf32> to vector<10x2x32xf32>
    %35 = arith.mulf %33, %34 : vector<10x2x32xf32>
    %36 = arith.addf %28, %35 : vector<10x2x32xf32>
    %37 = vector.extract_strided_slice %0 {offsets = [0, 0, 4], sizes = [10, 2, 1], strides = [1, 1, 1]} : vector<10x2x10xf32> to vector<10x2x1xf32>
    %38 = vector.extract_strided_slice %5 {offsets = [4, 0, 0], sizes = [1, 2, 32], strides = [1, 1, 1]} : vector<10x2x32xf32> to vector<1x2x32xf32>
    %39 = vector.shape_cast %38 : vector<1x2x32xf32> to vector<2x32xf32>
    %40 = vector.shape_cast %39 : vector<2x32xf32> to vector<1x2x32xf32>
    %41 = vector.broadcast %37 : vector<10x2x1xf32> to vector<10x2x32xf32>
    %42 = vector.broadcast %40 : vector<1x2x32xf32> to vector<10x2x32xf32>
    %43 = arith.mulf %41, %42 : vector<10x2x32xf32>
    %44 = arith.addf %36, %43 : vector<10x2x32xf32>
    %45 = vector.extract_strided_slice %0 {offsets = [0, 0, 5], sizes = [10, 2, 1], strides = [1, 1, 1]} : vector<10x2x10xf32> to vector<10x2x1xf32>
    %46 = vector.extract_strided_slice %5 {offsets = [5, 0, 0], sizes = [1, 2, 32], strides = [1, 1, 1]} : vector<10x2x32xf32> to vector<1x2x32xf32>
    %47 = vector.shape_cast %46 : vector<1x2x32xf32> to vector<2x32xf32>
    %48 = vector.shape_cast %47 : vector<2x32xf32> to vector<1x2x32xf32>
    %49 = vector.broadcast %45 : vector<10x2x1xf32> to vector<10x2x32xf32>
    %50 = vector.broadcast %48 : vector<1x2x32xf32> to vector<10x2x32xf32>
    %51 = arith.mulf %49, %50 : vector<10x2x32xf32>
    %52 = arith.addf %44, %51 : vector<10x2x32xf32>
    %53 = vector.extract_strided_slice %0 {offsets = [0, 0, 6], sizes = [10, 2, 1], strides = [1, 1, 1]} : vector<10x2x10xf32> to vector<10x2x1xf32>
    %54 = vector.extract_strided_slice %5 {offsets = [6, 0, 0], sizes = [1, 2, 32], strides = [1, 1, 1]} : vector<10x2x32xf32> to vector<1x2x32xf32>
    %55 = vector.shape_cast %54 : vector<1x2x32xf32> to vector<2x32xf32>
    %56 = vector.shape_cast %55 : vector<2x32xf32> to vector<1x2x32xf32>
    %57 = vector.broadcast %53 : vector<10x2x1xf32> to vector<10x2x32xf32>
    %58 = vector.broadcast %56 : vector<1x2x32xf32> to vector<10x2x32xf32>
    %59 = arith.mulf %57, %58 : vector<10x2x32xf32>
    %60 = arith.addf %52, %59 : vector<10x2x32xf32>
    %61 = vector.extract_strided_slice %0 {offsets = [0, 0, 7], sizes = [10, 2, 1], strides = [1, 1, 1]} : vector<10x2x10xf32> to vector<10x2x1xf32>
    %62 = vector.extract_strided_slice %5 {offsets = [7, 0, 0], sizes = [1, 2, 32], strides = [1, 1, 1]} : vector<10x2x32xf32> to vector<1x2x32xf32>
    %63 = vector.shape_cast %62 : vector<1x2x32xf32> to vector<2x32xf32>
    %64 = vector.shape_cast %63 : vector<2x32xf32> to vector<1x2x32xf32>
    %65 = vector.broadcast %61 : vector<10x2x1xf32> to vector<10x2x32xf32>
    %66 = vector.broadcast %64 : vector<1x2x32xf32> to vector<10x2x32xf32>
    %67 = arith.mulf %65, %66 : vector<10x2x32xf32>
    %68 = arith.addf %60, %67 : vector<10x2x32xf32>
    %69 = vector.extract_strided_slice %0 {offsets = [0, 0, 8], sizes = [10, 2, 1], strides = [1, 1, 1]} : vector<10x2x10xf32> to vector<10x2x1xf32>
    %70 = vector.extract_strided_slice %5 {offsets = [8, 0, 0], sizes = [1, 2, 32], strides = [1, 1, 1]} : vector<10x2x32xf32> to vector<1x2x32xf32>
    %71 = vector.shape_cast %70 : vector<1x2x32xf32> to vector<2x32xf32>
    %72 = vector.shape_cast %71 : vector<2x32xf32> to vector<1x2x32xf32>
    %73 = vector.broadcast %69 : vector<10x2x1xf32> to vector<10x2x32xf32>
    %74 = vector.broadcast %72 : vector<1x2x32xf32> to vector<10x2x32xf32>
    %75 = arith.mulf %73, %74 : vector<10x2x32xf32>
    %76 = arith.addf %68, %75 : vector<10x2x32xf32>
    %77 = vector.extract_strided_slice %0 {offsets = [0, 0, 9], sizes = [10, 2, 1], strides = [1, 1, 1]} : vector<10x2x10xf32> to vector<10x2x1xf32>
    %78 = vector.extract_strided_slice %5 {offsets = [9, 0, 0], sizes = [1, 2, 32], strides = [1, 1, 1]} : vector<10x2x32xf32> to vector<1x2x32xf32>
    %79 = vector.shape_cast %78 : vector<1x2x32xf32> to vector<2x32xf32>
    %80 = vector.shape_cast %79 : vector<2x32xf32> to vector<1x2x32xf32>
    %81 = vector.broadcast %77 : vector<10x2x1xf32> to vector<10x2x32xf32>
    %82 = vector.broadcast %80 : vector<1x2x32xf32> to vector<10x2x32xf32>
    %83 = arith.mulf %81, %82 : vector<10x2x32xf32>
    %84 = arith.addf %76, %83 : vector<10x2x32xf32>
    %c0_7 = arith.constant 0 : index
    %c0_8 = arith.constant 0 : index
    %c0_9 = arith.constant 0 : index
    %85 = vector.load %arg6[%c0_7, %c0_8, %c0_9] : memref<1x1x32xf32, #tpu.memory_space<vmem>>, vector<1x1x32xf32>
    %86 = vector.broadcast %85 : vector<1x1x32xf32> to vector<10x2x32xf32>
    %87 = arith.addf %84, %86 : vector<10x2x32xf32>
    %cst_10 = arith.constant 5.000000e-01 : f32
    %88 = vector.broadcast %cst_10 : f32 to vector<10x2x32xf32>
    %89 = arith.mulf %88, %87 : vector<10x2x32xf32>
    %cst_11 = arith.constant 0.707106769 : f32
    %90 = vector.broadcast %cst_11 : f32 to vector<10x2x32xf32>
    %91 = arith.mulf %87, %90 : vector<10x2x32xf32>
    %92 = math.erf %91 : vector<10x2x32xf32>
    %cst_12 = arith.constant 1.000000e+00 : f32
    %93 = vector.broadcast %cst_12 : f32 to vector<10x2x32xf32>
    %94 = arith.addf %93, %92 : vector<10x2x32xf32>
    %95 = arith.mulf %89, %94 : vector<10x2x32xf32>
    %96 = vector.shape_cast %95 : vector<10x2x32xf32> to vector<20x32xf32>
    %97 = arith.truncf %96 : vector<20x32xf32> to vector<20x32xbf16>
    %c0_13 = arith.constant 0 : index
    %c0_14 = arith.constant 0 : index
    %98 = vector.load %arg7[%c0_13, %c0_14] : memref<32x64xbf16, #tpu.memory_space<vmem>>, vector<32x64xbf16>
    %cst_15 = arith.constant dense<0.000000e+00> : vector<20x64xf32>
    %99 = tpu.matmul %97, %98, %cst_15 {dimension_numbers = #tpu.dot_dimension_numbers<[1], [0], [0], [1], [0, 0, 1, 1], [], []>} : vector<20x32xbf16>, vector<32x64xbf16>, vector<20x64xf32> -> vector<20x64xf32>
    %100 = vector.shape_cast %99 : vector<20x64xf32> to vector<10x2x64xf32>
    %101 = vector.extract_strided_slice %0 {offsets = [0, 0, 0], sizes = [10, 2, 1], strides = [1, 1, 1]} : vector<10x2x10xf32> to vector<10x2x1xf32>
    %102 = vector.extract_strided_slice %100 {offsets = [0, 0, 0], sizes = [1, 2, 64], strides = [1, 1, 1]} : vector<10x2x64xf32> to vector<1x2x64xf32>
    %103 = vector.shape_cast %102 : vector<1x2x64xf32> to vector<2x64xf32>
    %104 = vector.shape_cast %103 : vector<2x64xf32> to vector<1x2x64xf32>
    %105 = vector.broadcast %101 : vector<10x2x1xf32> to vector<10x2x64xf32>
    %106 = vector.broadcast %104 : vector<1x2x64xf32> to vector<10x2x64xf32>
    %107 = arith.mulf %105, %106 : vector<10x2x64xf32>
    %108 = vector.extract_strided_slice %0 {offsets = [0, 0, 1], sizes = [10, 2, 1], strides = [1, 1, 1]} : vector<10x2x10xf32> to vector<10x2x1xf32>
    %109 = vector.extract_strided_slice %100 {offsets = [1, 0, 0], sizes = [1, 2, 64], strides = [1, 1, 1]} : vector<10x2x64xf32> to vector<1x2x64xf32>
    %110 = vector.shape_cast %109 : vector<1x2x64xf32> to vector<2x64xf32>
    %111 = vector.shape_cast %110 : vector<2x64xf32> to vector<1x2x64xf32>
    %112 = vector.broadcast %108 : vector<10x2x1xf32> to vector<10x2x64xf32>
    %113 = vector.broadcast %111 : vector<1x2x64xf32> to vector<10x2x64xf32>
    %114 = arith.mulf %112, %113 : vector<10x2x64xf32>
    %115 = arith.addf %107, %114 : vector<10x2x64xf32>
    %116 = vector.extract_strided_slice %0 {offsets = [0, 0, 2], sizes = [10, 2, 1], strides = [1, 1, 1]} : vector<10x2x10xf32> to vector<10x2x1xf32>
    %117 = vector.extract_strided_slice %100 {offsets = [2, 0, 0], sizes = [1, 2, 64], strides = [1, 1, 1]} : vector<10x2x64xf32> to vector<1x2x64xf32>
    %118 = vector.shape_cast %117 : vector<1x2x64xf32> to vector<2x64xf32>
    %119 = vector.shape_cast %118 : vector<2x64xf32> to vector<1x2x64xf32>
    %120 = vector.broadcast %116 : vector<10x2x1xf32> to vector<10x2x64xf32>
    %121 = vector.broadcast %119 : vector<1x2x64xf32> to vector<10x2x64xf32>
    %122 = arith.mulf %120, %121 : vector<10x2x64xf32>
    %123 = arith.addf %115, %122 : vector<10x2x64xf32>
    %124 = vector.extract_strided_slice %0 {offsets = [0, 0, 3], sizes = [10, 2, 1], strides = [1, 1, 1]} : vector<10x2x10xf32> to vector<10x2x1xf32>
    %125 = vector.extract_strided_slice %100 {offsets = [3, 0, 0], sizes = [1, 2, 64], strides = [1, 1, 1]} : vector<10x2x64xf32> to vector<1x2x64xf32>
    %126 = vector.shape_cast %125 : vector<1x2x64xf32> to vector<2x64xf32>
    %127 = vector.shape_cast %126 : vector<2x64xf32> to vector<1x2x64xf32>
    %128 = vector.broadcast %124 : vector<10x2x1xf32> to vector<10x2x64xf32>
    %129 = vector.broadcast %127 : vector<1x2x64xf32> to vector<10x2x64xf32>
    %130 = arith.mulf %128, %129 : vector<10x2x64xf32>
    %131 = arith.addf %123, %130 : vector<10x2x64xf32>
    %132 = vector.extract_strided_slice %0 {offsets = [0, 0, 4], sizes = [10, 2, 1], strides = [1, 1, 1]} : vector<10x2x10xf32> to vector<10x2x1xf32>
    %133 = vector.extract_strided_slice %100 {offsets = [4, 0, 0], sizes = [1, 2, 64], strides = [1, 1, 1]} : vector<10x2x64xf32> to vector<1x2x64xf32>
    %134 = vector.shape_cast %133 : vector<1x2x64xf32> to vector<2x64xf32>
    %135 = vector.shape_cast %134 : vector<2x64xf32> to vector<1x2x64xf32>
    %136 = vector.broadcast %132 : vector<10x2x1xf32> to vector<10x2x64xf32>
    %137 = vector.broadcast %135 : vector<1x2x64xf32> to vector<10x2x64xf32>
    %138 = arith.mulf %136, %137 : vector<10x2x64xf32>
    %139 = arith.addf %131, %138 : vector<10x2x64xf32>
    %140 = vector.extract_strided_slice %0 {offsets = [0, 0, 5], sizes = [10, 2, 1], strides = [1, 1, 1]} : vector<10x2x10xf32> to vector<10x2x1xf32>
    %141 = vector.extract_strided_slice %100 {offsets = [5, 0, 0], sizes = [1, 2, 64], strides = [1, 1, 1]} : vector<10x2x64xf32> to vector<1x2x64xf32>
    %142 = vector.shape_cast %141 : vector<1x2x64xf32> to vector<2x64xf32>
    %143 = vector.shape_cast %142 : vector<2x64xf32> to vector<1x2x64xf32>
    %144 = vector.broadcast %140 : vector<10x2x1xf32> to vector<10x2x64xf32>
    %145 = vector.broadcast %143 : vector<1x2x64xf32> to vector<10x2x64xf32>
    %146 = arith.mulf %144, %145 : vector<10x2x64xf32>
    %147 = arith.addf %139, %146 : vector<10x2x64xf32>
    %148 = vector.extract_strided_slice %0 {offsets = [0, 0, 6], sizes = [10, 2, 1], strides = [1, 1, 1]} : vector<10x2x10xf32> to vector<10x2x1xf32>
    %149 = vector.extract_strided_slice %100 {offsets = [6, 0, 0], sizes = [1, 2, 64], strides = [1, 1, 1]} : vector<10x2x64xf32> to vector<1x2x64xf32>
    %150 = vector.shape_cast %149 : vector<1x2x64xf32> to vector<2x64xf32>
    %151 = vector.shape_cast %150 : vector<2x64xf32> to vector<1x2x64xf32>
    %152 = vector.broadcast %148 : vector<10x2x1xf32> to vector<10x2x64xf32>
    %153 = vector.broadcast %151 : vector<1x2x64xf32> to vector<10x2x64xf32>
    %154 = arith.mulf %152, %153 : vector<10x2x64xf32>
    %155 = arith.addf %147, %154 : vector<10x2x64xf32>
    %156 = vector.extract_strided_slice %0 {offsets = [0, 0, 7], sizes = [10, 2, 1], strides = [1, 1, 1]} : vector<10x2x10xf32> to vector<10x2x1xf32>
    %157 = vector.extract_strided_slice %100 {offsets = [7, 0, 0], sizes = [1, 2, 64], strides = [1, 1, 1]} : vector<10x2x64xf32> to vector<1x2x64xf32>
    %158 = vector.shape_cast %157 : vector<1x2x64xf32> to vector<2x64xf32>
    %159 = vector.shape_cast %158 : vector<2x64xf32> to vector<1x2x64xf32>
    %160 = vector.broadcast %156 : vector<10x2x1xf32> to vector<10x2x64xf32>
    %161 = vector.broadcast %159 : vector<1x2x64xf32> to vector<10x2x64xf32>
    %162 = arith.mulf %160, %161 : vector<10x2x64xf32>
    %163 = arith.addf %155, %162 : vector<10x2x64xf32>
    %164 = vector.extract_strided_slice %0 {offsets = [0, 0, 8], sizes = [10, 2, 1], strides = [1, 1, 1]} : vector<10x2x10xf32> to vector<10x2x1xf32>
    %165 = vector.extract_strided_slice %100 {offsets = [8, 0, 0], sizes = [1, 2, 64], strides = [1, 1, 1]} : vector<10x2x64xf32> to vector<1x2x64xf32>
    %166 = vector.shape_cast %165 : vector<1x2x64xf32> to vector<2x64xf32>
    %167 = vector.shape_cast %166 : vector<2x64xf32> to vector<1x2x64xf32>
    %168 = vector.broadcast %164 : vector<10x2x1xf32> to vector<10x2x64xf32>
    %169 = vector.broadcast %167 : vector<1x2x64xf32> to vector<10x2x64xf32>
    %170 = arith.mulf %168, %169 : vector<10x2x64xf32>
    %171 = arith.addf %163, %170 : vector<10x2x64xf32>
    %172 = vector.extract_strided_slice %0 {offsets = [0, 0, 9], sizes = [10, 2, 1], strides = [1, 1, 1]} : vector<10x2x10xf32> to vector<10x2x1xf32>
    %173 = vector.extract_strided_slice %100 {offsets = [9, 0, 0], sizes = [1, 2, 64], strides = [1, 1, 1]} : vector<10x2x64xf32> to vector<1x2x64xf32>
    %174 = vector.shape_cast %173 : vector<1x2x64xf32> to vector<2x64xf32>
    %175 = vector.shape_cast %174 : vector<2x64xf32> to vector<1x2x64xf32>
    %176 = vector.broadcast %172 : vector<10x2x1xf32> to vector<10x2x64xf32>
    %177 = vector.broadcast %175 : vector<1x2x64xf32> to vector<10x2x64xf32>
    %178 = arith.mulf %176, %177 : vector<10x2x64xf32>
    %179 = arith.addf %171, %178 : vector<10x2x64xf32>
    %c0_16 = arith.constant 0 : index
    %c0_17 = arith.constant 0 : index
    %c0_18 = arith.constant 0 : index
    %180 = vector.load %arg8[%c0_16, %c0_17, %c0_18] : memref<1x1x64xf32, #tpu.memory_space<vmem>>, vector<1x1x64xf32>
    %181 = vector.broadcast %180 : vector<1x1x64xf32> to vector<10x2x64xf32>
    %182 = arith.addf %179, %181 : vector<10x2x64xf32>
    %cst_19 = arith.constant 5.000000e-01 : f32
    %183 = vector.broadcast %cst_19 : f32 to vector<10x2x64xf32>
    %184 = arith.mulf %183, %182 : vector<10x2x64xf32>
    %cst_20 = arith.constant 0.707106769 : f32
    %185 = vector.broadcast %cst_20 : f32 to vector<10x2x64xf32>
    %186 = arith.mulf %182, %185 : vector<10x2x64xf32>
    %187 = math.erf %186 : vector<10x2x64xf32>
    %cst_21 = arith.constant 1.000000e+00 : f32
    %188 = vector.broadcast %cst_21 : f32 to vector<10x2x64xf32>
    %189 = arith.addf %188, %187 : vector<10x2x64xf32>
    %190 = arith.mulf %184, %189 : vector<10x2x64xf32>
    %c0_22 = arith.constant 0 : index
    %c0_23 = arith.constant 0 : index
    %191 = vector.load %arg10[%c0_22, %c0_23] : memref<1x128xf32, #tpu.memory_space<vmem>>, vector<1x128xf32>
    %192 = vector.extract_strided_slice %190 {offsets = [0, 0, 0], sizes = [1, 2, 64], strides = [1, 1, 1]} : vector<10x2x64xf32> to vector<1x2x64xf32>
    %193 = vector.shape_cast %192 : vector<1x2x64xf32> to vector<2x64xf32>
    %194 = arith.truncf %193 : vector<2x64xf32> to vector<2x64xbf16>
    %c0_24 = arith.constant 0 : index
    %c0_25 = arith.constant 0 : index
    %c0_26 = arith.constant 0 : index
    %195 = vector.load %arg9[%c0_24, %c0_25, %c0_26] : memref<10x64x128xbf16, #tpu.memory_space<vmem>>, vector<1x64x128xbf16>
    %196 = vector.shape_cast %195 : vector<1x64x128xbf16> to vector<64x128xbf16>
    %cst_27 = arith.constant dense<0.000000e+00> : vector<2x128xf32>
    %197 = tpu.matmul %194, %196, %cst_27 {dimension_numbers = #tpu.dot_dimension_numbers<[1], [0], [0], [1], [0, 0, 1, 1], [], []>} : vector<2x64xbf16>, vector<64x128xbf16>, vector<2x128xf32> -> vector<2x128xf32>
    %198 = vector.broadcast %191 : vector<1x128xf32> to vector<2x128xf32>
    %199 = arith.addf %198, %197 : vector<2x128xf32>
    %200 = vector.extract_strided_slice %190 {offsets = [1, 0, 0], sizes = [1, 2, 64], strides = [1, 1, 1]} : vector<10x2x64xf32> to vector<1x2x64xf32>
    %201 = vector.shape_cast %200 : vector<1x2x64xf32> to vector<2x64xf32>
    %202 = arith.truncf %201 : vector<2x64xf32> to vector<2x64xbf16>
    %c1 = arith.constant 1 : index
    %c0_28 = arith.constant 0 : index
    %c0_29 = arith.constant 0 : index
    %203 = vector.load %arg9[%c1, %c0_28, %c0_29] : memref<10x64x128xbf16, #tpu.memory_space<vmem>>, vector<1x64x128xbf16>
    %204 = vector.shape_cast %203 : vector<1x64x128xbf16> to vector<64x128xbf16>
    %cst_30 = arith.constant dense<0.000000e+00> : vector<2x128xf32>
    %205 = tpu.matmul %202, %204, %cst_30 {dimension_numbers = #tpu.dot_dimension_numbers<[1], [0], [0], [1], [0, 0, 1, 1], [], []>} : vector<2x64xbf16>, vector<64x128xbf16>, vector<2x128xf32> -> vector<2x128xf32>
    %206 = arith.addf %199, %205 : vector<2x128xf32>
    %207 = vector.extract_strided_slice %190 {offsets = [2, 0, 0], sizes = [1, 2, 64], strides = [1, 1, 1]} : vector<10x2x64xf32> to vector<1x2x64xf32>
    %208 = vector.shape_cast %207 : vector<1x2x64xf32> to vector<2x64xf32>
    %209 = arith.truncf %208 : vector<2x64xf32> to vector<2x64xbf16>
    %c2 = arith.constant 2 : index
    %c0_31 = arith.constant 0 : index
    %c0_32 = arith.constant 0 : index
    %210 = vector.load %arg9[%c2, %c0_31, %c0_32] : memref<10x64x128xbf16, #tpu.memory_space<vmem>>, vector<1x64x128xbf16>
    %211 = vector.shape_cast %210 : vector<1x64x128xbf16> to vector<64x128xbf16>
    %cst_33 = arith.constant dense<0.000000e+00> : vector<2x128xf32>
    %212 = tpu.matmul %209, %211, %cst_33 {dimension_numbers = #tpu.dot_dimension_numbers<[1], [0], [0], [1], [0, 0, 1, 1], [], []>} : vector<2x64xbf16>, vector<64x128xbf16>, vector<2x128xf32> -> vector<2x128xf32>
    %213 = arith.addf %206, %212 : vector<2x128xf32>
    %214 = vector.extract_strided_slice %190 {offsets = [3, 0, 0], sizes = [1, 2, 64], strides = [1, 1, 1]} : vector<10x2x64xf32> to vector<1x2x64xf32>
    %215 = vector.shape_cast %214 : vector<1x2x64xf32> to vector<2x64xf32>
    %216 = arith.truncf %215 : vector<2x64xf32> to vector<2x64xbf16>
    %c3 = arith.constant 3 : index
    %c0_34 = arith.constant 0 : index
    %c0_35 = arith.constant 0 : index
    %217 = vector.load %arg9[%c3, %c0_34, %c0_35] : memref<10x64x128xbf16, #tpu.memory_space<vmem>>, vector<1x64x128xbf16>
    %218 = vector.shape_cast %217 : vector<1x64x128xbf16> to vector<64x128xbf16>
    %cst_36 = arith.constant dense<0.000000e+00> : vector<2x128xf32>
    %219 = tpu.matmul %216, %218, %cst_36 {dimension_numbers = #tpu.dot_dimension_numbers<[1], [0], [0], [1], [0, 0, 1, 1], [], []>} : vector<2x64xbf16>, vector<64x128xbf16>, vector<2x128xf32> -> vector<2x128xf32>
    %220 = arith.addf %213, %219 : vector<2x128xf32>
    %221 = vector.extract_strided_slice %190 {offsets = [4, 0, 0], sizes = [1, 2, 64], strides = [1, 1, 1]} : vector<10x2x64xf32> to vector<1x2x64xf32>
    %222 = vector.shape_cast %221 : vector<1x2x64xf32> to vector<2x64xf32>
    %223 = arith.truncf %222 : vector<2x64xf32> to vector<2x64xbf16>
    %c4 = arith.constant 4 : index
    %c0_37 = arith.constant 0 : index
    %c0_38 = arith.constant 0 : index
    %224 = vector.load %arg9[%c4, %c0_37, %c0_38] : memref<10x64x128xbf16, #tpu.memory_space<vmem>>, vector<1x64x128xbf16>
    %225 = vector.shape_cast %224 : vector<1x64x128xbf16> to vector<64x128xbf16>
    %cst_39 = arith.constant dense<0.000000e+00> : vector<2x128xf32>
    %226 = tpu.matmul %223, %225, %cst_39 {dimension_numbers = #tpu.dot_dimension_numbers<[1], [0], [0], [1], [0, 0, 1, 1], [], []>} : vector<2x64xbf16>, vector<64x128xbf16>, vector<2x128xf32> -> vector<2x128xf32>
    %227 = arith.addf %220, %226 : vector<2x128xf32>
    %228 = vector.extract_strided_slice %190 {offsets = [5, 0, 0], sizes = [1, 2, 64], strides = [1, 1, 1]} : vector<10x2x64xf32> to vector<1x2x64xf32>
    %229 = vector.shape_cast %228 : vector<1x2x64xf32> to vector<2x64xf32>
    %230 = arith.truncf %229 : vector<2x64xf32> to vector<2x64xbf16>
    %c5 = arith.constant 5 : index
    %c0_40 = arith.constant 0 : index
    %c0_41 = arith.constant 0 : index
    %231 = vector.load %arg9[%c5, %c0_40, %c0_41] : memref<10x64x128xbf16, #tpu.memory_space<vmem>>, vector<1x64x128xbf16>
    %232 = vector.shape_cast %231 : vector<1x64x128xbf16> to vector<64x128xbf16>
    %cst_42 = arith.constant dense<0.000000e+00> : vector<2x128xf32>
    %233 = tpu.matmul %230, %232, %cst_42 {dimension_numbers = #tpu.dot_dimension_numbers<[1], [0], [0], [1], [0, 0, 1, 1], [], []>} : vector<2x64xbf16>, vector<64x128xbf16>, vector<2x128xf32> -> vector<2x128xf32>
    %234 = arith.addf %227, %233 : vector<2x128xf32>
    %235 = vector.extract_strided_slice %190 {offsets = [6, 0, 0], sizes = [1, 2, 64], strides = [1, 1, 1]} : vector<10x2x64xf32> to vector<1x2x64xf32>
    %236 = vector.shape_cast %235 : vector<1x2x64xf32> to vector<2x64xf32>
    %237 = arith.truncf %236 : vector<2x64xf32> to vector<2x64xbf16>
    %c6 = arith.constant 6 : index
    %c0_43 = arith.constant 0 : index
    %c0_44 = arith.constant 0 : index
    %238 = vector.load %arg9[%c6, %c0_43, %c0_44] : memref<10x64x128xbf16, #tpu.memory_space<vmem>>, vector<1x64x128xbf16>
    %239 = vector.shape_cast %238 : vector<1x64x128xbf16> to vector<64x128xbf16>
    %cst_45 = arith.constant dense<0.000000e+00> : vector<2x128xf32>
    %240 = tpu.matmul %237, %239, %cst_45 {dimension_numbers = #tpu.dot_dimension_numbers<[1], [0], [0], [1], [0, 0, 1, 1], [], []>} : vector<2x64xbf16>, vector<64x128xbf16>, vector<2x128xf32> -> vector<2x128xf32>
    %241 = arith.addf %234, %240 : vector<2x128xf32>
    %242 = vector.extract_strided_slice %190 {offsets = [7, 0, 0], sizes = [1, 2, 64], strides = [1, 1, 1]} : vector<10x2x64xf32> to vector<1x2x64xf32>
    %243 = vector.shape_cast %242 : vector<1x2x64xf32> to vector<2x64xf32>
    %244 = arith.truncf %243 : vector<2x64xf32> to vector<2x64xbf16>
    %c7 = arith.constant 7 : index
    %c0_46 = arith.constant 0 : index
    %c0_47 = arith.constant 0 : index
    %245 = vector.load %arg9[%c7, %c0_46, %c0_47] : memref<10x64x128xbf16, #tpu.memory_space<vmem>>, vector<1x64x128xbf16>
    %246 = vector.shape_cast %245 : vector<1x64x128xbf16> to vector<64x128xbf16>
    %cst_48 = arith.constant dense<0.000000e+00> : vector<2x128xf32>
    %247 = tpu.matmul %244, %246, %cst_48 {dimension_numbers = #tpu.dot_dimension_numbers<[1], [0], [0], [1], [0, 0, 1, 1], [], []>} : vector<2x64xbf16>, vector<64x128xbf16>, vector<2x128xf32> -> vector<2x128xf32>
    %248 = arith.addf %241, %247 : vector<2x128xf32>
    %249 = vector.extract_strided_slice %190 {offsets = [8, 0, 0], sizes = [1, 2, 64], strides = [1, 1, 1]} : vector<10x2x64xf32> to vector<1x2x64xf32>
    %250 = vector.shape_cast %249 : vector<1x2x64xf32> to vector<2x64xf32>
    %251 = arith.truncf %250 : vector<2x64xf32> to vector<2x64xbf16>
    %c8 = arith.constant 8 : index
    %c0_49 = arith.constant 0 : index
    %c0_50 = arith.constant 0 : index
    %252 = vector.load %arg9[%c8, %c0_49, %c0_50] : memref<10x64x128xbf16, #tpu.memory_space<vmem>>, vector<1x64x128xbf16>
    %253 = vector.shape_cast %252 : vector<1x64x128xbf16> to vector<64x128xbf16>
    %cst_51 = arith.constant dense<0.000000e+00> : vector<2x128xf32>
    %254 = tpu.matmul %251, %253, %cst_51 {dimension_numbers = #tpu.dot_dimension_numbers<[1], [0], [0], [1], [0, 0, 1, 1], [], []>} : vector<2x64xbf16>, vector<64x128xbf16>, vector<2x128xf32> -> vector<2x128xf32>
    %255 = arith.addf %248, %254 : vector<2x128xf32>
    %256 = vector.extract_strided_slice %190 {offsets = [9, 0, 0], sizes = [1, 2, 64], strides = [1, 1, 1]} : vector<10x2x64xf32> to vector<1x2x64xf32>
    %257 = vector.shape_cast %256 : vector<1x2x64xf32> to vector<2x64xf32>
    %258 = arith.truncf %257 : vector<2x64xf32> to vector<2x64xbf16>
    %c9 = arith.constant 9 : index
    %c0_52 = arith.constant 0 : index
    %c0_53 = arith.constant 0 : index
    %259 = vector.load %arg9[%c9, %c0_52, %c0_53] : memref<10x64x128xbf16, #tpu.memory_space<vmem>>, vector<1x64x128xbf16>
    %260 = vector.shape_cast %259 : vector<1x64x128xbf16> to vector<64x128xbf16>
    %cst_54 = arith.constant dense<0.000000e+00> : vector<2x128xf32>
    %261 = tpu.matmul %258, %260, %cst_54 {dimension_numbers = #tpu.dot_dimension_numbers<[1], [0], [0], [1], [0, 0, 1, 1], [], []>} : vector<2x64xbf16>, vector<64x128xbf16>, vector<2x128xf32> -> vector<2x128xf32>
    %262 = arith.addf %255, %261 : vector<2x128xf32>
    %cst_55 = arith.constant dense<0xFF800000> : vector<2xf32>
    %263 = vector.multi_reduction <maximumf>, %262, %cst_55 [1] : vector<2x128xf32> to vector<2xf32>
    %264 = vector.shape_cast %263 : vector<2xf32> to vector<2x1xf32>
    %265 = vector.broadcast %264 : vector<2x1xf32> to vector<2x128xf32>
    %266 = arith.subf %262, %265 : vector<2x128xf32>
    %267 = math.exp %266 : vector<2x128xf32>
    %cst_56 = arith.constant dense<0.000000e+00> : vector<2xf32>
    %268 = vector.multi_reduction <add>, %267, %cst_56 [1] : vector<2x128xf32> to vector<2xf32>
    %269 = vector.shape_cast %268 : vector<2xf32> to vector<2x1xf32>
    %270 = tpu.reciprocal %269 {approx = true} : vector<2x1xf32> -> vector<2x1xf32>
    %271 = vector.broadcast %270 : vector<2x1xf32> to vector<2x128xf32>
    %272 = arith.mulf %267, %271 : vector<2x128xf32>
    %273 = vector.shape_cast %272 : vector<2x128xf32> to vector<1x2x128xf32>
    %c0_57 = arith.constant 0 : index
    %c0_58 = arith.constant 0 : index
    %c0_59 = arith.constant 0 : index
    %274 = vector.load %arg24[%c0_57, %c0_58, %c0_59] : memref<10x1x128xf32, #tpu.memory_space<vmem>>, vector<10x1x128xf32>
    %275 = vector.broadcast %273 : vector<1x2x128xf32> to vector<10x2x128xf32>
    %276 = vector.broadcast %274 : vector<10x1x128xf32> to vector<10x2x128xf32>
    %277 = arith.mulf %275, %276 : vector<10x2x128xf32>
    %cst_60 = arith.constant dense<0.000000e+00> : vector<10x2xf32>
    %278 = vector.multi_reduction <add>, %277, %cst_60 [2] : vector<10x2x128xf32> to vector<10x2xf32>
    %279 = vector.shape_cast %278 : vector<10x2xf32> to vector<10x2x1xf32>
    %280 = vector.shape_cast %279 : vector<10x2x1xf32> to vector<20x1xf32>
    %c0_61 = arith.constant 0 : index
    %c0_62 = arith.constant 0 : index
    %c0_63 = arith.constant 0 : index
    %281 = vector.load %arg3[%c0_61, %c0_62, %c0_63] : memref<10x2x32xbf16, #tpu.memory_space<vmem>>, vector<10x2x32xbf16>
    %282 = vector.shape_cast %281 : vector<10x2x32xbf16> to vector<20x32xbf16>
    %c0_64 = arith.constant 0 : index
    %c0_65 = arith.constant 0 : index
    %283 = vector.load %arg11[%c0_64, %c0_65] : memref<32x160xbf16, #tpu.memory_space<vmem>>, vector<32x160xbf16>
    %cst_66 = arith.constant dense<0.000000e+00> : vector<20x160xf32>
    %284 = tpu.matmul %282, %283, %cst_66 {dimension_numbers = #tpu.dot_dimension_numbers<[1], [0], [0], [1], [0, 0, 1, 1], [], []>} : vector<20x32xbf16>, vector<32x160xbf16>, vector<20x160xf32> -> vector<20x160xf32>
    %c0_67 = arith.constant 0 : index
    %c0_68 = arith.constant 0 : index
    %285 = vector.load %arg12[%c0_67, %c0_68] : memref<1x160xf32, #tpu.memory_space<vmem>>, vector<1x160xf32>
    %286 = vector.broadcast %285 : vector<1x160xf32> to vector<20x160xf32>
    %287 = arith.addf %284, %286 : vector<20x160xf32>
    %cst_69 = arith.constant 5.000000e-01 : f32
    %288 = vector.broadcast %cst_69 : f32 to vector<20x160xf32>
    %289 = arith.mulf %288, %287 : vector<20x160xf32>
    %cst_70 = arith.constant 0.707106769 : f32
    %290 = vector.broadcast %cst_70 : f32 to vector<20x160xf32>
    %291 = arith.mulf %287, %290 : vector<20x160xf32>
    %292 = math.erf %291 : vector<20x160xf32>
    %cst_71 = arith.constant 1.000000e+00 : f32
    %293 = vector.broadcast %cst_71 : f32 to vector<20x160xf32>
    %294 = arith.addf %293, %292 : vector<20x160xf32>
    %295 = arith.mulf %289, %294 : vector<20x160xf32>
    %296 = arith.truncf %295 : vector<20x160xf32> to vector<20x160xbf16>
    %c0_72 = arith.constant 0 : index
    %c0_73 = arith.constant 0 : index
    %297 = vector.load %arg13[%c0_72, %c0_73] : memref<160x160xbf16, #tpu.memory_space<vmem>>, vector<160x160xbf16>
    %cst_74 = arith.constant dense<0.000000e+00> : vector<20x160xf32>
    %298 = tpu.matmul %296, %297, %cst_74 {dimension_numbers = #tpu.dot_dimension_numbers<[1], [0], [0], [1], [0, 0, 1, 1], [], []>} : vector<20x160xbf16>, vector<160x160xbf16>, vector<20x160xf32> -> vector<20x160xf32>
    %c0_75 = arith.constant 0 : index
    %c0_76 = arith.constant 0 : index
    %299 = vector.load %arg14[%c0_75, %c0_76] : memref<1x160xf32, #tpu.memory_space<vmem>>, vector<1x160xf32>
    %300 = vector.broadcast %299 : vector<1x160xf32> to vector<20x160xf32>
    %301 = arith.addf %298, %300 : vector<20x160xf32>
    %302 = arith.truncf %301 : vector<20x160xf32> to vector<20x160xbf16>
    %c0_77 = arith.constant 0 : index
    %c0_78 = arith.constant 0 : index
    %303 = vector.load %arg15[%c0_77, %c0_78] : memref<160x152xbf16, #tpu.memory_space<vmem>>, vector<160x152xbf16>
    %cst_79 = arith.constant dense<0.000000e+00> : vector<20x152xf32>
    %304 = tpu.matmul %302, %303, %cst_79 {dimension_numbers = #tpu.dot_dimension_numbers<[1], [0], [0], [1], [0, 0, 1, 1], [], []>} : vector<20x160xbf16>, vector<160x152xbf16>, vector<20x152xf32> -> vector<20x152xf32>
    %c0_80 = arith.constant 0 : index
    %c0_81 = arith.constant 0 : index
    %305 = vector.load %arg16[%c0_80, %c0_81] : memref<1x152xf32, #tpu.memory_space<vmem>>, vector<1x152xf32>
    %306 = vector.broadcast %280 : vector<20x1xf32> to vector<20x152xf32>
    %307 = vector.broadcast %305 : vector<1x152xf32> to vector<20x152xf32>
    %308 = arith.mulf %306, %307 : vector<20x152xf32>
    %309 = arith.addf %304, %308 : vector<20x152xf32>
    %c0_82 = arith.constant 0 : index
    %c0_83 = arith.constant 0 : index
    %310 = vector.load %arg17[%c0_82, %c0_83] : memref<1x152xf32, #tpu.memory_space<vmem>>, vector<1x152xf32>
    %311 = vector.broadcast %310 : vector<1x152xf32> to vector<20x152xf32>
    %312 = arith.addf %309, %311 : vector<20x152xf32>
    %cst_84 = arith.constant 5.000000e-01 : f32
    %313 = vector.broadcast %cst_84 : f32 to vector<20x152xf32>
    %314 = arith.mulf %313, %312 : vector<20x152xf32>
    %cst_85 = arith.constant 0.707106769 : f32
    %315 = vector.broadcast %cst_85 : f32 to vector<20x152xf32>
    %316 = arith.mulf %312, %315 : vector<20x152xf32>
    %317 = math.erf %316 : vector<20x152xf32>
    %cst_86 = arith.constant 1.000000e+00 : f32
    %318 = vector.broadcast %cst_86 : f32 to vector<20x152xf32>
    %319 = arith.addf %318, %317 : vector<20x152xf32>
    %320 = arith.mulf %314, %319 : vector<20x152xf32>
    %321 = arith.truncf %320 : vector<20x152xf32> to vector<20x152xbf16>
    %c0_87 = arith.constant 0 : index
    %c0_88 = arith.constant 0 : index
    %322 = vector.load %arg18[%c0_87, %c0_88] : memref<152x152xbf16, #tpu.memory_space<vmem>>, vector<152x152xbf16>
    %cst_89 = arith.constant dense<0.000000e+00> : vector<20x152xf32>
    %323 = tpu.matmul %321, %322, %cst_89 {dimension_numbers = #tpu.dot_dimension_numbers<[1], [0], [0], [1], [0, 0, 1, 1], [], []>} : vector<20x152xbf16>, vector<152x152xbf16>, vector<20x152xf32> -> vector<20x152xf32>
    %c0_90 = arith.constant 0 : index
    %c0_91 = arith.constant 0 : index
    %324 = vector.load %arg19[%c0_90, %c0_91] : memref<1x152xf32, #tpu.memory_space<vmem>>, vector<1x152xf32>
    %325 = vector.broadcast %324 : vector<1x152xf32> to vector<20x152xf32>
    %326 = arith.addf %323, %325 : vector<20x152xf32>
    %cst_92 = arith.constant 5.000000e-01 : f32
    %327 = vector.broadcast %cst_92 : f32 to vector<20x152xf32>
    %328 = arith.mulf %327, %326 : vector<20x152xf32>
    %cst_93 = arith.constant 0.707106769 : f32
    %329 = vector.broadcast %cst_93 : f32 to vector<20x152xf32>
    %330 = arith.mulf %326, %329 : vector<20x152xf32>
    %331 = math.erf %330 : vector<20x152xf32>
    %cst_94 = arith.constant 1.000000e+00 : f32
    %332 = vector.broadcast %cst_94 : f32 to vector<20x152xf32>
    %333 = arith.addf %332, %331 : vector<20x152xf32>
    %334 = arith.mulf %328, %333 : vector<20x152xf32>
    %335 = arith.truncf %334 : vector<20x152xf32> to vector<20x152xbf16>
    %c0_95 = arith.constant 0 : index
    %c0_96 = arith.constant 0 : index
    %336 = vector.load %arg20[%c0_95, %c0_96] : memref<152x128xbf16, #tpu.memory_space<vmem>>, vector<152x128xbf16>
    %cst_97 = arith.constant dense<0.000000e+00> : vector<20x128xf32>
    %337 = tpu.matmul %335, %336, %cst_97 {dimension_numbers = #tpu.dot_dimension_numbers<[1], [0], [0], [1], [0, 0, 1, 1], [], []>} : vector<20x152xbf16>, vector<152x128xbf16>, vector<20x128xf32> -> vector<20x128xf32>
    %c0_98 = arith.constant 0 : index
    %c0_99 = arith.constant 0 : index
    %338 = vector.load %arg21[%c0_98, %c0_99] : memref<1x128xf32, #tpu.memory_space<vmem>>, vector<1x128xf32>
    %339 = vector.broadcast %338 : vector<1x128xf32> to vector<20x128xf32>
    %340 = arith.addf %337, %339 : vector<20x128xf32>
    %cst_100 = arith.constant dense<0xFF800000> : vector<20xf32>
    %341 = vector.multi_reduction <maximumf>, %340, %cst_100 [1] : vector<20x128xf32> to vector<20xf32>
    %342 = vector.shape_cast %341 : vector<20xf32> to vector<20x1xf32>
    %343 = vector.broadcast %342 : vector<20x1xf32> to vector<20x128xf32>
    %344 = arith.subf %340, %343 : vector<20x128xf32>
    %345 = math.exp %344 : vector<20x128xf32>
    %cst_101 = arith.constant dense<0.000000e+00> : vector<20xf32>
    %346 = vector.multi_reduction <add>, %345, %cst_101 [1] : vector<20x128xf32> to vector<20xf32>
    %347 = vector.shape_cast %346 : vector<20xf32> to vector<20x1xf32>
    %348 = tpu.reciprocal %347 {approx = true} : vector<20x1xf32> -> vector<20x1xf32>
    %349 = vector.broadcast %348 : vector<20x1xf32> to vector<20x128xf32>
    %350 = arith.mulf %345, %349 : vector<20x128xf32>
    %c0_102 = arith.constant 0 : index
    %c0_103 = arith.constant 0 : index
    %c0_104 = arith.constant 0 : index
    %351 = vector.load %arg4[%c0_102, %c0_103, %c0_104] : memref<10x2x10xbf16, #tpu.memory_space<vmem>>, vector<10x2x10xbf16>
    %352 = vector.shape_cast %351 : vector<10x2x10xbf16> to vector<20x10xbf16>
    %c0_105 = arith.constant 0 : index
    %c0_106 = arith.constant 0 : index
    %353 = vector.load %arg22[%c0_105, %c0_106] : memref<10x128xbf16, #tpu.memory_space<vmem>>, vector<10x128xbf16>
    %cst_107 = arith.constant dense<0.000000e+00> : vector<20x128xf32>
    %354 = tpu.matmul %352, %353, %cst_107 {dimension_numbers = #tpu.dot_dimension_numbers<[1], [0], [0], [1], [0, 0, 1, 1], [], []>} : vector<20x10xbf16>, vector<10x128xbf16>, vector<20x128xf32> -> vector<20x128xf32>
    %c0_108 = arith.constant 0 : index
    %c0_109 = arith.constant 0 : index
    %355 = vector.load %arg23[%c0_108, %c0_109] : memref<1x128xf32, #tpu.memory_space<vmem>>, vector<1x128xf32>
    %356 = vector.broadcast %355 : vector<1x128xf32> to vector<20x128xf32>
    %357 = arith.addf %354, %356 : vector<20x128xf32>
    %358 = arith.mulf %350, %357 : vector<20x128xf32>
    %cst_110 = arith.constant dense<0.000000e+00> : vector<20xf32>
    %359 = vector.multi_reduction <add>, %358, %cst_110 [1] : vector<20x128xf32> to vector<20xf32>
    %360 = vector.shape_cast %359 : vector<20xf32> to vector<20x1xf32>
    %cst_111 = arith.constant 9.99999993E-9 : f32
    %361 = vector.broadcast %cst_111 : f32 to vector<20x1xf32>
    %362 = arith.addf %360, %361 : vector<20x1xf32>
    %363 = tpu.reciprocal %362 {approx = true} : vector<20x1xf32> -> vector<20x1xf32>
    %364 = vector.broadcast %363 : vector<20x1xf32> to vector<20x128xf32>
    %365 = arith.mulf %358, %364 : vector<20x128xf32>
    %366 = vector.broadcast %280 : vector<20x1xf32> to vector<20x128xf32>
    %367 = arith.mulf %365, %366 : vector<20x128xf32>
    %368 = vector.extract_strided_slice %367 {offsets = [0, 0], sizes = [20, 16], strides = [1, 1]} : vector<20x128xf32> to vector<20x16xf32>
    %369 = vector.shape_cast %368 : vector<20x16xf32> to vector<10x2x16xf32>
    %c0_112 = arith.constant 0 : index
    %c0_113 = arith.constant 0 : index
    %c0_114 = arith.constant 0 : index
    %370 = vector.load %arg25[%c0_112, %c0_113, %c0_114] : memref<10x2x16xf32, #tpu.memory_space<vmem>>, vector<10x2x16xf32>
    tpu.vector_store %arg25[%c0_112, %c0_113, %c0_114], %369 {strides = array<i32>} : memref<10x2x16xf32, #tpu.memory_space<vmem>>, vector<10x2x16xf32>,
    return
  }
  func.func @transform_0(%arg0: i32) -> (i32, i32, i32) {
    %c0_i32 = arith.constant 0 : i32
    %c0_i32_0 = arith.constant 0 : i32
    %c0_i32_1 = arith.constant 0 : i32
    return %c0_i32, %arg0, %c0_i32_0 : i32, i32, i32
  }
  func.func @transform_1(%arg0: i32) -> (i32, i32, i32) {
    %c0_i32 = arith.constant 0 : i32
    %c0_i32_0 = arith.constant 0 : i32
    %c0_i32_1 = arith.constant 0 : i32
    return %c0_i32, %arg0, %c0_i32_0 : i32, i32, i32
  }
  func.func @transform_2(%arg0: i32) -> (i32, i32, i32) {
    %c0_i32 = arith.constant 0 : i32
    %c0_i32_0 = arith.constant 0 : i32
    %c0_i32_1 = arith.constant 0 : i32
    return %c0_i32, %arg0, %c0_i32_0 : i32, i32, i32
  }
  func.func @transform_3(%arg0: i32) -> (i32, i32, i32) {
    %c0_i32 = arith.constant 0 : i32
    %c0_i32_0 = arith.constant 0 : i32
    %c0_i32_1 = arith.constant 0 : i32
    return %c0_i32, %arg0, %c0_i32_0 : i32, i32, i32
  }
  func.func @transform_4(%arg0: i32) -> (i32, i32) {
    %c0_i32 = arith.constant 0 : i32
    %c0_i32_0 = arith.constant 0 : i32
    %c0_i32_1 = arith.constant 0 : i32
    return %c0_i32, %c0_i32_0 : i32, i32
  }
  func.func @transform_5(%arg0: i32) -> (i32, i32, i32) {
    %c0_i32 = arith.constant 0 : i32
    %c0_i32_0 = arith.constant 0 : i32
    %c0_i32_1 = arith.constant 0 : i32
    %c0_i32_2 = arith.constant 0 : i32
    return %c0_i32, %c0_i32_0, %c0_i32_1 : i32, i32, i32
  }
  func.func @transform_6(%arg0: i32) -> (i32, i32) {
    %c0_i32 = arith.constant 0 : i32
    %c0_i32_0 = arith.constant 0 : i32
    %c0_i32_1 = arith.constant 0 : i32
    return %c0_i32, %c0_i32_0 : i32, i32
  }
  func.func @transform_7(%arg0: i32) -> (i32, i32, i32) {
    %c0_i32 = arith.constant 0 : i32
    %c0_i32_0 = arith.constant 0 : i32
    %c0_i32_1 = arith.constant 0 : i32
    %c0_i32_2 = arith.constant 0 : i32
    return %c0_i32, %c0_i32_0, %c0_i32_1 : i32, i32, i32
  }
  func.func @transform_8(%arg0: i32) -> (i32, i32, i32) {
    %c0_i32 = arith.constant 0 : i32
    %c0_i32_0 = arith.constant 0 : i32
    %c0_i32_1 = arith.constant 0 : i32
    %c0_i32_2 = arith.constant 0 : i32
    return %c0_i32, %c0_i32_0, %c0_i32_1 : i32, i32, i32
  }
  func.func @transform_9(%arg0: i32) -> (i32, i32) {
    %c0_i32 = arith.constant 0 : i32
    %c0_i32_0 = arith.constant 0 : i32
    %c0_i32_1 = arith.constant 0 : i32
    return %c0_i32, %c0_i32_0 : i32, i32
  }
  func.func @transform_10(%arg0: i32) -> (i32, i32) {
    %c0_i32 = arith.constant 0 : i32
    %c0_i32_0 = arith.constant 0 : i32
    %c0_i32_1 = arith.constant 0 : i32
    return %c0_i32, %c0_i32_0 : i32, i32
  }
  func.func @transform_11(%arg0: i32) -> (i32, i32) {
    %c0_i32 = arith.constant 0 : i32
    %c0_i32_0 = arith.constant 0 : i32
    %c0_i32_1 = arith.constant 0 : i32
    return %c0_i32, %c0_i32_0 : i32, i32
  }
  func.func @transform_12(%arg0: i32) -> (i32, i32) {
    %c0_i32 = arith.constant 0 : i32
    %c0_i32_0 = arith.constant 0 : i32
    %c0_i32_1 = arith.constant 0 : i32
    return %c0_i32, %c0_i32_0 : i32, i32
  }
  func.func @transform_13(%arg0: i32) -> (i32, i32) {
    %c0_i32 = arith.constant 0 : i32
    %c0_i32_0 = arith.constant 0 : i32
    %c0_i32_1 = arith.constant 0 : i32
    return %c0_i32, %c0_i32_0 : i32, i32
  }
  func.func @transform_14(%arg0: i32) -> (i32, i32) {
    %c0_i32 = arith.constant 0 : i32
    %c0_i32_0 = arith.constant 0 : i32
    %c0_i32_1 = arith.constant 0 : i32
    return %c0_i32, %c0_i32_0 : i32, i32
  }
  func.func @transform_15(%arg0: i32) -> (i32, i32) {
    %c0_i32 = arith.constant 0 : i32
    %c0_i32_0 = arith.constant 0 : i32
    %c0_i32_1 = arith.constant 0 : i32
    return %c0_i32, %c0_i32_0 : i32, i32
  }
  func.func @transform_16(%arg0: i32) -> (i32, i32) {
    %c0_i32 = arith.constant 0 : i32
    %c0_i32_0 = arith.constant 0 : i32
    %c0_i32_1 = arith.constant 0 : i32
    return %c0_i32, %c0_i32_0 : i32, i32
  }
  func.func @transform_17(%arg0: i32) -> (i32, i32) {
    %c0_i32 = arith.constant 0 : i32
    %c0_i32_0 = arith.constant 0 : i32
    %c0_i32_1 = arith.constant 0 : i32
    return %c0_i32, %c0_i32_0 : i32, i32
  }
  func.func @transform_18(%arg0: i32) -> (i32, i32) {
    %c0_i32 = arith.constant 0 : i32
    %c0_i32_0 = arith.constant 0 : i32
    %c0_i32_1 = arith.constant 0 : i32
    return %c0_i32, %c0_i32_0 : i32, i32
  }
  func.func @transform_19(%arg0: i32) -> (i32, i32) {
    %c0_i32 = arith.constant 0 : i32
    %c0_i32_0 = arith.constant 0 : i32
    %c0_i32_1 = arith.constant 0 : i32
    return %c0_i32, %c0_i32_0 : i32, i32
  }
  func.func @transform_20(%arg0: i32) -> (i32, i32) {
    %c0_i32 = arith.constant 0 : i32
    %c0_i32_0 = arith.constant 0 : i32
    %c0_i32_1 = arith.constant 0 : i32
    return %c0_i32, %c0_i32_0 : i32, i32
  }
  func.func @transform_21(%arg0: i32) -> (i32, i32) {
    %c0_i32 = arith.constant 0 : i32
    %c0_i32_0 = arith.constant 0 : i32
    %c0_i32_1 = arith.constant 0 : i32
    return %c0_i32, %c0_i32_0 : i32, i32
  }
  func.func @transform_22(%arg0: i32) -> (i32, i32) {
    %c0_i32 = arith.constant 0 : i32
    %c0_i32_0 = arith.constant 0 : i32
    %c0_i32_1 = arith.constant 0 : i32
    return %c0_i32, %c0_i32_0 : i32, i32
  }
  func.func @transform_23(%arg0: i32) -> (i32, i32, i32) {
    %c0_i32 = arith.constant 0 : i32
    %c0_i32_0 = arith.constant 0 : i32
    %c0_i32_1 = arith.constant 0 : i32
    %c0_i32_2 = arith.constant 0 : i32
    return %c0_i32, %c0_i32_0, %c0_i32_1 : i32, i32, i32
  }
  func.func @transform_24(%arg0: i32) -> (i32, i32, i32) {
    %c0_i32 = arith.constant 0 : i32
    %c0_i32_0 = arith.constant 0 : i32
    %c0_i32_1 = arith.constant 0 : i32
    return %c0_i32, %arg0, %c0_i32_0 : i32, i32, i32
  }
}

</mosaic_0001>

<llo_original>
// kernel: forward.1
$region0: #{forward.1}
  #allocation0 [shape = 'u32[]', space=smem, size = 0x4, offset = 0x4, fixed_abs, tag = 'smem constant byte address 0x4 - core index']
  #allocation1 [shape = 'u32[144,128]{1,0:T(1,128)}', space=vmem, size = 0x12000, scoped, tag = 'internal scratch']
  %s0 = inlined_call_operand.vmem [shape: f32[10,2,10], index: 0, kind: input, shape index: {}]
  %s1 = inlined_call_operand.vmem [shape: bf16[10,2,8], index: 1, kind: input, shape index: {}]
  %s2 = inlined_call_operand.vmem [shape: bf16[10,2,32], index: 2, kind: input, shape index: {}]
  %s3 = inlined_call_operand.vmem [shape: bf16[10,2,10], index: 3, kind: input, shape index: {}]
  %s4 = inlined_call_operand.hbm [shape: bf16[8,32], index: 4, kind: input, shape index: {}]
  %s5 = inlined_call_operand.hbm [shape: f32[1,1,32], index: 5, kind: input, shape index: {}]
  %s6 = inlined_call_operand.hbm [shape: bf16[32,64], index: 6, kind: input, shape index: {}]
  %s7 = inlined_call_operand.hbm [shape: f32[1,1,64], index: 7, kind: input, shape index: {}]
  %s8 = inlined_call_operand.vmem [shape: bf16[10,64,128], index: 8, kind: input, shape index: {}]
  %s9 = inlined_call_operand.hbm [shape: f32[1,128], index: 9, kind: input, shape index: {}]
  %s10 = inlined_call_operand.vmem [shape: bf16[32,160], index: 10, kind: input, shape index: {}]
  %s11 = inlined_call_operand.vmem [shape: f32[1,160], index: 11, kind: input, shape index: {}]
  %s12 = inlined_call_operand.vmem [shape: bf16[160,160], index: 12, kind: input, shape index: {}]
  %s13 = inlined_call_operand.hbm [shape: f32[1,160], index: 13, kind: input, shape index: {}]
  %s14 = inlined_call_operand.vmem [shape: bf16[160,152], index: 14, kind: input, shape index: {}]
  %s15 = inlined_call_operand.hbm [shape: f32[1,152], index: 15, kind: input, shape index: {}]
  %s16 = inlined_call_operand.hbm [shape: f32[1,152], index: 16, kind: input, shape index: {}]
  %s17 = inlined_call_operand.hbm [shape: bf16[152,152], index: 17, kind: input, shape index: {}]
  %s18 = inlined_call_operand.hbm [shape: f32[1,152], index: 18, kind: input, shape index: {}]
  %s19 = inlined_call_operand.hbm [shape: bf16[152,128], index: 19, kind: input, shape index: {}]
  %s20 = inlined_call_operand.hbm [shape: f32[1,128], index: 20, kind: input, shape index: {}]
  %s21 = inlined_call_operand.hbm [shape: bf16[10,128], index: 21, kind: input, shape index: {}]
  %s22 = inlined_call_operand.hbm [shape: f32[1,128], index: 22, kind: input, shape index: {}]
  %s23 = inlined_call_operand.hbm [shape: f32[10,1,128], index: 23, kind: input, shape index: {}]
  %s24 = inlined_call_operand.hbm [shape: f32[10,2,16], index: 24, kind: output, shape index: {}]
  %s25 = sld [smem:[#allocation0]]
  $region166: #{forward.1} parent=0
    _
  %s27 = ssub.s32 1, %s25
  %s28 = scalar_select 0, %s27, %s25
  $region1: #{forward.1} parent=0
    #allocation2 [shape = 'u8[2048]{0}', space=vmem, size = 0x800, scoped, tag = 'input window, operand 4, single buffered']
    #allocation3 [shape = 's32[1]{0}', space=sflag, size = 0x4, scoped, tag = 'scoped memory for forward.1']
    #allocation4 [shape = 's32[1]{0}', space=sflag, size = 0x4, scoped, tag = 'scoped memory for forward.1']
    #allocation5 [shape = 'u8[512]{0}', space=vmem, size = 0x400, scoped, tag = 'input window, operand 5, single buffered']
    #allocation6 [shape = 's32[1]{0}', space=sflag, size = 0x4, scoped, tag = 'scoped memory for forward.1']
    #allocation7 [shape = 'u8[8192]{0}', space=vmem, size = 0x2000, scoped, tag = 'input window, operand 6, single buffered']
    #allocation8 [shape = 'u8[512]{0}', space=vmem, size = 0x400, scoped, tag = 'input window, operand 7, single buffered']
    #allocation9 [shape = 's32[1]{0}', space=sflag, size = 0x4, scoped, tag = 'scoped memory for forward.1']
    #allocation10 [shape = 'u8[512]{0}', space=vmem, size = 0x400, scoped, tag = 'input window, operand 9, single buffered']
    #allocation11 [shape = 'u8[1024]{0}', space=vmem, size = 0x400, scoped, tag = 'input window, operand 13, single buffered']
    #allocation12 [shape = 's32[1]{0}', space=sflag, size = 0x4, scoped, tag = 'scoped memory for forward.1']
    #allocation13 [shape = 'u8[1024]{0}', space=vmem, size = 0x400, scoped, tag = 'input window, operand 15, single buffered']
    #allocation14 [shape = 'u8[1024]{0}', space=vmem, size = 0x400, scoped, tag = 'input window, operand 16, single buffered']
    #allocation15 [shape = 's32[1]{0}', space=sflag, size = 0x4, scoped, tag = 'scoped memory for forward.1']
    #allocation16 [shape = 'u8[77824]{0}', space=vmem, size = 0x13000, scoped, tag = 'input window, operand 17, single buffered']
    #allocation17 [shape = 'u8[1024]{0}', space=vmem, size = 0x400, scoped, tag = 'input window, operand 18, single buffered']
    #allocation18 [shape = 's32[1]{0}', space=sflag, size = 0x4, scoped, tag = 'scoped memory for forward.1']
    #allocation19 [shape = 'u8[38912]{0}', space=vmem, size = 0x9800, scoped, tag = 'input window, operand 19, single buffered']
    #allocation20 [shape = 'u8[512]{0}', space=vmem, size = 0x400, scoped, tag = 'input window, operand 20, single buffered']
    #allocation21 [shape = 's32[1]{0}', space=sflag, size = 0x4, scoped, tag = 'scoped memory for forward.1']
    #allocation22 [shape = 'u8[4096]{0}', space=vmem, size = 0x1000, scoped, tag = 'input window, operand 21, single buffered']
    #allocation23 [shape = 'u8[512]{0}', space=vmem, size = 0x400, scoped, tag = 'input window, operand 22, single buffered']
    #allocation24 [shape = 's32[1]{0}', space=sflag, size = 0x4, scoped, tag = 'scoped memory for forward.1']
    #allocation25 [shape = 'u8[5120]{0}', space=vmem, size = 0x1400, scoped, tag = 'input window, operand 23, single buffered']
    #allocation26 [shape = 'u8[10240]{0}', space=vmem, size = 0x2800, scoped, tag = 'output window, operand 0, single buffered']
    %29 = vsyncpa [#allocation3], 0
    %30 = vsyncpa [#allocation6], 0
    %31 = vsyncpa [#allocation9], 0
    %32 = vsyncpa [#allocation12], 0
    %33 = vsyncpa [#allocation15], 0
    %34 = vsyncpa [#allocation18], 0
    %35 = vsyncpa [#allocation21], 0
    %36 = vsyncpa [#allocation24], 0
    %37 = vsyncpa [#allocation4], 0
    // Predicated region
    $region2: #{forward.1} parent=1 // pred_check
      _
    $region3: #{forward.1} parent=1 // pred_check_branch
      %39 = sbr.rel (0) target = $region5
    $region4: #{forward.1} parent=1 // pred_region
      _
    $region5: #{forward.1} parent=1 // pred_fallthru
      _
    // Predicated region
    $region6: #{forward.1} parent=1 // pred_check
      _
    $region7: #{forward.1} parent=1 // pred_check_branch
      %41 = sbr.rel (0) target = $region9
    $region8: #{forward.1} parent=1 // pred_region
      _
    $region9: #{forward.1} parent=1 // pred_fallthru
      _
    // Predicated region
    $region10: #{forward.1} parent=1 // pred_check
      _
    $region11: #{forward.1} parent=1 // pred_check_branch
      %43 = sbr.rel (0) target = $region13
    $region12: #{forward.1} parent=1 // pred_region
      _
    $region13: #{forward.1} parent=1 // pred_fallthru
      _
    // Predicated region
    $region14: #{forward.1} parent=1 // pred_check
      _
    $region15: #{forward.1} parent=1 // pred_check_branch
      %45 = sbr.rel (0) target = $region17
    $region16: #{forward.1} parent=1 // pred_region
      _
    $region17: #{forward.1} parent=1 // pred_fallthru
      _
    // Predicated region
    $region18: #{forward.1} parent=1 // pred_check
      _
    $region19: #{forward.1} parent=1 // pred_check_branch
      %47 = sbr.rel (0) target = $region21
    $region20: #{forward.1} parent=1 // pred_region
      %s49 = ssub.s32 64, 64
      %50 = vsyncadd [#allocation3], %s49
      %s52 = sshll.u32 [#allocation2], 4
      %s53 = int_to_ptr.vmem [resolvable:$true] %s52
      %55 = dma.hbm_to_vmem [thread:$0]  %s4, 64, %s53, [#allocation3]
    $region21: #{forward.1} parent=1 // pred_fallthru
      _
    // Predicated region
    $region22: #{forward.1} parent=1 // pred_check
      _
    $region23: #{forward.1} parent=1 // pred_check_branch
      %57 = sbr.rel (0) target = $region25
    $region24: #{forward.1} parent=1 // pred_region
      %s59 = ssub.s32 16, 16
      %60 = vsyncadd [#allocation6], %s59
      %s62 = sshll.u32 [#allocation5], 4
      %s63 = int_to_ptr.vmem [resolvable:$true] %s62
      %65 = dma.hbm_to_vmem [thread:$0]  %s5, 16, %s63, [#allocation6]
    $region25: #{forward.1} parent=1 // pred_fallthru
      _
    // Predicated region
    $region26: #{forward.1} parent=1 // pred_check
      _
    $region27: #{forward.1} parent=1 // pred_check_branch
      %67 = sbr.rel (0) target = $region29
    $region28: #{forward.1} parent=1 // pred_region
      %s69 = ssub.s32 256, 256
      %70 = vsyncadd [#allocation6], %s69
      %s71 = sshll.u32 [#allocation7], 4
      %s72 = int_to_ptr.vmem [resolvable:$true] %s71
      %77 = dma.hbm_to_vmem [thread:$0]  %s6, 256, %s72, [#allocation6], 64, 64, 4
    $region29: #{forward.1} parent=1 // pred_fallthru
      _
    // Predicated region
    $region30: #{forward.1} parent=1 // pred_check
      _
    $region31: #{forward.1} parent=1 // pred_check_branch
      %79 = sbr.rel (0) target = $region33
    $region32: #{forward.1} parent=1 // pred_region
      %s81 = ssub.s32 16, 16
      %82 = vsyncadd [#allocation9], %s81
      %s84 = sshll.u32 [#allocation8], 4
      %s85 = int_to_ptr.vmem [resolvable:$true] %s84
      %87 = dma.hbm_to_vmem [thread:$0]  %s7, 16, %s85, [#allocation9]
    $region33: #{forward.1} parent=1 // pred_fallthru
      _
    // Predicated region
    $region34: #{forward.1} parent=1 // pred_check
      _
    $region35: #{forward.1} parent=1 // pred_check_branch
      %89 = sbr.rel (0) target = $region37
    $region36: #{forward.1} parent=1 // pred_region
      _
    $region37: #{forward.1} parent=1 // pred_fallthru
      _
    // Predicated region
    $region38: #{forward.1} parent=1 // pred_check
      _
    $region39: #{forward.1} parent=1 // pred_check_branch
      %91 = sbr.rel (0) target = $region41
    $region40: #{forward.1} parent=1 // pred_region
      %s93 = ssub.s32 16, 16
      %94 = vsyncadd [#allocation9], %s93
      %s96 = sshll.u32 [#allocation10], 4
      %s97 = int_to_ptr.vmem [resolvable:$true] %s96
      %99 = dma.hbm_to_vmem [thread:$0]  %s9, 16, %s97, [#allocation9]
    $region41: #{forward.1} parent=1 // pred_fallthru
      _
    // Predicated region
    $region42: #{forward.1} parent=1 // pred_check
      _
    $region43: #{forward.1} parent=1 // pred_check_branch
      %101 = sbr.rel (0) target = $region45
    $region44: #{forward.1} parent=1 // pred_region
      _
    $region45: #{forward.1} parent=1 // pred_fallthru
      _
    // Predicated region
    $region46: #{forward.1} parent=1 // pred_check
      _
    $region47: #{forward.1} parent=1 // pred_check_branch
      %103 = sbr.rel (0) target = $region49
    $region48: #{forward.1} parent=1 // pred_region
      _
    $region49: #{forward.1} parent=1 // pred_fallthru
      _
    // Predicated region
    $region50: #{forward.1} parent=1 // pred_check
      _
    $region51: #{forward.1} parent=1 // pred_check_branch
      %105 = sbr.rel (0) target = $region53
    $region52: #{forward.1} parent=1 // pred_region
      _
    $region53: #{forward.1} parent=1 // pred_fallthru
      _
    // Predicated region
    $region54: #{forward.1} parent=1 // pred_check
      _
    $region55: #{forward.1} parent=1 // pred_check_branch
      %107 = sbr.rel (0) target = $region57
    $region56: #{forward.1} parent=1 // pred_region
      %s109 = ssub.s32 32, 32
      %110 = vsyncadd [#allocation12], %s109
      %s112 = sshll.u32 [#allocation11], 4
      %s113 = int_to_ptr.vmem [resolvable:$true] %s112
      %115 = dma.hbm_to_vmem [thread:$0]  %s13, 32, %s113, [#allocation12]
    $region57: #{forward.1} parent=1 // pred_fallthru
      _
    // Predicated region
    $region58: #{forward.1} parent=1 // pred_check
      _
    $region59: #{forward.1} parent=1 // pred_check_branch
      %117 = sbr.rel (0) target = $region61
    $region60: #{forward.1} parent=1 // pred_region
      _
    $region61: #{forward.1} parent=1 // pred_fallthru
      _
    // Predicated region
    $region62: #{forward.1} parent=1 // pred_check
      _
    $region63: #{forward.1} parent=1 // pred_check_branch
      %119 = sbr.rel (0) target = $region65
    $region64: #{forward.1} parent=1 // pred_region
      %s121 = ssub.s32 32, 32
      %122 = vsyncadd [#allocation12], %s121
      %s124 = sshll.u32 [#allocation13], 4
      %s125 = int_to_ptr.vmem [resolvable:$true] %s124
      %127 = dma.hbm_to_vmem [thread:$0]  %s15, 32, %s125, [#allocation12]
    $region65: #{forward.1} parent=1 // pred_fallthru
      _
    // Predicated region
    $region66: #{forward.1} parent=1 // pred_check
      _
    $region67: #{forward.1} parent=1 // pred_check_branch
      %129 = sbr.rel (0) target = $region69
    $region68: #{forward.1} parent=1 // pred_region
      %s131 = ssub.s32 32, 32
      %132 = vsyncadd [#allocation15], %s131
      %s134 = sshll.u32 [#allocation14], 4
      %s135 = int_to_ptr.vmem [resolvable:$true] %s134
      %137 = dma.hbm_to_vmem [thread:$0]  %s16, 32, %s135, [#allocation15]
    $region69: #{forward.1} parent=1 // pred_fallthru
      _
    // Predicated region
    $region70: #{forward.1} parent=1 // pred_check
      _
    $region71: #{forward.1} parent=1 // pred_check_branch
      %139 = sbr.rel (0) target = $region73
    $region72: #{forward.1} parent=1 // pred_region
      %s141 = ssub.s32 2432, 2432
      %142 = vsyncadd [#allocation15], %s141
      %s143 = sshll.u32 [#allocation16], 4
      %s144 = int_to_ptr.vmem [resolvable:$true] %s143
      %149 = dma.hbm_to_vmem [thread:$0]  %s17, 2432, %s144, [#allocation15], 128, 128, 8
    $region73: #{forward.1} parent=1 // pred_fallthru
      _
    // Predicated region
    $region74: #{forward.1} parent=1 // pred_check
      _
    $region75: #{forward.1} parent=1 // pred_check_branch
      %151 = sbr.rel (0) target = $region77
    $region76: #{forward.1} parent=1 // pred_region
      %s153 = ssub.s32 32, 32
      %154 = vsyncadd [#allocation18], %s153
      %s156 = sshll.u32 [#allocation17], 4
      %s157 = int_to_ptr.vmem [resolvable:$true] %s156
      %159 = dma.hbm_to_vmem [thread:$0]  %s18, 32, %s157, [#allocation18]
    $region77: #{forward.1} parent=1 // pred_fallthru
      _
    // Predicated region
    $region78: #{forward.1} parent=1 // pred_check
      _
    $region79: #{forward.1} parent=1 // pred_check_branch
      %161 = sbr.rel (0) target = $region81
    $region80: #{forward.1} parent=1 // pred_region
      %s163 = ssub.s32 1216, 1216
      %164 = vsyncadd [#allocation18], %s163
      %s165 = sshll.u32 [#allocation19], 4
      %s166 = int_to_ptr.vmem [resolvable:$true] %s165
      %171 = dma.hbm_to_vmem [thread:$0]  %s19, 1216, %s166, [#allocation18], 64, 64, 4
    $region81: #{forward.1} parent=1 // pred_fallthru
      _
    // Predicated region
    $region82: #{forward.1} parent=1 // pred_check
      _
    $region83: #{forward.1} parent=1 // pred_check_branch
      %173 = sbr.rel (0) target = $region85
    $region84: #{forward.1} parent=1 // pred_region
      %s175 = ssub.s32 16, 16
      %176 = vsyncadd [#allocation21], %s175
      %s178 = sshll.u32 [#allocation20], 4
      %s179 = int_to_ptr.vmem [resolvable:$true] %s178
      %181 = dma.hbm_to_vmem [thread:$0]  %s20, 16, %s179, [#allocation21]
    $region85: #{forward.1} parent=1 // pred_fallthru
      _
    // Predicated region
    $region86: #{forward.1} parent=1 // pred_check
      _
    $region87: #{forward.1} parent=1 // pred_check_branch
      %183 = sbr.rel (0) target = $region89
    $region88: #{forward.1} parent=1 // pred_region
      %s185 = ssub.s32 128, 128
      %186 = vsyncadd [#allocation21], %s185
      %s187 = sshll.u32 [#allocation22], 4
      %s188 = int_to_ptr.vmem [resolvable:$true] %s187
      %193 = dma.hbm_to_vmem [thread:$0]  %s21, 128, %s188, [#allocation21], 64, 64, 4
    $region89: #{forward.1} parent=1 // pred_fallthru
      _
    // Predicated region
    $region90: #{forward.1} parent=1 // pred_check
      _
    $region91: #{forward.1} parent=1 // pred_check_branch
      %195 = sbr.rel (0) target = $region93
    $region92: #{forward.1} parent=1 // pred_region
      %s197 = ssub.s32 16, 16
      %198 = vsyncadd [#allocation24], %s197
      %s200 = sshll.u32 [#allocation23], 4
      %s201 = int_to_ptr.vmem [resolvable:$true] %s200
      %203 = dma.hbm_to_vmem [thread:$0]  %s22, 16, %s201, [#allocation24]
    $region93: #{forward.1} parent=1 // pred_fallthru
      _
    // Predicated region
    $region94: #{forward.1} parent=1 // pred_check
      _
    $region95: #{forward.1} parent=1 // pred_check_branch
      %205 = sbr.rel (0) target = $region97
    $region96: #{forward.1} parent=1 // pred_region
      %s207 = ssub.s32 160, 160
      %208 = vsyncadd [#allocation24], %s207
      %s209 = sshll.u32 [#allocation25], 4
      %s210 = int_to_ptr.vmem [resolvable:$true] %s209
      %215 = dma.hbm_to_vmem [thread:$0]  %s23, 160, %s210, [#allocation24], 16, 16, 1
    $region97: #{forward.1} parent=1 // pred_fallthru
      _
    // Predicated region
    $region98: #{forward.1} parent=1 // pred_check
      _
    $region99: #{forward.1} parent=1 // pred_check_branch
      %217 = sbr.rel (0) target = $region101
    $region100: #{forward.1} parent=1 // pred_region
      %218 = dma.done [#allocation3], 64
    $region101: #{forward.1} parent=1 // pred_fallthru
      _
    // Predicated region
    $region102: #{forward.1} parent=1 // pred_check
      _
    $region103: #{forward.1} parent=1 // pred_check_branch
      %220 = sbr.rel (0) target = $region105
    $region104: #{forward.1} parent=1 // pred_region
      %221 = dma.done [#allocation6], 16
    $region105: #{forward.1} parent=1 // pred_fallthru
      _
    // Predicated region
    $region106: #{forward.1} parent=1 // pred_check
      _
    $region107: #{forward.1} parent=1 // pred_check_branch
      %223 = sbr.rel (0) target = $region109
    $region108: #{forward.1} parent=1 // pred_region
      %224 = dma.done [#allocation6], 256
    $region109: #{forward.1} parent=1 // pred_fallthru
      _
    // Predicated region
    $region110: #{forward.1} parent=1 // pred_check
      _
    $region111: #{forward.1} parent=1 // pred_check_branch
      %226 = sbr.rel (0) target = $region113
    $region112: #{forward.1} parent=1 // pred_region
      %227 = dma.done [#allocation9], 16
    $region113: #{forward.1} parent=1 // pred_fallthru
      _
    // Predicated region
    $region114: #{forward.1} parent=1 // pred_check
      _
    $region115: #{forward.1} parent=1 // pred_check_branch
      %229 = sbr.rel (0) target = $region117
    $region116: #{forward.1} parent=1 // pred_region
      %230 = dma.done [#allocation9], 16
    $region117: #{forward.1} parent=1 // pred_fallthru
      _
    // Predicated region
    $region118: #{forward.1} parent=1 // pred_check
      _
    $region119: #{forward.1} parent=1 // pred_check_branch
      %232 = sbr.rel (0) target = $region121
    $region120: #{forward.1} parent=1 // pred_region
      %233 = dma.done [#allocation12], 32
    $region121: #{forward.1} parent=1 // pred_fallthru
      _
    // Predicated region
    $region122: #{forward.1} parent=1 // pred_check
      _
    $region123: #{forward.1} parent=1 // pred_check_branch
      %235 = sbr.rel (0) target = $region125
    $region124: #{forward.1} parent=1 // pred_region
      %236 = dma.done [#allocation12], 32
    $region125: #{forward.1} parent=1 // pred_fallthru
      _
    // Predicated region
    $region126: #{forward.1} parent=1 // pred_check
      _
    $region127: #{forward.1} parent=1 // pred_check_branch
      %238 = sbr.rel (0) target = $region129
    $region128: #{forward.1} parent=1 // pred_region
      %239 = dma.done [#allocation15], 32
    $region129: #{forward.1} parent=1 // pred_fallthru
      _
    // Predicated region
    $region130: #{forward.1} parent=1 // pred_check
      _
    $region131: #{forward.1} parent=1 // pred_check_branch
      %241 = sbr.rel (0) target = $region133
    $region132: #{forward.1} parent=1 // pred_region
      %242 = dma.done [#allocation15], 2432
    $region133: #{forward.1} parent=1 // pred_fallthru
      _
    // Predicated region
    $region134: #{forward.1} parent=1 // pred_check
      _
    $region135: #{forward.1} parent=1 // pred_check_branch
      %244 = sbr.rel (0) target = $region137
    $region136: #{forward.1} parent=1 // pred_region
      %245 = dma.done [#allocation18], 32
    $region137: #{forward.1} parent=1 // pred_fallthru
      _
    // Predicated region
    $region138: #{forward.1} parent=1 // pred_check
      _
    $region139: #{forward.1} parent=1 // pred_check_branch
      %247 = sbr.rel (0) target = $region141
    $region140: #{forward.1} parent=1 // pred_region
      %248 = dma.done [#allocation18], 1216
    $region141: #{forward.1} parent=1 // pred_fallthru
      _
    // Predicated region
    $region142: #{forward.1} parent=1 // pred_check
      _
    $region143: #{forward.1} parent=1 // pred_check_branch
      %250 = sbr.rel (0) target = $region145
    $region144: #{forward.1} parent=1 // pred_region
      %251 = dma.done [#allocation21], 16
    $region145: #{forward.1} parent=1 // pred_fallthru
      _
    // Predicated region
    $region146: #{forward.1} parent=1 // pred_check
      _
    $region147: #{forward.1} parent=1 // pred_check_branch
      %253 = sbr.rel (0) target = $region149
    $region148: #{forward.1} parent=1 // pred_region
      %254 = dma.done [#allocation21], 128
    $region149: #{forward.1} parent=1 // pred_fallthru
      _
    // Predicated region
    $region150: #{forward.1} parent=1 // pred_check
      _
    $region151: #{forward.1} parent=1 // pred_check_branch
      %256 = sbr.rel (0) target = $region153
    $region152: #{forward.1} parent=1 // pred_region
      %257 = dma.done [#allocation24], 16
    $region153: #{forward.1} parent=1 // pred_fallthru
      _
    // Predicated region
    $region154: #{forward.1} parent=1 // pred_check
      _
    $region155: #{forward.1} parent=1 // pred_check_branch
      %259 = sbr.rel (0) target = $region157
    $region156: #{forward.1} parent=1 // pred_region
      %260 = dma.done [#allocation24], 160
    $region157: #{forward.1} parent=1 // pred_fallthru
      _
    %v262 = vld [vmem:[%s0] sm:$0x3]
    %v263 = vld [vmem:[%s0 + $0x2] sm:$0x3]
    %v264 = vld [vmem:[%s0 + $0x4] sm:$0x3]
    %v265 = vld [vmem:[%s0 + $0x6] sm:$0x3]
    %v266 = vld [vmem:[%s0 + $0x8] sm:$0x3]
    %v267 = vld [vmem:[%s0 + $0xa] sm:$0x3]
    %v268 = vld [vmem:[%s0 + $0xc] sm:$0x3]
    %v269 = vld [vmem:[%s0 + $0xe] sm:$0x3]
    %v270 = vld [vmem:[%s0 + $0x10] sm:$0x3]
    %v271 = vld [vmem:[%s0 + $0x12] sm:$0x3]
    %v272 = vld [vmem:[%s1] sm:$0x1]
    %v273 = vld [vmem:[%s1 + $0x1] sm:$0x1]
    %v274 = vld [vmem:[%s1 + $0x2] sm:$0x1]
    %v275 = vld [vmem:[%s1 + $0x3] sm:$0x1]
    %v276 = vld [vmem:[%s1 + $0x4] sm:$0x1]
    %v277 = vld [vmem:[%s1 + $0x5] sm:$0x1]
    %v278 = vld [vmem:[%s1 + $0x6] sm:$0x1]
    %v279 = vld [vmem:[%s1 + $0x7] sm:$0x1]
    %v280 = vld [vmem:[%s1 + $0x8] sm:$0x1]
    %v281 = vld [vmem:[%s1 + $0x9] sm:$0x1]
    %v282 = vld [vmem:[#allocation2] sm:$0xf]
    %v293 = vcombine.low %v272, %v273
    %v294 = vcombine.low %v274, %v275
    %v295 = vcombine.low %v276, %v277
    %v296 = vcombine.low %v278, %v279
    %v298 = vunpack.c.l.s4 1966171168
    %v299 = vunpack.c.0.s8 %v298
    %v300 = vlaneseq
    %v301 = vshrl.u32 %v300, 7
    %v302 = vsub.s32 %v299, %v301
    %v303 = vrot.slane %v293, %v302
    %v305 = vunpack.c.l.s4 1966171168
    %v306 = vunpack.c.0.s8 %v305
    %v307 = vlaneseq
    %v308 = vshrl.u32 %v307, 7
    %v309 = vsub.s32 %v306, %v308
    %v310 = vrot.slane %v294, %v309
    %v312 = vunpack.c.l.s4 1966171168
    %v313 = vunpack.c.0.s8 %v312
    %v314 = vlaneseq
    %v315 = vshrl.u32 %v314, 7
    %v316 = vsub.s32 %v313, %v315
    %v317 = vrot.slane %v295, %v316
    %v319 = vunpack.c.l.s4 1966171168
    %v320 = vunpack.c.0.s8 %v319
    %v321 = vlaneseq
    %v322 = vshrl.u32 %v321, 7
    %v323 = vsub.s32 %v320, %v322
    %v324 = vrot.slane %v296, %v323
    %v325 = vcombine.low %v303, %v310
    %v326 = vcombine.low %v317, %v324
    %v328 = vunpack.c.l.s4 1966171168
    %v329 = vunpack.c.0.s8 %v328
    %v330 = vlaneseq
    %v331 = vshrl.u32 %v330, 7
    %v332 = vsub.s32 %v329, %v331
    %v333 = vrot.slane %v325, %v332
    %v335 = vunpack.c.l.s4 1966171168
    %v336 = vunpack.c.0.s8 %v335
    %v337 = vlaneseq
    %v338 = vshrl.u32 %v337, 7
    %v339 = vsub.s32 %v336, %v338
    %v340 = vrot.slane %v326, %v339
    %v341 = vcombine.low %v333, %v340
    %v342 = vcombine.low %v280, %v281
    %v344 = vunpack.c.l.s4 1966171168
    %v345 = vunpack.c.0.s8 %v344
    %v346 = vlaneseq
    %v347 = vshrl.u32 %v346, 7
    %v348 = vsub.s32 %v345, %v347
    %v349 = vrot.slane %v342, %v348
    %v351 = vunpack.c.l.s4 1966171168
    %v352 = vunpack.c.0.s8 %v351
    %v353 = vlaneseq
    %v354 = vshrl.u32 %v353, 7
    %v355 = vsub.s32 %v352, %v354
    %v356 = vrot.slane %v349, %v355
    %vm357 = vcmask 64512
    %v359 = vsel %vm357, %v341, 0
    %v362 = vsel %vm357, %v356, 0
    %vm364 = vcmask 1043456
    %v366 = vsel %vm364, %v282, 0
    %368 = vmatprep.subr.bf16.mxu0 0
    %369 = vmatpush1.bf16.msra.mxu0 %v366
    %370 = vmatprep.subr.bf16.mxu0 0
    %371 = vmatpush1.bf16.msra.mxu0 0
    %372 = vmatprep.subr.bf16.mxu0 0
    %373 = vmatpush1.bf16.msra.mxu0 0
    %374 = vmatprep.subr.bf16.mxu0 0
    %375 = vmatpush1.bf16.msra.mxu0 0
    %376 = vmatprep.subr.bf16.mxu0 0
    %377 = vmatpush1.bf16.msra.mxu0 0
    %378 = vmatprep.subr.bf16.mxu0 0
    %379 = vmatpush1.bf16.msra.mxu0 0
    %380 = vmatprep.subr.bf16.mxu0 0
    %381 = vmatpush1.bf16.msra.mxu0 0
    %382 = vmatprep.subr.bf16.mxu0 0
    %383 = vmatpush1.bf16.msra.mxu0 0
    %384 = vmatprep.subr.bf16.mxu0 0
    %385 = vmatpush1.bf16.msra.mxu0 0
    %386 = vmatprep.subr.bf16.mxu0 0
    %387 = vmatpush1.bf16.msra.mxu0 0
    %388 = vmatprep.subr.bf16.mxu0 0
    %389 = vmatpush1.bf16.msra.mxu0 0
    %390 = vmatprep.subr.bf16.mxu0 0
    %391 = vmatpush1.bf16.msra.mxu0 0
    %392 = vmatprep.subr.bf16.mxu0 0
    %393 = vmatpush1.bf16.msra.mxu0 0
    %394 = vmatprep.subr.bf16.mxu0 0
    %395 = vmatpush1.bf16.msra.mxu0 0
    %396 = vmatprep.subr.bf16.mxu0 0
    %397 = vmatpush1.bf16.msra.mxu0 0
    %398 = vmatprep.subr.bf16.mxu0 0
    %399 = vmatpush1.bf16.msra.mxu0 0
    %400 = vmatprep.mubr.bf16.mxu0 0
    %401 = vmatmul.mubr.bf16.gmra.mrb[0].mxu0 %v359
    %v402 = vpop.f32.mrb[0].mxu0
    %v403 = vadd.f32 0.0, %v402
    %v404 = vpop.f32.mrb[0].mxu0
    %v405 = vpop.f32.mrb[0].mxu0
    %v406 = vadd.f32 0.0, %v405
    %v407 = vpop.f32.mrb[0].mxu0
    %408 = vmatprep.mubr.bf16.mxu0 0
    %409 = vmatmul.mubr.bf16.gmra.mrb[0].mxu0 %v362
    %v410 = vpop.f32.mrb[0].mxu0
    %v411 = vadd.f32 0.0, %v410
    %v412 = vpop.f32.mrb[0].mxu0
    %v413 = vpop.f32.mrb[0].mxu0
    %v414 = vpop.f32.mrb[0].mxu0
    %415 = vdwg.mxu0
    %v419 = vcombine.high %v403, %v403
    %v421 = vunpack.c.l.s4 1983009808
    %v422 = vunpack.c.0.s8 %v421
    %v423 = vlaneseq
    %v424 = vshrl.u32 %v423, 7
    %v425 = vsub.s32 %v422, %v424
    %v426 = vrot.slane %v403, %v425
    %v428 = vunpack.c.l.s4 1983009808
    %v429 = vunpack.c.0.s8 %v428
    %v430 = vlaneseq
    %v431 = vshrl.u32 %v430, 7
    %v432 = vsub.s32 %v429, %v431
    %v433 = vrot.slane %v419, %v432
    %v434 = vcombine.high %v426, %v426
    %v435 = vcombine.high %v433, %v433
    %v436 = vcombine.high %v406, %v406
    %v438 = vunpack.c.l.s4 1983009808
    %v439 = vunpack.c.0.s8 %v438
    %v440 = vlaneseq
    %v441 = vshrl.u32 %v440, 7
    %v442 = vsub.s32 %v439, %v441
    %v443 = vrot.slane %v406, %v442
    %v445 = vunpack.c.l.s4 1983009808
    %v446 = vunpack.c.0.s8 %v445
    %v447 = vlaneseq
    %v448 = vshrl.u32 %v447, 7
    %v449 = vsub.s32 %v446, %v448
    %v450 = vrot.slane %v436, %v449
    %v451 = vcombine.high %v443, %v443
    %v452 = vcombine.high %v450, %v450
    %v454 = vunpack.c.l.s4 1983009808
    %v455 = vunpack.c.0.s8 %v454
    %v456 = vlaneseq
    %v457 = vshrl.u32 %v456, 7
    %v458 = vsub.s32 %v455, %v457
    %v459 = vrot.slane %v411, %v458
    %v460 = vcombine.high %v459, %v459
    %472 = vset.pattern.permute.xlu0 0
    %473 = vperm.xlu0 %472, %v262
    %v474 = vpop.permute.xlu0 %473
    %477 = vset.pattern.permute.xlu0 0
    %478 = vperm.xlu0 %477, %v263
    %v479 = vpop.permute.xlu0 %478
    %482 = vset.pattern.permute.xlu0 0
    %483 = vperm.xlu0 %482, %v264
    %v484 = vpop.permute.xlu0 %483
    %487 = vset.pattern.permute.xlu0 0
    %488 = vperm.xlu0 %487, %v265
    %v489 = vpop.permute.xlu0 %488
    %492 = vset.pattern.permute.xlu0 0
    %493 = vperm.xlu0 %492, %v266
    %v494 = vpop.permute.xlu0 %493
    %497 = vset.pattern.permute.xlu0 0
    %498 = vperm.xlu0 %497, %v267
    %v499 = vpop.permute.xlu0 %498
    %502 = vset.pattern.permute.xlu0 0
    %503 = vperm.xlu0 %502, %v268
    %v504 = vpop.permute.xlu0 %503
    %507 = vset.pattern.permute.xlu0 0
    %508 = vperm.xlu0 %507, %v269
    %v509 = vpop.permute.xlu0 %508
    %512 = vset.pattern.permute.xlu0 0
    %513 = vperm.xlu0 %512, %v270
    %v514 = vpop.permute.xlu0 %513
    %517 = vset.pattern.permute.xlu0 0
    %518 = vperm.xlu0 %517, %v271
    %v519 = vpop.permute.xlu0 %518
    %v521 = vmul.f32 %v474, %v426
    %v522 = vmul.f32 %v479, %v426
    %v523 = vmul.f32 %v484, %v426
    %v524 = vmul.f32 %v489, %v426
    %v525 = vmul.f32 %v494, %v426
    %v526 = vmul.f32 %v499, %v426
    %v527 = vmul.f32 %v504, %v426
    %v528 = vmul.f32 %v509, %v426
    %v529 = vmul.f32 %v514, %v426
    %v530 = vmul.f32 %v519, %v426
    %531 = vset.pattern.permute.xlu0 1
    %532 = vperm.xlu0 %531, %v262
    %v533 = vpop.permute.xlu0 %532
    %535 = vset.pattern.permute.xlu0 1
    %536 = vperm.xlu0 %535, %v263
    %v537 = vpop.permute.xlu0 %536
    %539 = vset.pattern.permute.xlu0 1
    %540 = vperm.xlu0 %539, %v264
    %v541 = vpop.permute.xlu0 %540
    %543 = vset.pattern.permute.xlu0 1
    %544 = vperm.xlu0 %543, %v265
    %v545 = vpop.permute.xlu0 %544
    %547 = vset.pattern.permute.xlu0 1
    %548 = vperm.xlu0 %547, %v266
    %v549 = vpop.permute.xlu0 %548
    %551 = vset.pattern.permute.xlu0 1
    %552 = vperm.xlu0 %551, %v267
    %v553 = vpop.permute.xlu0 %552
    %555 = vset.pattern.permute.xlu0 1
    %556 = vperm.xlu0 %555, %v268
    %v557 = vpop.permute.xlu0 %556
    %559 = vset.pattern.permute.xlu0 1
    %560 = vperm.xlu0 %559, %v269
    %v561 = vpop.permute.xlu0 %560
    %563 = vset.pattern.permute.xlu0 1
    %564 = vperm.xlu0 %563, %v270
    %v565 = vpop.permute.xlu0 %564
    %567 = vset.pattern.permute.xlu0 1
    %568 = vperm.xlu0 %567, %v271
    %v569 = vpop.permute.xlu0 %568
    %v571 = vmul.f32 %v533, %v434
    %v572 = vmul.f32 %v537, %v434
    %v573 = vmul.f32 %v541, %v434
    %v574 = vmul.f32 %v545, %v434
    %v575 = vmul.f32 %v549, %v434
    %v576 = vmul.f32 %v553, %v434
    %v577 = vmul.f32 %v557, %v434
    %v578 = vmul.f32 %v561, %v434
    %v579 = vmul.f32 %v565, %v434
    %v580 = vmul.f32 %v569, %v434
    %v581 = vadd.f32 %v521, %v571
    %v582 = vadd.f32 %v522, %v572
    %v583 = vadd.f32 %v523, %v573
    %v584 = vadd.f32 %v524, %v574
    %v585 = vadd.f32 %v525, %v575
    %v586 = vadd.f32 %v526, %v576
    %v587 = vadd.f32 %v527, %v577
    %v588 = vadd.f32 %v528, %v578
    %v589 = vadd.f32 %v529, %v579
    %v590 = vadd.f32 %v530, %v580
    %591 = vset.pattern.permute.xlu0 2
    %592 = vperm.xlu0 %591, %v262
    %v593 = vpop.permute.xlu0 %592
    %595 = vset.pattern.permute.xlu0 2
    %596 = vperm.xlu0 %595, %v263
    %v597 = vpop.permute.xlu0 %596
    %599 = vset.pattern.permute.xlu0 2
    %600 = vperm.xlu0 %599, %v264
    %v601 = vpop.permute.xlu0 %600
    %603 = vset.pattern.permute.xlu0 2
    %604 = vperm.xlu0 %603, %v265
    %v605 = vpop.permute.xlu0 %604
    %607 = vset.pattern.permute.xlu0 2
    %608 = vperm.xlu0 %607, %v266
    %v609 = vpop.permute.xlu0 %608
    %611 = vset.pattern.permute.xlu0 2
    %612 = vperm.xlu0 %611, %v267
    %v613 = vpop.permute.xlu0 %612
    %615 = vset.pattern.permute.xlu0 2
    %616 = vperm.xlu0 %615, %v268
    %v617 = vpop.permute.xlu0 %616
    %619 = vset.pattern.permute.xlu0 2
    %620 = vperm.xlu0 %619, %v269
    %v621 = vpop.permute.xlu0 %620
    %623 = vset.pattern.permute.xlu0 2
    %624 = vperm.xlu0 %623, %v270
    %v625 = vpop.permute.xlu0 %624
    %627 = vset.pattern.permute.xlu0 2
    %628 = vperm.xlu0 %627, %v271
    %v629 = vpop.permute.xlu0 %628
    %v631 = vmul.f32 %v593, %v433
    %v632 = vmul.f32 %v597, %v433
    %v633 = vmul.f32 %v601, %v433
    %v634 = vmul.f32 %v605, %v433
    %v635 = vmul.f32 %v609, %v433
    %v636 = vmul.f32 %v613, %v433
    %v637 = vmul.f32 %v617, %v433
    %v638 = vmul.f32 %v621, %v433
    %v639 = vmul.f32 %v625, %v433
    %v640 = vmul.f32 %v629, %v433
    %v641 = vadd.f32 %v581, %v631
    %v642 = vadd.f32 %v582, %v632
    %v643 = vadd.f32 %v583, %v633
    %v644 = vadd.f32 %v584, %v634
    %v645 = vadd.f32 %v585, %v635
    %v646 = vadd.f32 %v586, %v636
    %v647 = vadd.f32 %v587, %v637
    %v648 = vadd.f32 %v588, %v638
    %v649 = vadd.f32 %v589, %v639
    %v650 = vadd.f32 %v590, %v640
    %651 = vset.pattern.permute.xlu0 3
    %652 = vperm.xlu0 %651, %v262
    %v653 = vpop.permute.xlu0 %652
    %655 = vset.pattern.permute.xlu0 3
    %656 = vperm.xlu0 %655, %v263
    %v657 = vpop.permute.xlu0 %656
    %659 = vset.pattern.permute.xlu0 3
    %660 = vperm.xlu0 %659, %v264
    %v661 = vpop.permute.xlu0 %660
    %663 = vset.pattern.permute.xlu0 3
    %664 = vperm.xlu0 %663, %v265
    %v665 = vpop.permute.xlu0 %664
    %667 = vset.pattern.permute.xlu0 3
    %668 = vperm.xlu0 %667, %v266
    %v669 = vpop.permute.xlu0 %668
    %671 = vset.pattern.permute.xlu0 3
    %672 = vperm.xlu0 %671, %v267
    %v673 = vpop.permute.xlu0 %672
    %675 = vset.pattern.permute.xlu0 3
    %676 = vperm.xlu0 %675, %v268
    %v677 = vpop.permute.xlu0 %676
    %679 = vset.pattern.permute.xlu0 3
    %680 = vperm.xlu0 %679, %v269
    %v681 = vpop.permute.xlu0 %680
    %683 = vset.pattern.permute.xlu0 3
    %684 = vperm.xlu0 %683, %v270
    %v685 = vpop.permute.xlu0 %684
    %687 = vset.pattern.permute.xlu0 3
    %688 = vperm.xlu0 %687, %v271
    %v689 = vpop.permute.xlu0 %688
    %v691 = vmul.f32 %v653, %v435
    %v692 = vmul.f32 %v657, %v435
    %v693 = vmul.f32 %v661, %v435
    %v694 = vmul.f32 %v665, %v435
    %v695 = vmul.f32 %v669, %v435
    %v696 = vmul.f32 %v673, %v435
    %v697 = vmul.f32 %v677, %v435
    %v698 = vmul.f32 %v681, %v435
    %v699 = vmul.f32 %v685, %v435
    %v700 = vmul.f32 %v689, %v435
    %v701 = vadd.f32 %v641, %v691
    %v702 = vadd.f32 %v642, %v692
    %v703 = vadd.f32 %v643, %v693
    %v704 = vadd.f32 %v644, %v694
    %v705 = vadd.f32 %v645, %v695
    %v706 = vadd.f32 %v646, %v696
    %v707 = vadd.f32 %v647, %v697
    %v708 = vadd.f32 %v648, %v698
    %v709 = vadd.f32 %v649, %v699
    %v710 = vadd.f32 %v650, %v700
    %711 = vset.pattern.permute.xlu0 4
    %712 = vperm.xlu0 %711, %v262
    %v713 = vpop.permute.xlu0 %712
    %715 = vset.pattern.permute.xlu0 4
    %716 = vperm.xlu0 %715, %v263
    %v717 = vpop.permute.xlu0 %716
    %719 = vset.pattern.permute.xlu0 4
    %720 = vperm.xlu0 %719, %v264
    %v721 = vpop.permute.xlu0 %720
    %723 = vset.pattern.permute.xlu0 4
    %724 = vperm.xlu0 %723, %v265
    %v725 = vpop.permute.xlu0 %724
    %727 = vset.pattern.permute.xlu0 4
    %728 = vperm.xlu0 %727, %v266
    %v729 = vpop.permute.xlu0 %728
    %731 = vset.pattern.permute.xlu0 4
    %732 = vperm.xlu0 %731, %v267
    %v733 = vpop.permute.xlu0 %732
    %735 = vset.pattern.permute.xlu0 4
    %736 = vperm.xlu0 %735, %v268
    %v737 = vpop.permute.xlu0 %736
    %739 = vset.pattern.permute.xlu0 4
    %740 = vperm.xlu0 %739, %v269
    %v741 = vpop.permute.xlu0 %740
    %743 = vset.pattern.permute.xlu0 4
    %744 = vperm.xlu0 %743, %v270
    %v745 = vpop.permute.xlu0 %744
    %747 = vset.pattern.permute.xlu0 4
    %748 = vperm.xlu0 %747, %v271
    %v749 = vpop.permute.xlu0 %748
    %v751 = vmul.f32 %v713, %v443
    %v752 = vmul.f32 %v717, %v443
    %v753 = vmul.f32 %v721, %v443
    %v754 = vmul.f32 %v725, %v443
    %v755 = vmul.f32 %v729, %v443
    %v756 = vmul.f32 %v733, %v443
    %v757 = vmul.f32 %v737, %v443
    %v758 = vmul.f32 %v741, %v443
    %v759 = vmul.f32 %v745, %v443
    %v760 = vmul.f32 %v749, %v443
    %v761 = vadd.f32 %v701, %v751
    %v762 = vadd.f32 %v702, %v752
    %v763 = vadd.f32 %v703, %v753
    %v764 = vadd.f32 %v704, %v754
    %v765 = vadd.f32 %v705, %v755
    %v766 = vadd.f32 %v706, %v756
    %v767 = vadd.f32 %v707, %v757
    %v768 = vadd.f32 %v708, %v758
    %v769 = vadd.f32 %v709, %v759
    %v770 = vadd.f32 %v710, %v760
    %771 = vset.pattern.permute.xlu0 5
    %772 = vperm.xlu0 %771, %v262
    %v773 = vpop.permute.xlu0 %772
    %775 = vset.pattern.permute.xlu0 5
    %776 = vperm.xlu0 %775, %v263
    %v777 = vpop.permute.xlu0 %776
    %779 = vset.pattern.permute.xlu0 5
    %780 = vperm.xlu0 %779, %v264
    %v781 = vpop.permute.xlu0 %780
    %783 = vset.pattern.permute.xlu0 5
    %784 = vperm.xlu0 %783, %v265
    %v785 = vpop.permute.xlu0 %784
    %787 = vset.pattern.permute.xlu0 5
    %788 = vperm.xlu0 %787, %v266
    %v789 = vpop.permute.xlu0 %788
    %791 = vset.pattern.permute.xlu0 5
    %792 = vperm.xlu0 %791, %v267
    %v793 = vpop.permute.xlu0 %792
    %795 = vset.pattern.permute.xlu0 5
    %796 = vperm.xlu0 %795, %v268
    %v797 = vpop.permute.xlu0 %796
    %799 = vset.pattern.permute.xlu0 5
    %800 = vperm.xlu0 %799, %v269
    %v801 = vpop.permute.xlu0 %800
    %803 = vset.pattern.permute.xlu0 5
    %804 = vperm.xlu0 %803, %v270
    %v805 = vpop.permute.xlu0 %804
    %807 = vset.pattern.permute.xlu0 5
    %808 = vperm.xlu0 %807, %v271
    %v809 = vpop.permute.xlu0 %808
    %v811 = vmul.f32 %v773, %v451
    %v812 = vmul.f32 %v777, %v451
    %v813 = vmul.f32 %v781, %v451
    %v814 = vmul.f32 %v785, %v451
    %v815 = vmul.f32 %v789, %v451
    %v816 = vmul.f32 %v793, %v451
    %v817 = vmul.f32 %v797, %v451
    %v818 = vmul.f32 %v801, %v451
    %v819 = vmul.f32 %v805, %v451
    %v820 = vmul.f32 %v809, %v451
    %v821 = vadd.f32 %v761, %v811
    %v822 = vadd.f32 %v762, %v812
    %v823 = vadd.f32 %v763, %v813
    %v824 = vadd.f32 %v764, %v814
    %v825 = vadd.f32 %v765, %v815
    %v826 = vadd.f32 %v766, %v816
    %v827 = vadd.f32 %v767, %v817
    %v828 = vadd.f32 %v768, %v818
    %v829 = vadd.f32 %v769, %v819
    %v830 = vadd.f32 %v770, %v820
    %831 = vset.pattern.permute.xlu0 6
    %832 = vperm.xlu0 %831, %v262
    %v833 = vpop.permute.xlu0 %832
    %835 = vset.pattern.permute.xlu0 6
    %836 = vperm.xlu0 %835, %v263
    %v837 = vpop.permute.xlu0 %836
    %839 = vset.pattern.permute.xlu0 6
    %840 = vperm.xlu0 %839, %v264
    %v841 = vpop.permute.xlu0 %840
    %843 = vset.pattern.permute.xlu0 6
    %844 = vperm.xlu0 %843, %v265
    %v845 = vpop.permute.xlu0 %844
    %847 = vset.pattern.permute.xlu0 6
    %848 = vperm.xlu0 %847, %v266
    %v849 = vpop.permute.xlu0 %848
    %851 = vset.pattern.permute.xlu0 6
    %852 = vperm.xlu0 %851, %v267
    %v853 = vpop.permute.xlu0 %852
    %855 = vset.pattern.permute.xlu0 6
    %856 = vperm.xlu0 %855, %v268
    %v857 = vpop.permute.xlu0 %856
    %859 = vset.pattern.permute.xlu0 6
    %860 = vperm.xlu0 %859, %v269
    %v861 = vpop.permute.xlu0 %860
    %863 = vset.pattern.permute.xlu0 6
    %864 = vperm.xlu0 %863, %v270
    %v865 = vpop.permute.xlu0 %864
    %867 = vset.pattern.permute.xlu0 6
    %868 = vperm.xlu0 %867, %v271
    %v869 = vpop.permute.xlu0 %868
    %v871 = vmul.f32 %v833, %v450
    %v872 = vmul.f32 %v837, %v450
    %v873 = vmul.f32 %v841, %v450
    %v874 = vmul.f32 %v845, %v450
    %v875 = vmul.f32 %v849, %v450
    %v876 = vmul.f32 %v853, %v450
    %v877 = vmul.f32 %v857, %v450
    %v878 = vmul.f32 %v861, %v450
    %v879 = vmul.f32 %v865, %v450
    %v880 = vmul.f32 %v869, %v450
    %v881 = vadd.f32 %v821, %v871
    %v882 = vadd.f32 %v822, %v872
    %v883 = vadd.f32 %v823, %v873
    %v884 = vadd.f32 %v824, %v874
    %v885 = vadd.f32 %v825, %v875
    %v886 = vadd.f32 %v826, %v876
    %v887 = vadd.f32 %v827, %v877
    %v888 = vadd.f32 %v828, %v878
    %v889 = vadd.f32 %v829, %v879
    %v890 = vadd.f32 %v830, %v880
    %891 = vset.pattern.permute.xlu0 7
    %892 = vperm.xlu0 %891, %v262
    %v893 = vpop.permute.xlu0 %892
    %895 = vset.pattern.permute.xlu0 7
    %896 = vperm.xlu0 %895, %v263
    %v897 = vpop.permute.xlu0 %896
    %899 = vset.pattern.permute.xlu0 7
    %900 = vperm.xlu0 %899, %v264
    %v901 = vpop.permute.xlu0 %900
    %903 = vset.pattern.permute.xlu0 7
    %904 = vperm.xlu0 %903, %v265
    %v905 = vpop.permute.xlu0 %904
    %907 = vset.pattern.permute.xlu0 7
    %908 = vperm.xlu0 %907, %v266
    %v909 = vpop.permute.xlu0 %908
    %911 = vset.pattern.permute.xlu0 7
    %912 = vperm.xlu0 %911, %v267
    %v913 = vpop.permute.xlu0 %912
    %915 = vset.pattern.permute.xlu0 7
    %916 = vperm.xlu0 %915, %v268
    %v917 = vpop.permute.xlu0 %916
    %919 = vset.pattern.permute.xlu0 7
    %920 = vperm.xlu0 %919, %v269
    %v921 = vpop.permute.xlu0 %920
    %923 = vset.pattern.permute.xlu0 7
    %924 = vperm.xlu0 %923, %v270
    %v925 = vpop.permute.xlu0 %924
    %927 = vset.pattern.permute.xlu0 7
    %928 = vperm.xlu0 %927, %v271
    %v929 = vpop.permute.xlu0 %928
    %v931 = vmul.f32 %v893, %v452
    %v932 = vmul.f32 %v897, %v452
    %v933 = vmul.f32 %v901, %v452
    %v934 = vmul.f32 %v905, %v452
    %v935 = vmul.f32 %v909, %v452
    %v936 = vmul.f32 %v913, %v452
    %v937 = vmul.f32 %v917, %v452
    %v938 = vmul.f32 %v921, %v452
    %v939 = vmul.f32 %v925, %v452
    %v940 = vmul.f32 %v929, %v452
    %v941 = vadd.f32 %v881, %v931
    %v942 = vadd.f32 %v882, %v932
    %v943 = vadd.f32 %v883, %v933
    %v944 = vadd.f32 %v884, %v934
    %v945 = vadd.f32 %v885, %v935
    %v946 = vadd.f32 %v886, %v936
    %v947 = vadd.f32 %v887, %v937
    %v948 = vadd.f32 %v888, %v938
    %v949 = vadd.f32 %v889, %v939
    %v950 = vadd.f32 %v890, %v940
    %951 = vset.pattern.permute.xlu0 8
    %952 = vperm.xlu0 %951, %v262
    %v953 = vpop.permute.xlu0 %952
    %955 = vset.pattern.permute.xlu0 8
    %956 = vperm.xlu0 %955, %v263
    %v957 = vpop.permute.xlu0 %956
    %959 = vset.pattern.permute.xlu0 8
    %960 = vperm.xlu0 %959, %v264
    %v961 = vpop.permute.xlu0 %960
    %963 = vset.pattern.permute.xlu0 8
    %964 = vperm.xlu0 %963, %v265
    %v965 = vpop.permute.xlu0 %964
    %967 = vset.pattern.permute.xlu0 8
    %968 = vperm.xlu0 %967, %v266
    %v969 = vpop.permute.xlu0 %968
    %971 = vset.pattern.permute.xlu0 8
    %972 = vperm.xlu0 %971, %v267
    %v973 = vpop.permute.xlu0 %972
    %975 = vset.pattern.permute.xlu0 8
    %976 = vperm.xlu0 %975, %v268
    %v977 = vpop.permute.xlu0 %976
    %979 = vset.pattern.permute.xlu0 8
    %980 = vperm.xlu0 %979, %v269
    %v981 = vpop.permute.xlu0 %980
    %983 = vset.pattern.permute.xlu0 8
    %984 = vperm.xlu0 %983, %v270
    %v985 = vpop.permute.xlu0 %984
    %987 = vset.pattern.permute.xlu0 8
    %988 = vperm.xlu0 %987, %v271
    %v989 = vpop.permute.xlu0 %988
    %v991 = vmul.f32 %v953, %v459
    %v992 = vmul.f32 %v957, %v459
    %v993 = vmul.f32 %v961, %v459
    %v994 = vmul.f32 %v965, %v459
    %v995 = vmul.f32 %v969, %v459
    %v996 = vmul.f32 %v973, %v459
    %v997 = vmul.f32 %v977, %v459
    %v998 = vmul.f32 %v981, %v459
    %v999 = vmul.f32 %v985, %v459
    %v1000 = vmul.f32 %v989, %v459
    %v1001 = vadd.f32 %v941, %v991
    %v1002 = vadd.f32 %v942, %v992
    %v1003 = vadd.f32 %v943, %v993
    %v1004 = vadd.f32 %v944, %v994
    %v1005 = vadd.f32 %v945, %v995
    %v1006 = vadd.f32 %v946, %v996
    %v1007 = vadd.f32 %v947, %v997
    %v1008 = vadd.f32 %v948, %v998
    %v1009 = vadd.f32 %v949, %v999
    %v1010 = vadd.f32 %v950, %v1000
    %1011 = vset.pattern.permute.xlu0 9
    %1012 = vperm.xlu0 %1011, %v262
    %v1013 = vpop.permute.xlu0 %1012
    %1015 = vset.pattern.permute.xlu0 9
    %1016 = vperm.xlu0 %1015, %v263
    %v1017 = vpop.permute.xlu0 %1016
    %1019 = vset.pattern.permute.xlu0 9
    %1020 = vperm.xlu0 %1019, %v264
    %v1021 = vpop.permute.xlu0 %1020
    %1023 = vset.pattern.permute.xlu0 9
    %1024 = vperm.xlu0 %1023, %v265
    %v1025 = vpop.permute.xlu0 %1024
    %1027 = vset.pattern.permute.xlu0 9
    %1028 = vperm.xlu0 %1027, %v266
    %v1029 = vpop.permute.xlu0 %1028
    %1031 = vset.pattern.permute.xlu0 9
    %1032 = vperm.xlu0 %1031, %v267
    %v1033 = vpop.permute.xlu0 %1032
    %1035 = vset.pattern.permute.xlu0 9
    %1036 = vperm.xlu0 %1035, %v268
    %v1037 = vpop.permute.xlu0 %1036
    %1039 = vset.pattern.permute.xlu0 9
    %1040 = vperm.xlu0 %1039, %v269
    %v1041 = vpop.permute.xlu0 %1040
    %1043 = vset.pattern.permute.xlu0 9
    %1044 = vperm.xlu0 %1043, %v270
    %v1045 = vpop.permute.xlu0 %1044
    %1047 = vset.pattern.permute.xlu0 9
    %1048 = vperm.xlu0 %1047, %v271
    %v1049 = vpop.permute.xlu0 %1048
    %v1051 = vmul.f32 %v1013, %v460
    %v1052 = vmul.f32 %v1017, %v460
    %v1053 = vmul.f32 %v1021, %v460
    %v1054 = vmul.f32 %v1025, %v460
    %v1055 = vmul.f32 %v1029, %v460
    %v1056 = vmul.f32 %v1033, %v460
    %v1057 = vmul.f32 %v1037, %v460
    %v1058 = vmul.f32 %v1041, %v460
    %v1059 = vmul.f32 %v1045, %v460
    %v1060 = vmul.f32 %v1049, %v460
    %v1061 = vadd.f32 %v1001, %v1051
    %v1062 = vadd.f32 %v1002, %v1052
    %v1063 = vadd.f32 %v1003, %v1053
    %v1064 = vadd.f32 %v1004, %v1054
    %v1065 = vadd.f32 %v1005, %v1055
    %v1066 = vadd.f32 %v1006, %v1056
    %v1067 = vadd.f32 %v1007, %v1057
    %v1068 = vadd.f32 %v1008, %v1058
    %v1069 = vadd.f32 %v1009, %v1059
    %v1070 = vadd.f32 %v1010, %v1060
    %v1071 = vld [vmem:[#allocation5] sm:$0x1]
    %v1073 = vlaneseq
    %v1074 = vshrl.u32 %v1073, 7
    %v1075 = vsub.s32 0, %v1074
    %v1076 = vrot.slane %v1071, %v1075
    %v1078 = vadd.f32 %v1061, %v1076
    %v1079 = vadd.f32 %v1062, %v1076
    %v1080 = vadd.f32 %v1063, %v1076
    %v1081 = vadd.f32 %v1064, %v1076
    %v1082 = vadd.f32 %v1065, %v1076
    %v1083 = vadd.f32 %v1066, %v1076
    %v1084 = vadd.f32 %v1067, %v1076
    %v1085 = vadd.f32 %v1068, %v1076
    %v1086 = vadd.f32 %v1069, %v1076
    %v1087 = vadd.f32 %v1070, %v1076
    %v1088 = vmul.f32 %v1078, 0.5
    %v1089 = vmul.f32 %v1079, 0.5
    %v1090 = vmul.f32 %v1080, 0.5
    %v1091 = vmul.f32 %v1081, 0.5
    %v1092 = vmul.f32 %v1082, 0.5
    %v1093 = vmul.f32 %v1083, 0.5
    %v1094 = vmul.f32 %v1084, 0.5
    %v1095 = vmul.f32 %v1085, 0.5
    %v1096 = vmul.f32 %v1086, 0.5
    %v1097 = vmul.f32 %v1087, 0.5
    %v1098 = vmul.f32 %v1078, 0.70710677
    %v1099 = vmul.f32 %v1079, 0.70710677
    %v1100 = vmul.f32 %v1080, 0.70710677
    %v1101 = vmul.f32 %v1081, 0.70710677
    %v1102 = vmul.f32 %v1082, 0.70710677
    %v1103 = vmul.f32 %v1083, 0.70710677
    %v1104 = vmul.f32 %v1084, 0.70710677
    %v1105 = vmul.f32 %v1085, 0.70710677
    %v1106 = vmul.f32 %v1086, 0.70710677
    %v1107 = vmul.f32 %v1087, 0.70710677
    %v1108 = verf.f32.pop %v1098
    %v1109 = verf.f32.pop %v1099
    %v1110 = verf.f32.pop %v1100
    %v1111 = verf.f32.pop %v1101
    %v1112 = verf.f32.pop %v1102
    %v1113 = verf.f32.pop %v1103
    %v1114 = verf.f32.pop %v1104
    %v1115 = verf.f32.pop %v1105
    %v1116 = verf.f32.pop %v1106
    %v1117 = verf.f32.pop %v1107
    %v1118 = vadd.f32 %v1108, 1.0
    %v1119 = vadd.f32 %v1109, 1.0
    %v1120 = vadd.f32 %v1110, 1.0
    %v1121 = vadd.f32 %v1111, 1.0
    %v1122 = vadd.f32 %v1112, 1.0
    %v1123 = vadd.f32 %v1113, 1.0
    %v1124 = vadd.f32 %v1114, 1.0
    %v1125 = vadd.f32 %v1115, 1.0
    %v1126 = vadd.f32 %v1116, 1.0
    %v1127 = vadd.f32 %v1117, 1.0
    %v1128 = vmul.f32 %v1088, %v1118
    %v1129 = vmul.f32 %v1089, %v1119
    %v1130 = vmul.f32 %v1090, %v1120
    %v1131 = vmul.f32 %v1091, %v1121
    %v1132 = vmul.f32 %v1092, %v1122
    %v1133 = vmul.f32 %v1093, %v1123
    %v1134 = vmul.f32 %v1094, %v1124
    %v1135 = vmul.f32 %v1095, %v1125
    %v1136 = vmul.f32 %v1096, %v1126
    %v1137 = vmul.f32 %v1097, %v1127
    %v1148 = vcombine.low %v1128, %v1129
    %v1149 = vcombine.low %v1130, %v1131
    %v1151 = vunpack.c.l.s4 1983009808
    %v1152 = vunpack.c.0.s8 %v1151
    %v1153 = vlaneseq
    %v1154 = vshrl.u32 %v1153, 7
    %v1155 = vsub.s32 %v1152, %v1154
    %v1156 = vrot.slane %v1148, %v1155
    %v1158 = vunpack.c.l.s4 1983009808
    %v1159 = vunpack.c.0.s8 %v1158
    %v1160 = vlaneseq
    %v1161 = vshrl.u32 %v1160, 7
    %v1162 = vsub.s32 %v1159, %v1161
    %v1163 = vrot.slane %v1149, %v1162
    %v1164 = vcombine.low %v1156, %v1163
    %v1165 = vcombine.low %v1132, %v1133
    %v1166 = vcombine.low %v1134, %v1135
    %v1168 = vunpack.c.l.s4 1983009808
    %v1169 = vunpack.c.0.s8 %v1168
    %v1170 = vlaneseq
    %v1171 = vshrl.u32 %v1170, 7
    %v1172 = vsub.s32 %v1169, %v1171
    %v1173 = vrot.slane %v1165, %v1172
    %v1175 = vunpack.c.l.s4 1983009808
    %v1176 = vunpack.c.0.s8 %v1175
    %v1177 = vlaneseq
    %v1178 = vshrl.u32 %v1177, 7
    %v1179 = vsub.s32 %v1176, %v1178
    %v1180 = vrot.slane %v1166, %v1179
    %v1181 = vcombine.low %v1173, %v1180
    %v1182 = vcombine.low %v1136, %v1137
    %v1184 = vunpack.c.l.s4 1983009808
    %v1185 = vunpack.c.0.s8 %v1184
    %v1186 = vlaneseq
    %v1187 = vshrl.u32 %v1186, 7
    %v1188 = vsub.s32 %v1185, %v1187
    %v1189 = vrot.slane %v1182, %v1188
    %v1193 = vpack.c.bf16 %v1181, %v1164
    %v1194 = vpack.c.bf16 %v1189, %v1189
    %v1195 = vld [vmem:[#allocation7] sm:$0xf]
    %v1196 = vld [vmem:[#allocation7 + $0x4] sm:$0xf]
    %v1197 = vld [vmem:[#allocation7 + $0x8] sm:$0xf]
    %v1198 = vld [vmem:[#allocation7 + $0xc] sm:$0xf]
    %v1203 = vunpack.c.l.b16 %v1195
    %v1204 = vunpack.c.l.b16 %v1196
    %v1205 = vunpack.c.l.b16 %v1197
    %v1206 = vunpack.c.l.b16 %v1198
    %v1207 = vpack.c.b16 %v1204, %v1203
    %v1208 = vpack.c.b16 %v1206, %v1205
    %vm1211 = vcmask 261120
    %v1213 = vsel %vm1211, %v1193, 0
    %v1216 = vsel %vm1211, %v1194, 0
    %1218 = vmatprep.subr.bf16.mxu0 0
    %1219 = vmatpush1.bf16.msra.mxu0 %v1207
    %1220 = vmatprep.subr.bf16.mxu0 0
    %1221 = vmatpush1.bf16.msra.mxu0 %v1208
    %1222 = vmatprep.subr.bf16.mxu0 0
    %1223 = vmatpush1.bf16.msra.mxu0 0
    %1224 = vmatprep.subr.bf16.mxu0 0
    %1225 = vmatpush1.bf16.msra.mxu0 0
    %1226 = vmatprep.subr.bf16.mxu0 0
    %1227 = vmatpush1.bf16.msra.mxu0 0
    %1228 = vmatprep.subr.bf16.mxu0 0
    %1229 = vmatpush1.bf16.msra.mxu0 0
    %1230 = vmatprep.subr.bf16.mxu0 0
    %1231 = vmatpush1.bf16.msra.mxu0 0
    %1232 = vmatprep.subr.bf16.mxu0 0
    %1233 = vmatpush1.bf16.msra.mxu0 0
    %1234 = vmatprep.subr.bf16.mxu0 0
    %1235 = vmatpush1.bf16.msra.mxu0 0
    %1236 = vmatprep.subr.bf16.mxu0 0
    %1237 = vmatpush1.bf16.msra.mxu0 0
    %1238 = vmatprep.subr.bf16.mxu0 0
    %1239 = vmatpush1.bf16.msra.mxu0 0
    %1240 = vmatprep.subr.bf16.mxu0 0
    %1241 = vmatpush1.bf16.msra.mxu0 0
    %1242 = vmatprep.subr.bf16.mxu0 0
    %1243 = vmatpush1.bf16.msra.mxu0 0
    %1244 = vmatprep.subr.bf16.mxu0 0
    %1245 = vmatpush1.bf16.msra.mxu0 0
    %1246 = vmatprep.subr.bf16.mxu0 0
    %1247 = vmatpush1.bf16.msra.mxu0 0
    %1248 = vmatprep.subr.bf16.mxu0 0
    %1249 = vmatpush1.bf16.msra.mxu0 0
    %1250 = vmatprep.mubr.bf16.mxu0 0
    %1251 = vmatmul.mubr.bf16.gmra.mrb[0].mxu0 %v1213
    %v1252 = vpop.f32.mrb[0].mxu0
    %v1253 = vadd.f32 0.0, %v1252
    %v1254 = vpop.f32.mrb[0].mxu0
    %v1255 = vpop.f32.mrb[0].mxu0
    %v1256 = vadd.f32 0.0, %v1255
    %v1257 = vpop.f32.mrb[0].mxu0
    %1258 = vmatprep.mubr.bf16.mxu0 0
    %1259 = vmatmul.mubr.bf16.gmra.mrb[0].mxu0 %v1216
    %v1260 = vpop.f32.mrb[0].mxu0
    %v1261 = vadd.f32 0.0, %v1260
    %v1262 = vpop.f32.mrb[0].mxu0
    %v1263 = vpop.f32.mrb[0].mxu0
    %v1264 = vpop.f32.mrb[0].mxu0
    %1265 = vdwg.mxu0
    %v1269 = vcombine.high %v1253, %v1253
    %v1271 = vunpack.c.l.s4 1983009808
    %v1272 = vunpack.c.0.s8 %v1271
    %v1273 = vlaneseq
    %v1274 = vshrl.u32 %v1273, 7
    %v1275 = vsub.s32 %v1272, %v1274
    %v1276 = vrot.slane %v1253, %v1275
    %v1278 = vunpack.c.l.s4 1983009808
    %v1279 = vunpack.c.0.s8 %v1278
    %v1280 = vlaneseq
    %v1281 = vshrl.u32 %v1280, 7
    %v1282 = vsub.s32 %v1279, %v1281
    %v1283 = vrot.slane %v1269, %v1282
    %v1284 = vcombine.high %v1276, %v1276
    %v1285 = vcombine.high %v1283, %v1283
    %v1286 = vcombine.high %v1256, %v1256
    %v1288 = vunpack.c.l.s4 1983009808
    %v1289 = vunpack.c.0.s8 %v1288
    %v1290 = vlaneseq
    %v1291 = vshrl.u32 %v1290, 7
    %v1292 = vsub.s32 %v1289, %v1291
    %v1293 = vrot.slane %v1256, %v1292
    %v1295 = vunpack.c.l.s4 1983009808
    %v1296 = vunpack.c.0.s8 %v1295
    %v1297 = vlaneseq
    %v1298 = vshrl.u32 %v1297, 7
    %v1299 = vsub.s32 %v1296, %v1298
    %v1300 = vrot.slane %v1286, %v1299
    %v1301 = vcombine.high %v1293, %v1293
    %v1302 = vcombine.high %v1300, %v1300
    %v1304 = vunpack.c.l.s4 1983009808
    %v1305 = vunpack.c.0.s8 %v1304
    %v1306 = vlaneseq
    %v1307 = vshrl.u32 %v1306, 7
    %v1308 = vsub.s32 %v1305, %v1307
    %v1309 = vrot.slane %v1261, %v1308
    %v1310 = vcombine.high %v1309, %v1309
    %v1321 = vmul.f32 %v474, %v1276
    %v1322 = vmul.f32 %v479, %v1276
    %v1323 = vmul.f32 %v484, %v1276
    %v1324 = vmul.f32 %v489, %v1276
    %v1325 = vmul.f32 %v494, %v1276
    %v1326 = vmul.f32 %v499, %v1276
    %v1327 = vmul.f32 %v504, %v1276
    %v1328 = vmul.f32 %v509, %v1276
    %v1329 = vmul.f32 %v514, %v1276
    %v1330 = vmul.f32 %v519, %v1276
    %v1331 = vmul.f32 %v533, %v1284
    %v1332 = vmul.f32 %v537, %v1284
    %v1333 = vmul.f32 %v541, %v1284
    %v1334 = vmul.f32 %v545, %v1284
    %v1335 = vmul.f32 %v549, %v1284
    %v1336 = vmul.f32 %v553, %v1284
    %v1337 = vmul.f32 %v557, %v1284
    %v1338 = vmul.f32 %v561, %v1284
    %v1339 = vmul.f32 %v565, %v1284
    %v1340 = vmul.f32 %v569, %v1284
    %v1341 = vadd.f32 %v1321, %v1331
    %v1342 = vadd.f32 %v1322, %v1332
    %v1343 = vadd.f32 %v1323, %v1333
    %v1344 = vadd.f32 %v1324, %v1334
    %v1345 = vadd.f32 %v1325, %v1335
    %v1346 = vadd.f32 %v1326, %v1336
    %v1347 = vadd.f32 %v1327, %v1337
    %v1348 = vadd.f32 %v1328, %v1338
    %v1349 = vadd.f32 %v1329, %v1339
    %v1350 = vadd.f32 %v1330, %v1340
    %v1351 = vmul.f32 %v593, %v1283
    %v1352 = vmul.f32 %v597, %v1283
    %v1353 = vmul.f32 %v601, %v1283
    %v1354 = vmul.f32 %v605, %v1283
    %v1355 = vmul.f32 %v609, %v1283
    %v1356 = vmul.f32 %v613, %v1283
    %v1357 = vmul.f32 %v617, %v1283
    %v1358 = vmul.f32 %v621, %v1283
    %v1359 = vmul.f32 %v625, %v1283
    %v1360 = vmul.f32 %v629, %v1283
    %v1361 = vadd.f32 %v1341, %v1351
    %v1362 = vadd.f32 %v1342, %v1352
    %v1363 = vadd.f32 %v1343, %v1353
    %v1364 = vadd.f32 %v1344, %v1354
    %v1365 = vadd.f32 %v1345, %v1355
    %v1366 = vadd.f32 %v1346, %v1356
    %v1367 = vadd.f32 %v1347, %v1357
    %v1368 = vadd.f32 %v1348, %v1358
    %v1369 = vadd.f32 %v1349, %v1359
    %v1370 = vadd.f32 %v1350, %v1360
    %v1371 = vmul.f32 %v653, %v1285
    %v1372 = vmul.f32 %v657, %v1285
    %v1373 = vmul.f32 %v661, %v1285
    %v1374 = vmul.f32 %v665, %v1285
    %v1375 = vmul.f32 %v669, %v1285
    %v1376 = vmul.f32 %v673, %v1285
    %v1377 = vmul.f32 %v677, %v1285
    %v1378 = vmul.f32 %v681, %v1285
    %v1379 = vmul.f32 %v685, %v1285
    %v1380 = vmul.f32 %v689, %v1285
    %v1381 = vadd.f32 %v1361, %v1371
    %v1382 = vadd.f32 %v1362, %v1372
    %v1383 = vadd.f32 %v1363, %v1373
    %v1384 = vadd.f32 %v1364, %v1374
    %v1385 = vadd.f32 %v1365, %v1375
    %v1386 = vadd.f32 %v1366, %v1376
    %v1387 = vadd.f32 %v1367, %v1377
    %v1388 = vadd.f32 %v1368, %v1378
    %v1389 = vadd.f32 %v1369, %v1379
    %v1390 = vadd.f32 %v1370, %v1380
    %v1391 = vmul.f32 %v713, %v1293
    %v1392 = vmul.f32 %v717, %v1293
    %v1393 = vmul.f32 %v721, %v1293
    %v1394 = vmul.f32 %v725, %v1293
    %v1395 = vmul.f32 %v729, %v1293
    %v1396 = vmul.f32 %v733, %v1293
    %v1397 = vmul.f32 %v737, %v1293
    %v1398 = vmul.f32 %v741, %v1293
    %v1399 = vmul.f32 %v745, %v1293
    %v1400 = vmul.f32 %v749, %v1293
    %v1401 = vadd.f32 %v1381, %v1391
    %v1402 = vadd.f32 %v1382, %v1392
    %v1403 = vadd.f32 %v1383, %v1393
    %v1404 = vadd.f32 %v1384, %v1394
    %v1405 = vadd.f32 %v1385, %v1395
    %v1406 = vadd.f32 %v1386, %v1396
    %v1407 = vadd.f32 %v1387, %v1397
    %v1408 = vadd.f32 %v1388, %v1398
    %v1409 = vadd.f32 %v1389, %v1399
    %v1410 = vadd.f32 %v1390, %v1400
    %v1411 = vmul.f32 %v773, %v1301
    %v1412 = vmul.f32 %v777, %v1301
    %v1413 = vmul.f32 %v781, %v1301
    %v1414 = vmul.f32 %v785, %v1301
    %v1415 = vmul.f32 %v789, %v1301
    %v1416 = vmul.f32 %v793, %v1301
    %v1417 = vmul.f32 %v797, %v1301
    %v1418 = vmul.f32 %v801, %v1301
    %v1419 = vmul.f32 %v805, %v1301
    %v1420 = vmul.f32 %v809, %v1301
    %v1421 = vadd.f32 %v1401, %v1411
    %v1422 = vadd.f32 %v1402, %v1412
    %v1423 = vadd.f32 %v1403, %v1413
    %v1424 = vadd.f32 %v1404, %v1414
    %v1425 = vadd.f32 %v1405, %v1415
    %v1426 = vadd.f32 %v1406, %v1416
    %v1427 = vadd.f32 %v1407, %v1417
    %v1428 = vadd.f32 %v1408, %v1418
    %v1429 = vadd.f32 %v1409, %v1419
    %v1430 = vadd.f32 %v1410, %v1420
    %v1431 = vmul.f32 %v833, %v1300
    %v1432 = vmul.f32 %v837, %v1300
    %v1433 = vmul.f32 %v841, %v1300
    %v1434 = vmul.f32 %v845, %v1300
    %v1435 = vmul.f32 %v849, %v1300
    %v1436 = vmul.f32 %v853, %v1300
    %v1437 = vmul.f32 %v857, %v1300
    %v1438 = vmul.f32 %v861, %v1300
    %v1439 = vmul.f32 %v865, %v1300
    %v1440 = vmul.f32 %v869, %v1300
    %v1441 = vadd.f32 %v1421, %v1431
    %v1442 = vadd.f32 %v1422, %v1432
    %v1443 = vadd.f32 %v1423, %v1433
    %v1444 = vadd.f32 %v1424, %v1434
    %v1445 = vadd.f32 %v1425, %v1435
    %v1446 = vadd.f32 %v1426, %v1436
    %v1447 = vadd.f32 %v1427, %v1437
    %v1448 = vadd.f32 %v1428, %v1438
    %v1449 = vadd.f32 %v1429, %v1439
    %v1450 = vadd.f32 %v1430, %v1440
    %v1451 = vmul.f32 %v893, %v1302
    %v1452 = vmul.f32 %v897, %v1302
    %v1453 = vmul.f32 %v901, %v1302
    %v1454 = vmul.f32 %v905, %v1302
    %v1455 = vmul.f32 %v909, %v1302
    %v1456 = vmul.f32 %v913, %v1302
    %v1457 = vmul.f32 %v917, %v1302
    %v1458 = vmul.f32 %v921, %v1302
    %v1459 = vmul.f32 %v925, %v1302
    %v1460 = vmul.f32 %v929, %v1302
    %v1461 = vadd.f32 %v1441, %v1451
    %v1462 = vadd.f32 %v1442, %v1452
    %v1463 = vadd.f32 %v1443, %v1453
    %v1464 = vadd.f32 %v1444, %v1454
    %v1465 = vadd.f32 %v1445, %v1455
    %v1466 = vadd.f32 %v1446, %v1456
    %v1467 = vadd.f32 %v1447, %v1457
    %v1468 = vadd.f32 %v1448, %v1458
    %v1469 = vadd.f32 %v1449, %v1459
    %v1470 = vadd.f32 %v1450, %v1460
    %v1471 = vmul.f32 %v953, %v1309
    %v1472 = vmul.f32 %v957, %v1309
    %v1473 = vmul.f32 %v961, %v1309
    %v1474 = vmul.f32 %v965, %v1309
    %v1475 = vmul.f32 %v969, %v1309
    %v1476 = vmul.f32 %v973, %v1309
    %v1477 = vmul.f32 %v977, %v1309
    %v1478 = vmul.f32 %v981, %v1309
    %v1479 = vmul.f32 %v985, %v1309
    %v1480 = vmul.f32 %v989, %v1309
    %v1481 = vadd.f32 %v1461, %v1471
    %v1482 = vadd.f32 %v1462, %v1472
    %v1483 = vadd.f32 %v1463, %v1473
    %v1484 = vadd.f32 %v1464, %v1474
    %v1485 = vadd.f32 %v1465, %v1475
    %v1486 = vadd.f32 %v1466, %v1476
    %v1487 = vadd.f32 %v1467, %v1477
    %v1488 = vadd.f32 %v1468, %v1478
    %v1489 = vadd.f32 %v1469, %v1479
    %v1490 = vadd.f32 %v1470, %v1480
    %v1491 = vmul.f32 %v1013, %v1310
    %v1492 = vmul.f32 %v1017, %v1310
    %v1493 = vmul.f32 %v1021, %v1310
    %v1494 = vmul.f32 %v1025, %v1310
    %v1495 = vmul.f32 %v1029, %v1310
    %v1496 = vmul.f32 %v1033, %v1310
    %v1497 = vmul.f32 %v1037, %v1310
    %v1498 = vmul.f32 %v1041, %v1310
    %v1499 = vmul.f32 %v1045, %v1310
    %v1500 = vmul.f32 %v1049, %v1310
    %v1501 = vadd.f32 %v1481, %v1491
    %v1502 = vadd.f32 %v1482, %v1492
    %v1503 = vadd.f32 %v1483, %v1493
    %v1504 = vadd.f32 %v1484, %v1494
    %v1505 = vadd.f32 %v1485, %v1495
    %v1506 = vadd.f32 %v1486, %v1496
    %v1507 = vadd.f32 %v1487, %v1497
    %v1508 = vadd.f32 %v1488, %v1498
    %v1509 = vadd.f32 %v1489, %v1499
    %v1510 = vadd.f32 %v1490, %v1500
    %v1511 = vld [vmem:[#allocation8] sm:$0x1]
    %v1513 = vlaneseq
    %v1514 = vshrl.u32 %v1513, 7
    %v1515 = vsub.s32 0, %v1514
    %v1516 = vrot.slane %v1511, %v1515
    %v1518 = vadd.f32 %v1501, %v1516
    %v1519 = vadd.f32 %v1502, %v1516
    %v1520 = vadd.f32 %v1503, %v1516
    %v1521 = vadd.f32 %v1504, %v1516
    %v1522 = vadd.f32 %v1505, %v1516
    %v1523 = vadd.f32 %v1506, %v1516
    %v1524 = vadd.f32 %v1507, %v1516
    %v1525 = vadd.f32 %v1508, %v1516
    %v1526 = vadd.f32 %v1509, %v1516
    %v1527 = vadd.f32 %v1510, %v1516
    %v1528 = vmul.f32 %v1518, 0.5
    %v1529 = vmul.f32 %v1519, 0.5
    %v1530 = vmul.f32 %v1520, 0.5
    %v1531 = vmul.f32 %v1521, 0.5
    %v1532 = vmul.f32 %v1522, 0.5
    %v1533 = vmul.f32 %v1523, 0.5
    %v1534 = vmul.f32 %v1524, 0.5
    %v1535 = vmul.f32 %v1525, 0.5
    %v1536 = vmul.f32 %v1526, 0.5
    %v1537 = vmul.f32 %v1527, 0.5
    %v1538 = vmul.f32 %v1518, 0.70710677
    %v1539 = vmul.f32 %v1519, 0.70710677
    %v1540 = vmul.f32 %v1520, 0.70710677
    %v1541 = vmul.f32 %v1521, 0.70710677
    %v1542 = vmul.f32 %v1522, 0.70710677
    %v1543 = vmul.f32 %v1523, 0.70710677
    %v1544 = vmul.f32 %v1524, 0.70710677
    %v1545 = vmul.f32 %v1525, 0.70710677
    %v1546 = vmul.f32 %v1526, 0.70710677
    %v1547 = vmul.f32 %v1527, 0.70710677
    %v1548 = verf.f32.pop %v1538
    %v1549 = verf.f32.pop %v1539
    %v1550 = verf.f32.pop %v1540
    %v1551 = verf.f32.pop %v1541
    %v1552 = verf.f32.pop %v1542
    %v1553 = verf.f32.pop %v1543
    %v1554 = verf.f32.pop %v1544
    %v1555 = verf.f32.pop %v1545
    %v1556 = verf.f32.pop %v1546
    %v1557 = verf.f32.pop %v1547
    %v1558 = vadd.f32 %v1548, 1.0
    %v1559 = vadd.f32 %v1549, 1.0
    %v1560 = vadd.f32 %v1550, 1.0
    %v1561 = vadd.f32 %v1551, 1.0
    %v1562 = vadd.f32 %v1552, 1.0
    %v1563 = vadd.f32 %v1553, 1.0
    %v1564 = vadd.f32 %v1554, 1.0
    %v1565 = vadd.f32 %v1555, 1.0
    %v1566 = vadd.f32 %v1556, 1.0
    %v1567 = vadd.f32 %v1557, 1.0
    %v1568 = vmul.f32 %v1528, %v1558
    %v1569 = vmul.f32 %v1529, %v1559
    %v1570 = vmul.f32 %v1530, %v1560
    %v1571 = vmul.f32 %v1531, %v1561
    %v1572 = vmul.f32 %v1532, %v1562
    %v1573 = vmul.f32 %v1533, %v1563
    %v1574 = vmul.f32 %v1534, %v1564
    %v1575 = vmul.f32 %v1535, %v1565
    %v1576 = vmul.f32 %v1536, %v1566
    %v1577 = vmul.f32 %v1537, %v1567
    %v1578 = vld [vmem:[#allocation10] sm:$0x1]
    %v1579 = vpack.c.bf16 %v1568, %v1568
    %v1580 = vld [vmem:[%s8] sm:$0xf]
    %v1581 = vld [vmem:[%s8 + $0x4] sm:$0xf]
    %v1582 = vld [vmem:[%s8 + $0x8] sm:$0xf]
    %v1583 = vld [vmem:[%s8 + $0xc] sm:$0xf]
    %v1584 = vld [vmem:[%s8 + $0x10] sm:$0xf]
    %v1585 = vld [vmem:[%s8 + $0x14] sm:$0xf]
    %v1586 = vld [vmem:[%s8 + $0x18] sm:$0xf]
    %v1587 = vld [vmem:[%s8 + $0x1c] sm:$0xf]
    %v1596 = vunpack.c.l.b16 %v1580
    %v1597 = vunpack.c.l.b16 %v1581
    %v1598 = vunpack.c.l.b16 %v1582
    %v1599 = vunpack.c.l.b16 %v1583
    %v1600 = vunpack.c.l.b16 %v1584
    %v1601 = vunpack.c.l.b16 %v1585
    %v1602 = vunpack.c.l.b16 %v1586
    %v1603 = vunpack.c.l.b16 %v1587
    %v1604 = vpack.c.b16 %v1597, %v1596
    %v1605 = vpack.c.b16 %v1599, %v1598
    %v1606 = vpack.c.b16 %v1601, %v1600
    %v1607 = vpack.c.b16 %v1603, %v1602
    %vm1612 = vcmask 523264
    %v1614 = vsel %vm1612, %v1579, 0
    %1616 = vmatprep.subr.bf16.mxu0 0
    %1617 = vmatpush1.bf16.msra.mxu0 %v1604
    %1618 = vmatprep.subr.bf16.mxu0 0
    %1619 = vmatpush1.bf16.msra.mxu0 %v1605
    %1620 = vmatprep.subr.bf16.mxu0 0
    %1621 = vmatpush1.bf16.msra.mxu0 %v1606
    %1622 = vmatprep.subr.bf16.mxu0 0
    %1623 = vmatpush1.bf16.msra.mxu0 %v1607
    %1624 = vmatprep.subr.bf16.mxu0 0
    %1625 = vmatpush1.bf16.msra.mxu0 0
    %1626 = vmatprep.subr.bf16.mxu0 0
    %1627 = vmatpush1.bf16.msra.mxu0 0
    %1628 = vmatprep.subr.bf16.mxu0 0
    %1629 = vmatpush1.bf16.msra.mxu0 0
    %1630 = vmatprep.subr.bf16.mxu0 0
    %1631 = vmatpush1.bf16.msra.mxu0 0
    %1632 = vmatprep.subr.bf16.mxu0 0
    %1633 = vmatpush1.bf16.msra.mxu0 0
    %1634 = vmatprep.subr.bf16.mxu0 0
    %1635 = vmatpush1.bf16.msra.mxu0 0
    %1636 = vmatprep.subr.bf16.mxu0 0
    %1637 = vmatpush1.bf16.msra.mxu0 0
    %1638 = vmatprep.subr.bf16.mxu0 0
    %1639 = vmatpush1.bf16.msra.mxu0 0
    %1640 = vmatprep.subr.bf16.mxu0 0
    %1641 = vmatpush1.bf16.msra.mxu0 0
    %1642 = vmatprep.subr.bf16.mxu0 0
    %1643 = vmatpush1.bf16.msra.mxu0 0
    %1644 = vmatprep.subr.bf16.mxu0 0
    %1645 = vmatpush1.bf16.msra.mxu0 0
    %1646 = vmatprep.subr.bf16.mxu0 0
    %1647 = vmatpush1.bf16.msra.mxu0 0
    %1648 = vmatprep.mubr.bf16.mxu0 0
    %1649 = vmatmul.mubr.bf16.gmra.mrb[0].mxu0 %v1614
    %v1650 = vpop.f32.mrb[0].mxu0
    %v1651 = vadd.f32 0.0, %v1650
    %v1652 = vpop.f32.mrb[0].mxu0
    %v1653 = vpop.f32.mrb[0].mxu0
    %v1654 = vpop.f32.mrb[0].mxu0
    %1655 = vdwg.mxu0
    %v1657 = vlaneseq
    %v1658 = vshrl.u32 %v1657, 7
    %v1659 = vsub.s32 0, %v1658
    %v1660 = vrot.slane %v1578, %v1659
    %v1662 = vadd.f32 %v1660, %v1651
    %v1663 = vpack.c.bf16 %v1569, %v1569
    %s1664 = scalar_lea.vmem %s8, 32
    %v1665 = vld [vmem:[%s1664] sm:$0xf]
    %v1666 = vld [vmem:[%s1664 + $0x4] sm:$0xf]
    %v1667 = vld [vmem:[%s1664 + $0x8] sm:$0xf]
    %v1668 = vld [vmem:[%s1664 + $0xc] sm:$0xf]
    %v1669 = vld [vmem:[%s1664 + $0x10] sm:$0xf]
    %v1670 = vld [vmem:[%s1664 + $0x14] sm:$0xf]
    %v1671 = vld [vmem:[%s1664 + $0x18] sm:$0xf]
    %v1672 = vld [vmem:[%s1664 + $0x1c] sm:$0xf]
    %v1681 = vunpack.c.l.b16 %v1665
    %v1682 = vunpack.c.l.b16 %v1666
    %v1683 = vunpack.c.l.b16 %v1667
    %v1684 = vunpack.c.l.b16 %v1668
    %v1685 = vunpack.c.l.b16 %v1669
    %v1686 = vunpack.c.l.b16 %v1670
    %v1687 = vunpack.c.l.b16 %v1671
    %v1688 = vunpack.c.l.b16 %v1672
    %v1689 = vpack.c.b16 %v1682, %v1681
    %v1690 = vpack.c.b16 %v1684, %v1683
    %v1691 = vpack.c.b16 %v1686, %v1685
    %v1692 = vpack.c.b16 %v1688, %v1687
    %v1698 = vsel %vm1612, %v1663, 0
    %1700 = vmatprep.subr.bf16.mxu0 0
    %1701 = vmatpush1.bf16.msra.mxu0 %v1689
    %1702 = vmatprep.subr.bf16.mxu0 0
    %1703 = vmatpush1.bf16.msra.mxu0 %v1690
    %1704 = vmatprep.subr.bf16.mxu0 0
    %1705 = vmatpush1.bf16.msra.mxu0 %v1691
    %1706 = vmatprep.subr.bf16.mxu0 0
    %1707 = vmatpush1.bf16.msra.mxu0 %v1692
    %1708 = vmatprep.subr.bf16.mxu0 0
    %1709 = vmatpush1.bf16.msra.mxu0 0
    %1710 = vmatprep.subr.bf16.mxu0 0
    %1711 = vmatpush1.bf16.msra.mxu0 0
    %1712 = vmatprep.subr.bf16.mxu0 0
    %1713 = vmatpush1.bf16.msra.mxu0 0
    %1714 = vmatprep.subr.bf16.mxu0 0
    %1715 = vmatpush1.bf16.msra.mxu0 0
    %1716 = vmatprep.subr.bf16.mxu0 0
    %1717 = vmatpush1.bf16.msra.mxu0 0
    %1718 = vmatprep.subr.bf16.mxu0 0
    %1719 = vmatpush1.bf16.msra.mxu0 0
    %1720 = vmatprep.subr.bf16.mxu0 0
    %1721 = vmatpush1.bf16.msra.mxu0 0
    %1722 = vmatprep.subr.bf16.mxu0 0
    %1723 = vmatpush1.bf16.msra.mxu0 0
    %1724 = vmatprep.subr.bf16.mxu0 0
    %1725 = vmatpush1.bf16.msra.mxu0 0
    %1726 = vmatprep.subr.bf16.mxu0 0
    %1727 = vmatpush1.bf16.msra.mxu0 0
    %1728 = vmatprep.subr.bf16.mxu0 0
    %1729 = vmatpush1.bf16.msra.mxu0 0
    %1730 = vmatprep.subr.bf16.mxu0 0
    %1731 = vmatpush1.bf16.msra.mxu0 0
    %1732 = vmatprep.mubr.bf16.mxu0 0
    %1733 = vmatmul.mubr.bf16.gmra.mrb[0].mxu0 %v1698
    %v1734 = vpop.f32.mrb[0].mxu0
    %v1735 = vadd.f32 0.0, %v1734
    %v1736 = vpop.f32.mrb[0].mxu0
    %v1737 = vpop.f32.mrb[0].mxu0
    %v1738 = vpop.f32.mrb[0].mxu0
    %1739 = vdwg.mxu0
    %v1740 = vadd.f32 %v1662, %v1735
    %v1741 = vpack.c.bf16 %v1570, %v1570
    %s1742 = scalar_lea.vmem %s8, 64
    %v1743 = vld [vmem:[%s1742] sm:$0xf]
    %v1744 = vld [vmem:[%s1742 + $0x4] sm:$0xf]
    %v1745 = vld [vmem:[%s1742 + $0x8] sm:$0xf]
    %v1746 = vld [vmem:[%s1742 + $0xc] sm:$0xf]
    %v1747 = vld [vmem:[%s1742 + $0x10] sm:$0xf]
    %v1748 = vld [vmem:[%s1742 + $0x14] sm:$0xf]
    %v1749 = vld [vmem:[%s1742 + $0x18] sm:$0xf]
    %v1750 = vld [vmem:[%s1742 + $0x1c] sm:$0xf]
    %v1759 = vunpack.c.l.b16 %v1743
    %v1760 = vunpack.c.l.b16 %v1744
    %v1761 = vunpack.c.l.b16 %v1745
    %v1762 = vunpack.c.l.b16 %v1746
    %v1763 = vunpack.c.l.b16 %v1747
    %v1764 = vunpack.c.l.b16 %v1748
    %v1765 = vunpack.c.l.b16 %v1749
    %v1766 = vunpack.c.l.b16 %v1750
    %v1767 = vpack.c.b16 %v1760, %v1759
    %v1768 = vpack.c.b16 %v1762, %v1761
    %v1769 = vpack.c.b16 %v1764, %v1763
    %v1770 = vpack.c.b16 %v1766, %v1765
    %v1776 = vsel %vm1612, %v1741, 0
    %1778 = vmatprep.subr.bf16.mxu0 0
    %1779 = vmatpush1.bf16.msra.mxu0 %v1767
    %1780 = vmatprep.subr.bf16.mxu0 0
    %1781 = vmatpush1.bf16.msra.mxu0 %v1768
    %1782 = vmatprep.subr.bf16.mxu0 0
    %1783 = vmatpush1.bf16.msra.mxu0 %v1769
    %1784 = vmatprep.subr.bf16.mxu0 0
    %1785 = vmatpush1.bf16.msra.mxu0 %v1770
    %1786 = vmatprep.subr.bf16.mxu0 0
    %1787 = vmatpush1.bf16.msra.mxu0 0
    %1788 = vmatprep.subr.bf16.mxu0 0
    %1789 = vmatpush1.bf16.msra.mxu0 0
    %1790 = vmatprep.subr.bf16.mxu0 0
    %1791 = vmatpush1.bf16.msra.mxu0 0
    %1792 = vmatprep.subr.bf16.mxu0 0
    %1793 = vmatpush1.bf16.msra.mxu0 0
    %1794 = vmatprep.subr.bf16.mxu0 0
    %1795 = vmatpush1.bf16.msra.mxu0 0
    %1796 = vmatprep.subr.bf16.mxu0 0
    %1797 = vmatpush1.bf16.msra.mxu0 0
    %1798 = vmatprep.subr.bf16.mxu0 0
    %1799 = vmatpush1.bf16.msra.mxu0 0
    %1800 = vmatprep.subr.bf16.mxu0 0
    %1801 = vmatpush1.bf16.msra.mxu0 0
    %1802 = vmatprep.subr.bf16.mxu0 0
    %1803 = vmatpush1.bf16.msra.mxu0 0
    %1804 = vmatprep.subr.bf16.mxu0 0
    %1805 = vmatpush1.bf16.msra.mxu0 0
    %1806 = vmatprep.subr.bf16.mxu0 0
    %1807 = vmatpush1.bf16.msra.mxu0 0
    %1808 = vmatprep.subr.bf16.mxu0 0
    %1809 = vmatpush1.bf16.msra.mxu0 0
    %1810 = vmatprep.mubr.bf16.mxu0 0
    %1811 = vmatmul.mubr.bf16.gmra.mrb[0].mxu0 %v1776
    %v1812 = vpop.f32.mrb[0].mxu0
    %v1813 = vadd.f32 0.0, %v1812
    %v1814 = vpop.f32.mrb[0].mxu0
    %v1815 = vpop.f32.mrb[0].mxu0
    %v1816 = vpop.f32.mrb[0].mxu0
    %1817 = vdwg.mxu0
    %v1818 = vadd.f32 %v1740, %v1813
    %v1819 = vpack.c.bf16 %v1571, %v1571
    %s1820 = scalar_lea.vmem %s8, 96
    %v1821 = vld [vmem:[%s1820] sm:$0xf]
    %v1822 = vld [vmem:[%s1820 + $0x4] sm:$0xf]
    %v1823 = vld [vmem:[%s1820 + $0x8] sm:$0xf]
    %v1824 = vld [vmem:[%s1820 + $0xc] sm:$0xf]
    %v1825 = vld [vmem:[%s1820 + $0x10] sm:$0xf]
    %v1826 = vld [vmem:[%s1820 + $0x14] sm:$0xf]
    %v1827 = vld [vmem:[%s1820 + $0x18] sm:$0xf]
    %v1828 = vld [vmem:[%s1820 + $0x1c] sm:$0xf]
    %v1837 = vunpack.c.l.b16 %v1821
    %v1838 = vunpack.c.l.b16 %v1822
    %v1839 = vunpack.c.l.b16 %v1823
    %v1840 = vunpack.c.l.b16 %v1824
    %v1841 = vunpack.c.l.b16 %v1825
    %v1842 = vunpack.c.l.b16 %v1826
    %v1843 = vunpack.c.l.b16 %v1827
    %v1844 = vunpack.c.l.b16 %v1828
    %v1845 = vpack.c.b16 %v1838, %v1837
    %v1846 = vpack.c.b16 %v1840, %v1839
    %v1847 = vpack.c.b16 %v1842, %v1841
    %v1848 = vpack.c.b16 %v1844, %v1843
    %v1854 = vsel %vm1612, %v1819, 0
    %1856 = vmatprep.subr.bf16.mxu0 0
    %1857 = vmatpush1.bf16.msra.mxu0 %v1845
    %1858 = vmatprep.subr.bf16.mxu0 0
    %1859 = vmatpush1.bf16.msra.mxu0 %v1846
    %1860 = vmatprep.subr.bf16.mxu0 0
    %1861 = vmatpush1.bf16.msra.mxu0 %v1847
    %1862 = vmatprep.subr.bf16.mxu0 0
    %1863 = vmatpush1.bf16.msra.mxu0 %v1848
    %1864 = vmatprep.subr.bf16.mxu0 0
    %1865 = vmatpush1.bf16.msra.mxu0 0
    %1866 = vmatprep.subr.bf16.mxu0 0
    %1867 = vmatpush1.bf16.msra.mxu0 0
    %1868 = vmatprep.subr.bf16.mxu0 0
    %1869 = vmatpush1.bf16.msra.mxu0 0
    %1870 = vmatprep.subr.bf16.mxu0 0
    %1871 = vmatpush1.bf16.msra.mxu0 0
    %1872 = vmatprep.subr.bf16.mxu0 0
    %1873 = vmatpush1.bf16.msra.mxu0 0
    %1874 = vmatprep.subr.bf16.mxu0 0
    %1875 = vmatpush1.bf16.msra.mxu0 0
    %1876 = vmatprep.subr.bf16.mxu0 0
    %1877 = vmatpush1.bf16.msra.mxu0 0
    %1878 = vmatprep.subr.bf16.mxu0 0
    %1879 = vmatpush1.bf16.msra.mxu0 0
    %1880 = vmatprep.subr.bf16.mxu0 0
    %1881 = vmatpush1.bf16.msra.mxu0 0
    %1882 = vmatprep.subr.bf16.mxu0 0
    %1883 = vmatpush1.bf16.msra.mxu0 0
    %1884 = vmatprep.subr.bf16.mxu0 0
    %1885 = vmatpush1.bf16.msra.mxu0 0
    %1886 = vmatprep.subr.bf16.mxu0 0
    %1887 = vmatpush1.bf16.msra.mxu0 0
    %1888 = vmatprep.mubr.bf16.mxu0 0
    %1889 = vmatmul.mubr.bf16.gmra.mrb[0].mxu0 %v1854
    %v1890 = vpop.f32.mrb[0].mxu0
    %v1891 = vadd.f32 0.0, %v1890
    %v1892 = vpop.f32.mrb[0].mxu0
    %v1893 = vpop.f32.mrb[0].mxu0
    %v1894 = vpop.f32.mrb[0].mxu0
    %1895 = vdwg.mxu0
    %v1896 = vadd.f32 %v1818, %v1891
    %v1897 = vpack.c.bf16 %v1572, %v1572
    %s1898 = scalar_lea.vmem %s8, 128
    %v1899 = vld [vmem:[%s1898] sm:$0xf]
    %v1900 = vld [vmem:[%s1898 + $0x4] sm:$0xf]
    %v1901 = vld [vmem:[%s1898 + $0x8] sm:$0xf]
    %v1902 = vld [vmem:[%s1898 + $0xc] sm:$0xf]
    %v1903 = vld [vmem:[%s1898 + $0x10] sm:$0xf]
    %v1904 = vld [vmem:[%s1898 + $0x14] sm:$0xf]
    %v1905 = vld [vmem:[%s1898 + $0x18] sm:$0xf]
    %v1906 = vld [vmem:[%s1898 + $0x1c] sm:$0xf]
    %v1915 = vunpack.c.l.b16 %v1899
    %v1916 = vunpack.c.l.b16 %v1900
    %v1917 = vunpack.c.l.b16 %v1901
    %v1918 = vunpack.c.l.b16 %v1902
    %v1919 = vunpack.c.l.b16 %v1903
    %v1920 = vunpack.c.l.b16 %v1904
    %v1921 = vunpack.c.l.b16 %v1905
    %v1922 = vunpack.c.l.b16 %v1906
    %v1923 = vpack.c.b16 %v1916, %v1915
    %v1924 = vpack.c.b16 %v1918, %v1917
    %v1925 = vpack.c.b16 %v1920, %v1919
    %v1926 = vpack.c.b16 %v1922, %v1921
    %v1932 = vsel %vm1612, %v1897, 0
    %1934 = vmatprep.subr.bf16.mxu0 0
    %1935 = vmatpush1.bf16.msra.mxu0 %v1923
    %1936 = vmatprep.subr.bf16.mxu0 0
    %1937 = vmatpush1.bf16.msra.mxu0 %v1924
    %1938 = vmatprep.subr.bf16.mxu0 0
    %1939 = vmatpush1.bf16.msra.mxu0 %v1925
    %1940 = vmatprep.subr.bf16.mxu0 0
    %1941 = vmatpush1.bf16.msra.mxu0 %v1926
    %1942 = vmatprep.subr.bf16.mxu0 0
    %1943 = vmatpush1.bf16.msra.mxu0 0
    %1944 = vmatprep.subr.bf16.mxu0 0
    %1945 = vmatpush1.bf16.msra.mxu0 0
    %1946 = vmatprep.subr.bf16.mxu0 0
    %1947 = vmatpush1.bf16.msra.mxu0 0
    %1948 = vmatprep.subr.bf16.mxu0 0
    %1949 = vmatpush1.bf16.msra.mxu0 0
    %1950 = vmatprep.subr.bf16.mxu0 0
    %1951 = vmatpush1.bf16.msra.mxu0 0
    %1952 = vmatprep.subr.bf16.mxu0 0
    %1953 = vmatpush1.bf16.msra.mxu0 0
    %1954 = vmatprep.subr.bf16.mxu0 0
    %1955 = vmatpush1.bf16.msra.mxu0 0
    %1956 = vmatprep.subr.bf16.mxu0 0
    %1957 = vmatpush1.bf16.msra.mxu0 0
    %1958 = vmatprep.subr.bf16.mxu0 0
    %1959 = vmatpush1.bf16.msra.mxu0 0
    %1960 = vmatprep.subr.bf16.mxu0 0
    %1961 = vmatpush1.bf16.msra.mxu0 0
    %1962 = vmatprep.subr.bf16.mxu0 0
    %1963 = vmatpush1.bf16.msra.mxu0 0
    %1964 = vmatprep.subr.bf16.mxu0 0
    %1965 = vmatpush1.bf16.msra.mxu0 0
    %1966 = vmatprep.mubr.bf16.mxu0 0
    %1967 = vmatmul.mubr.bf16.gmra.mrb[0].mxu0 %v1932
    %v1968 = vpop.f32.mrb[0].mxu0
    %v1969 = vadd.f32 0.0, %v1968
    %v1970 = vpop.f32.mrb[0].mxu0
    %v1971 = vpop.f32.mrb[0].mxu0
    %v1972 = vpop.f32.mrb[0].mxu0
    %1973 = vdwg.mxu0
    %v1974 = vadd.f32 %v1896, %v1969
    %v1975 = vpack.c.bf16 %v1573, %v1573
    %s1976 = scalar_lea.vmem %s8, 160
    %v1977 = vld [vmem:[%s1976] sm:$0xf]
    %v1978 = vld [vmem:[%s1976 + $0x4] sm:$0xf]
    %v1979 = vld [vmem:[%s1976 + $0x8] sm:$0xf]
    %v1980 = vld [vmem:[%s1976 + $0xc] sm:$0xf]
    %v1981 = vld [vmem:[%s1976 + $0x10] sm:$0xf]
    %v1982 = vld [vmem:[%s1976 + $0x14] sm:$0xf]
    %v1983 = vld [vmem:[%s1976 + $0x18] sm:$0xf]
    %v1984 = vld [vmem:[%s1976 + $0x1c] sm:$0xf]
    %v1993 = vunpack.c.l.b16 %v1977
    %v1994 = vunpack.c.l.b16 %v1978
    %v1995 = vunpack.c.l.b16 %v1979
    %v1996 = vunpack.c.l.b16 %v1980
    %v1997 = vunpack.c.l.b16 %v1981
    %v1998 = vunpack.c.l.b16 %v1982
    %v1999 = vunpack.c.l.b16 %v1983
    %v2000 = vunpack.c.l.b16 %v1984
    %v2001 = vpack.c.b16 %v1994, %v1993
    %v2002 = vpack.c.b16 %v1996, %v1995
    %v2003 = vpack.c.b16 %v1998, %v1997
    %v2004 = vpack.c.b16 %v2000, %v1999
    %v2010 = vsel %vm1612, %v1975, 0
    %2012 = vmatprep.subr.bf16.mxu0 0
    %2013 = vmatpush1.bf16.msra.mxu0 %v2001
    %2014 = vmatprep.subr.bf16.mxu0 0
    %2015 = vmatpush1.bf16.msra.mxu0 %v2002
    %2016 = vmatprep.subr.bf16.mxu0 0
    %2017 = vmatpush1.bf16.msra.mxu0 %v2003
    %2018 = vmatprep.subr.bf16.mxu0 0
    %2019 = vmatpush1.bf16.msra.mxu0 %v2004
    %2020 = vmatprep.subr.bf16.mxu0 0
    %2021 = vmatpush1.bf16.msra.mxu0 0
    %2022 = vmatprep.subr.bf16.mxu0 0
    %2023 = vmatpush1.bf16.msra.mxu0 0
    %2024 = vmatprep.subr.bf16.mxu0 0
    %2025 = vmatpush1.bf16.msra.mxu0 0
    %2026 = vmatprep.subr.bf16.mxu0 0
    %2027 = vmatpush1.bf16.msra.mxu0 0
    %2028 = vmatprep.subr.bf16.mxu0 0
    %2029 = vmatpush1.bf16.msra.mxu0 0
    %2030 = vmatprep.subr.bf16.mxu0 0
    %2031 = vmatpush1.bf16.msra.mxu0 0
    %2032 = vmatprep.subr.bf16.mxu0 0
    %2033 = vmatpush1.bf16.msra.mxu0 0
    %2034 = vmatprep.subr.bf16.mxu0 0
    %2035 = vmatpush1.bf16.msra.mxu0 0
    %2036 = vmatprep.subr.bf16.mxu0 0
    %2037 = vmatpush1.bf16.msra.mxu0 0
    %2038 = vmatprep.subr.bf16.mxu0 0
    %2039 = vmatpush1.bf16.msra.mxu0 0
    %2040 = vmatprep.subr.bf16.mxu0 0
    %2041 = vmatpush1.bf16.msra.mxu0 0
    %2042 = vmatprep.subr.bf16.mxu0 0
    %2043 = vmatpush1.bf16.msra.mxu0 0
    %2044 = vmatprep.mubr.bf16.mxu0 0
    %2045 = vmatmul.mubr.bf16.gmra.mrb[0].mxu0 %v2010
    %v2046 = vpop.f32.mrb[0].mxu0
    %v2047 = vadd.f32 0.0, %v2046
    %v2048 = vpop.f32.mrb[0].mxu0
    %v2049 = vpop.f32.mrb[0].mxu0
    %v2050 = vpop.f32.mrb[0].mxu0
    %2051 = vdwg.mxu0
    %v2052 = vadd.f32 %v1974, %v2047
    %v2053 = vpack.c.bf16 %v1574, %v1574
    %s2054 = scalar_lea.vmem %s8, 192
    %v2055 = vld [vmem:[%s2054] sm:$0xf]
    %v2056 = vld [vmem:[%s2054 + $0x4] sm:$0xf]
    %v2057 = vld [vmem:[%s2054 + $0x8] sm:$0xf]
    %v2058 = vld [vmem:[%s2054 + $0xc] sm:$0xf]
    %v2059 = vld [vmem:[%s2054 + $0x10] sm:$0xf]
    %v2060 = vld [vmem:[%s2054 + $0x14] sm:$0xf]
    %v2061 = vld [vmem:[%s2054 + $0x18] sm:$0xf]
    %v2062 = vld [vmem:[%s2054 + $0x1c] sm:$0xf]
    %v2071 = vunpack.c.l.b16 %v2055
    %v2072 = vunpack.c.l.b16 %v2056
    %v2073 = vunpack.c.l.b16 %v2057
    %v2074 = vunpack.c.l.b16 %v2058
    %v2075 = vunpack.c.l.b16 %v2059
    %v2076 = vunpack.c.l.b16 %v2060
    %v2077 = vunpack.c.l.b16 %v2061
    %v2078 = vunpack.c.l.b16 %v2062
    %v2079 = vpack.c.b16 %v2072, %v2071
    %v2080 = vpack.c.b16 %v2074, %v2073
    %v2081 = vpack.c.b16 %v2076, %v2075
    %v2082 = vpack.c.b16 %v2078, %v2077
    %v2088 = vsel %vm1612, %v2053, 0
    %2090 = vmatprep.subr.bf16.mxu0 0
    %2091 = vmatpush1.bf16.msra.mxu0 %v2079
    %2092 = vmatprep.subr.bf16.mxu0 0
    %2093 = vmatpush1.bf16.msra.mxu0 %v2080
    %2094 = vmatprep.subr.bf16.mxu0 0
    %2095 = vmatpush1.bf16.msra.mxu0 %v2081
    %2096 = vmatprep.subr.bf16.mxu0 0
    %2097 = vmatpush1.bf16.msra.mxu0 %v2082
    %2098 = vmatprep.subr.bf16.mxu0 0
    %2099 = vmatpush1.bf16.msra.mxu0 0
    %2100 = vmatprep.subr.bf16.mxu0 0
    %2101 = vmatpush1.bf16.msra.mxu0 0
    %2102 = vmatprep.subr.bf16.mxu0 0
    %2103 = vmatpush1.bf16.msra.mxu0 0
    %2104 = vmatprep.subr.bf16.mxu0 0
    %2105 = vmatpush1.bf16.msra.mxu0 0
    %2106 = vmatprep.subr.bf16.mxu0 0
    %2107 = vmatpush1.bf16.msra.mxu0 0
    %2108 = vmatprep.subr.bf16.mxu0 0
    %2109 = vmatpush1.bf16.msra.mxu0 0
    %2110 = vmatprep.subr.bf16.mxu0 0
    %2111 = vmatpush1.bf16.msra.mxu0 0
    %2112 = vmatprep.subr.bf16.mxu0 0
    %2113 = vmatpush1.bf16.msra.mxu0 0
    %2114 = vmatprep.subr.bf16.mxu0 0
    %2115 = vmatpush1.bf16.msra.mxu0 0
    %2116 = vmatprep.subr.bf16.mxu0 0
    %2117 = vmatpush1.bf16.msra.mxu0 0
    %2118 = vmatprep.subr.bf16.mxu0 0
    %2119 = vmatpush1.bf16.msra.mxu0 0
    %2120 = vmatprep.subr.bf16.mxu0 0
    %2121 = vmatpush1.bf16.msra.mxu0 0
    %2122 = vmatprep.mubr.bf16.mxu0 0
    %2123 = vmatmul.mubr.bf16.gmra.mrb[0].mxu0 %v2088
    %v2124 = vpop.f32.mrb[0].mxu0
    %v2125 = vadd.f32 0.0, %v2124
    %v2126 = vpop.f32.mrb[0].mxu0
    %v2127 = vpop.f32.mrb[0].mxu0
    %v2128 = vpop.f32.mrb[0].mxu0
    %2129 = vdwg.mxu0
    %v2130 = vadd.f32 %v2052, %v2125
    %v2131 = vpack.c.bf16 %v1575, %v1575
    %s2132 = scalar_lea.vmem %s8, 224
    %v2133 = vld [vmem:[%s2132] sm:$0xf]
    %v2134 = vld [vmem:[%s2132 + $0x4] sm:$0xf]
    %v2135 = vld [vmem:[%s2132 + $0x8] sm:$0xf]
    %v2136 = vld [vmem:[%s2132 + $0xc] sm:$0xf]
    %v2137 = vld [vmem:[%s2132 + $0x10] sm:$0xf]
    %v2138 = vld [vmem:[%s2132 + $0x14] sm:$0xf]
    %v2139 = vld [vmem:[%s2132 + $0x18] sm:$0xf]
    %v2140 = vld [vmem:[%s2132 + $0x1c] sm:$0xf]
    %v2149 = vunpack.c.l.b16 %v2133
    %v2150 = vunpack.c.l.b16 %v2134
    %v2151 = vunpack.c.l.b16 %v2135
    %v2152 = vunpack.c.l.b16 %v2136
    %v2153 = vunpack.c.l.b16 %v2137
    %v2154 = vunpack.c.l.b16 %v2138
    %v2155 = vunpack.c.l.b16 %v2139
    %v2156 = vunpack.c.l.b16 %v2140
    %v2157 = vpack.c.b16 %v2150, %v2149
    %v2158 = vpack.c.b16 %v2152, %v2151
    %v2159 = vpack.c.b16 %v2154, %v2153
    %v2160 = vpack.c.b16 %v2156, %v2155
    %v2166 = vsel %vm1612, %v2131, 0
    %2168 = vmatprep.subr.bf16.mxu0 0
    %2169 = vmatpush1.bf16.msra.mxu0 %v2157
    %2170 = vmatprep.subr.bf16.mxu0 0
    %2171 = vmatpush1.bf16.msra.mxu0 %v2158
    %2172 = vmatprep.subr.bf16.mxu0 0
    %2173 = vmatpush1.bf16.msra.mxu0 %v2159
    %2174 = vmatprep.subr.bf16.mxu0 0
    %2175 = vmatpush1.bf16.msra.mxu0 %v2160
    %2176 = vmatprep.subr.bf16.mxu0 0
    %2177 = vmatpush1.bf16.msra.mxu0 0
    %2178 = vmatprep.subr.bf16.mxu0 0
    %2179 = vmatpush1.bf16.msra.mxu0 0
    %2180 = vmatprep.subr.bf16.mxu0 0
    %2181 = vmatpush1.bf16.msra.mxu0 0
    %2182 = vmatprep.subr.bf16.mxu0 0
    %2183 = vmatpush1.bf16.msra.mxu0 0
    %2184 = vmatprep.subr.bf16.mxu0 0
    %2185 = vmatpush1.bf16.msra.mxu0 0
    %2186 = vmatprep.subr.bf16.mxu0 0
    %2187 = vmatpush1.bf16.msra.mxu0 0
    %2188 = vmatprep.subr.bf16.mxu0 0
    %2189 = vmatpush1.bf16.msra.mxu0 0
    %2190 = vmatprep.subr.bf16.mxu0 0
    %2191 = vmatpush1.bf16.msra.mxu0 0
    %2192 = vmatprep.subr.bf16.mxu0 0
    %2193 = vmatpush1.bf16.msra.mxu0 0
    %2194 = vmatprep.subr.bf16.mxu0 0
    %2195 = vmatpush1.bf16.msra.mxu0 0
    %2196 = vmatprep.subr.bf16.mxu0 0
    %2197 = vmatpush1.bf16.msra.mxu0 0
    %2198 = vmatprep.subr.bf16.mxu0 0
    %2199 = vmatpush1.bf16.msra.mxu0 0
    %2200 = vmatprep.mubr.bf16.mxu0 0
    %2201 = vmatmul.mubr.bf16.gmra.mrb[0].mxu0 %v2166
    %v2202 = vpop.f32.mrb[0].mxu0
    %v2203 = vadd.f32 0.0, %v2202
    %v2204 = vpop.f32.mrb[0].mxu0
    %v2205 = vpop.f32.mrb[0].mxu0
    %v2206 = vpop.f32.mrb[0].mxu0
    %2207 = vdwg.mxu0
    %v2208 = vadd.f32 %v2130, %v2203
    %v2209 = vpack.c.bf16 %v1576, %v1576
    %s2210 = scalar_lea.vmem %s8, 256
    %v2211 = vld [vmem:[%s2210] sm:$0xf]
    %v2212 = vld [vmem:[%s2210 + $0x4] sm:$0xf]
    %v2213 = vld [vmem:[%s2210 + $0x8] sm:$0xf]
    %v2214 = vld [vmem:[%s2210 + $0xc] sm:$0xf]
    %v2215 = vld [vmem:[%s2210 + $0x10] sm:$0xf]
    %v2216 = vld [vmem:[%s2210 + $0x14] sm:$0xf]
    %v2217 = vld [vmem:[%s2210 + $0x18] sm:$0xf]
    %v2218 = vld [vmem:[%s2210 + $0x1c] sm:$0xf]
    %v2227 = vunpack.c.l.b16 %v2211
    %v2228 = vunpack.c.l.b16 %v2212
    %v2229 = vunpack.c.l.b16 %v2213
    %v2230 = vunpack.c.l.b16 %v2214
    %v2231 = vunpack.c.l.b16 %v2215
    %v2232 = vunpack.c.l.b16 %v2216
    %v2233 = vunpack.c.l.b16 %v2217
    %v2234 = vunpack.c.l.b16 %v2218
    %v2235 = vpack.c.b16 %v2228, %v2227
    %v2236 = vpack.c.b16 %v2230, %v2229
    %v2237 = vpack.c.b16 %v2232, %v2231
    %v2238 = vpack.c.b16 %v2234, %v2233
    %v2244 = vsel %vm1612, %v2209, 0
    %2246 = vmatprep.subr.bf16.mxu0 0
    %2247 = vmatpush1.bf16.msra.mxu0 %v2235
    %2248 = vmatprep.subr.bf16.mxu0 0
    %2249 = vmatpush1.bf16.msra.mxu0 %v2236
    %2250 = vmatprep.subr.bf16.mxu0 0
    %2251 = vmatpush1.bf16.msra.mxu0 %v2237
    %2252 = vmatprep.subr.bf16.mxu0 0
    %2253 = vmatpush1.bf16.msra.mxu0 %v2238
    %2254 = vmatprep.subr.bf16.mxu0 0
    %2255 = vmatpush1.bf16.msra.mxu0 0
    %2256 = vmatprep.subr.bf16.mxu0 0
    %2257 = vmatpush1.bf16.msra.mxu0 0
    %2258 = vmatprep.subr.bf16.mxu0 0
    %2259 = vmatpush1.bf16.msra.mxu0 0
    %2260 = vmatprep.subr.bf16.mxu0 0
    %2261 = vmatpush1.bf16.msra.mxu0 0
    %2262 = vmatprep.subr.bf16.mxu0 0
    %2263 = vmatpush1.bf16.msra.mxu0 0
    %2264 = vmatprep.subr.bf16.mxu0 0
    %2265 = vmatpush1.bf16.msra.mxu0 0
    %2266 = vmatprep.subr.bf16.mxu0 0
    %2267 = vmatpush1.bf16.msra.mxu0 0
    %2268 = vmatprep.subr.bf16.mxu0 0
    %2269 = vmatpush1.bf16.msra.mxu0 0
    %2270 = vmatprep.subr.bf16.mxu0 0
    %2271 = vmatpush1.bf16.msra.mxu0 0
    %2272 = vmatprep.subr.bf16.mxu0 0
    %2273 = vmatpush1.bf16.msra.mxu0 0
    %2274 = vmatprep.subr.bf16.mxu0 0
    %2275 = vmatpush1.bf16.msra.mxu0 0
    %2276 = vmatprep.subr.bf16.mxu0 0
    %2277 = vmatpush1.bf16.msra.mxu0 0
    %2278 = vmatprep.mubr.bf16.mxu0 0
    %2279 = vmatmul.mubr.bf16.gmra.mrb[0].mxu0 %v2244
    %v2280 = vpop.f32.mrb[0].mxu0
    %v2281 = vadd.f32 0.0, %v2280
    %v2282 = vpop.f32.mrb[0].mxu0
    %v2283 = vpop.f32.mrb[0].mxu0
    %v2284 = vpop.f32.mrb[0].mxu0
    %2285 = vdwg.mxu0
    %v2286 = vadd.f32 %v2208, %v2281
    %v2287 = vpack.c.bf16 %v1577, %v1577
    %s2288 = scalar_lea.vmem %s8, 288
    %v2289 = vld [vmem:[%s2288] sm:$0xf]
    %v2290 = vld [vmem:[%s2288 + $0x4] sm:$0xf]
    %v2291 = vld [vmem:[%s2288 + $0x8] sm:$0xf]
    %v2292 = vld [vmem:[%s2288 + $0xc] sm:$0xf]
    %v2293 = vld [vmem:[%s2288 + $0x10] sm:$0xf]
    %v2294 = vld [vmem:[%s2288 + $0x14] sm:$0xf]
    %v2295 = vld [vmem:[%s2288 + $0x18] sm:$0xf]
    %v2296 = vld [vmem:[%s2288 + $0x1c] sm:$0xf]
    %v2305 = vunpack.c.l.b16 %v2289
    %v2306 = vunpack.c.l.b16 %v2290
    %v2307 = vunpack.c.l.b16 %v2291
    %v2308 = vunpack.c.l.b16 %v2292
    %v2309 = vunpack.c.l.b16 %v2293
    %v2310 = vunpack.c.l.b16 %v2294
    %v2311 = vunpack.c.l.b16 %v2295
    %v2312 = vunpack.c.l.b16 %v2296
    %v2313 = vpack.c.b16 %v2306, %v2305
    %v2314 = vpack.c.b16 %v2308, %v2307
    %v2315 = vpack.c.b16 %v2310, %v2309
    %v2316 = vpack.c.b16 %v2312, %v2311
    %v2322 = vsel %vm1612, %v2287, 0
    %2324 = vmatprep.subr.bf16.mxu0 0
    %2325 = vmatpush1.bf16.msra.mxu0 %v2313
    %2326 = vmatprep.subr.bf16.mxu0 0
    %2327 = vmatpush1.bf16.msra.mxu0 %v2314
    %2328 = vmatprep.subr.bf16.mxu0 0
    %2329 = vmatpush1.bf16.msra.mxu0 %v2315
    %2330 = vmatprep.subr.bf16.mxu0 0
    %2331 = vmatpush1.bf16.msra.mxu0 %v2316
    %2332 = vmatprep.subr.bf16.mxu0 0
    %2333 = vmatpush1.bf16.msra.mxu0 0
    %2334 = vmatprep.subr.bf16.mxu0 0
    %2335 = vmatpush1.bf16.msra.mxu0 0
    %2336 = vmatprep.subr.bf16.mxu0 0
    %2337 = vmatpush1.bf16.msra.mxu0 0
    %2338 = vmatprep.subr.bf16.mxu0 0
    %2339 = vmatpush1.bf16.msra.mxu0 0
    %2340 = vmatprep.subr.bf16.mxu0 0
    %2341 = vmatpush1.bf16.msra.mxu0 0
    %2342 = vmatprep.subr.bf16.mxu0 0
    %2343 = vmatpush1.bf16.msra.mxu0 0
    %2344 = vmatprep.subr.bf16.mxu0 0
    %2345 = vmatpush1.bf16.msra.mxu0 0
    %2346 = vmatprep.subr.bf16.mxu0 0
    %2347 = vmatpush1.bf16.msra.mxu0 0
    %2348 = vmatprep.subr.bf16.mxu0 0
    %2349 = vmatpush1.bf16.msra.mxu0 0
    %2350 = vmatprep.subr.bf16.mxu0 0
    %2351 = vmatpush1.bf16.msra.mxu0 0
    %2352 = vmatprep.subr.bf16.mxu0 0
    %2353 = vmatpush1.bf16.msra.mxu0 0
    %2354 = vmatprep.subr.bf16.mxu0 0
    %2355 = vmatpush1.bf16.msra.mxu0 0
    %2356 = vmatprep.mubr.bf16.mxu0 0
    %2357 = vmatmul.mubr.bf16.gmra.mrb[0].mxu0 %v2322
    %v2358 = vpop.f32.mrb[0].mxu0
    %v2359 = vadd.f32 0.0, %v2358
    %v2360 = vpop.f32.mrb[0].mxu0
    %v2361 = vpop.f32.mrb[0].mxu0
    %v2362 = vpop.f32.mrb[0].mxu0
    %2363 = vdwg.mxu0
    %v2364 = vadd.f32 %v2286, %v2359
    %vm2365 = vcmask 1041408
    %v2366 = vsel %vm2365, %v2364, -inf
    %2367 = vmax.xlane.f32.xlu0 %v2366
    %v2368 = vpop.xlane.xlu0 %2367
    %v2369 = vsub.f32 %v2364, %v2368
    %v2370 = vmul.f32 %v2369, 1.442695
    %v2371 = vpow.pop %v2370
    %v2372 = vsel %vm2365, %v2371, 0.0
    %2373 = vadd.xlane.f32.xlu0 %v2372
    %v2374 = vpop.xlane.xlu0 %2373
    %v2375 = vrcp.pop %v2374
    %v2376 = vmul.f32 %v2371, %v2375
    %v2377 = vld [vmem:[#allocation25] sm:$0x1]
    %v2378 = vld [vmem:[#allocation25 + $0x1] sm:$0x1]
    %v2379 = vld [vmem:[#allocation25 + $0x2] sm:$0x1]
    %v2380 = vld [vmem:[#allocation25 + $0x3] sm:$0x1]
    %v2381 = vld [vmem:[#allocation25 + $0x4] sm:$0x1]
    %v2382 = vld [vmem:[#allocation25 + $0x5] sm:$0x1]
    %v2383 = vld [vmem:[#allocation25 + $0x6] sm:$0x1]
    %v2384 = vld [vmem:[#allocation25 + $0x7] sm:$0x1]
    %v2385 = vld [vmem:[#allocation25 + $0x8] sm:$0x1]
    %v2386 = vld [vmem:[#allocation25 + $0x9] sm:$0x1]
    %v2397 = vlaneseq
    %v2398 = vshrl.u32 %v2397, 7
    %v2399 = vsub.s32 0, %v2398
    %v2400 = vrot.slane %v2377, %v2399
    %v2401 = vlaneseq
    %v2402 = vshrl.u32 %v2401, 7
    %v2403 = vsub.s32 0, %v2402
    %v2404 = vrot.slane %v2378, %v2403
    %v2405 = vlaneseq
    %v2406 = vshrl.u32 %v2405, 7
    %v2407 = vsub.s32 0, %v2406
    %v2408 = vrot.slane %v2379, %v2407
    %v2409 = vlaneseq
    %v2410 = vshrl.u32 %v2409, 7
    %v2411 = vsub.s32 0, %v2410
    %v2412 = vrot.slane %v2380, %v2411
    %v2413 = vlaneseq
    %v2414 = vshrl.u32 %v2413, 7
    %v2415 = vsub.s32 0, %v2414
    %v2416 = vrot.slane %v2381, %v2415
    %v2417 = vlaneseq
    %v2418 = vshrl.u32 %v2417, 7
    %v2419 = vsub.s32 0, %v2418
    %v2420 = vrot.slane %v2382, %v2419
    %v2421 = vlaneseq
    %v2422 = vshrl.u32 %v2421, 7
    %v2423 = vsub.s32 0, %v2422
    %v2424 = vrot.slane %v2383, %v2423
    %v2425 = vlaneseq
    %v2426 = vshrl.u32 %v2425, 7
    %v2427 = vsub.s32 0, %v2426
    %v2428 = vrot.slane %v2384, %v2427
    %v2429 = vlaneseq
    %v2430 = vshrl.u32 %v2429, 7
    %v2431 = vsub.s32 0, %v2430
    %v2432 = vrot.slane %v2385, %v2431
    %v2433 = vlaneseq
    %v2434 = vshrl.u32 %v2433, 7
    %v2435 = vsub.s32 0, %v2434
    %v2436 = vrot.slane %v2386, %v2435
    %v2447 = vmul.f32 %v2376, %v2400
    %v2448 = vmul.f32 %v2376, %v2404
    %v2449 = vmul.f32 %v2376, %v2408
    %v2450 = vmul.f32 %v2376, %v2412
    %v2451 = vmul.f32 %v2376, %v2416
    %v2452 = vmul.f32 %v2376, %v2420
    %v2453 = vmul.f32 %v2376, %v2424
    %v2454 = vmul.f32 %v2376, %v2428
    %v2455 = vmul.f32 %v2376, %v2432
    %v2456 = vmul.f32 %v2376, %v2436
    %v2457 = vsel %vm2365, %v2447, 0.0
    %2458 = vadd.xlane.f32.xlu0 %v2457
    %v2459 = vpop.xlane.xlu0 %2458
    %v2460 = vsel %vm2365, %v2448, 0.0
    %2461 = vadd.xlane.f32.xlu0 %v2460
    %v2462 = vpop.xlane.xlu0 %2461
    %v2463 = vsel %vm2365, %v2449, 0.0
    %2464 = vadd.xlane.f32.xlu0 %v2463
    %v2465 = vpop.xlane.xlu0 %2464
    %v2466 = vsel %vm2365, %v2450, 0.0
    %2467 = vadd.xlane.f32.xlu0 %v2466
    %v2468 = vpop.xlane.xlu0 %2467
    %v2469 = vsel %vm2365, %v2451, 0.0
    %2470 = vadd.xlane.f32.xlu0 %v2469
    %v2471 = vpop.xlane.xlu0 %2470
    %v2472 = vsel %vm2365, %v2452, 0.0
    %2473 = vadd.xlane.f32.xlu0 %v2472
    %v2474 = vpop.xlane.xlu0 %2473
    %v2475 = vsel %vm2365, %v2453, 0.0
    %2476 = vadd.xlane.f32.xlu0 %v2475
    %v2477 = vpop.xlane.xlu0 %2476
    %v2478 = vsel %vm2365, %v2454, 0.0
    %2479 = vadd.xlane.f32.xlu0 %v2478
    %v2480 = vpop.xlane.xlu0 %2479
    %v2481 = vsel %vm2365, %v2455, 0.0
    %2482 = vadd.xlane.f32.xlu0 %v2481
    %v2483 = vpop.xlane.xlu0 %2482
    %v2484 = vsel %vm2365, %v2456, 0.0
    %2485 = vadd.xlane.f32.xlu0 %v2484
    %v2486 = vpop.xlane.xlu0 %2485
    %v2487 = vld [vmem:[%s2] sm:$0x1]
    %v2488 = vld [vmem:[%s2 + $0x1] sm:$0x1]
    %v2489 = vld [vmem:[%s2 + $0x2] sm:$0x1]
    %v2490 = vld [vmem:[%s2 + $0x3] sm:$0x1]
    %v2491 = vld [vmem:[%s2 + $0x4] sm:$0x1]
    %v2492 = vld [vmem:[%s2 + $0x5] sm:$0x1]
    %v2493 = vld [vmem:[%s2 + $0x6] sm:$0x1]
    %v2494 = vld [vmem:[%s2 + $0x7] sm:$0x1]
    %v2495 = vld [vmem:[%s2 + $0x8] sm:$0x1]
    %v2496 = vld [vmem:[%s2 + $0x9] sm:$0x1]
    %v2497 = vld [vmem:[%s10] sm:$0xff]
    %v2498 = vld [vmem:[%s10 + $0x8] sm:$0xff]
    %v2499 = vld [vmem:[%s10 + $0x10] sm:$0xff]
    %v2500 = vld [vmem:[%s10 + $0x18] sm:$0xff]
    %v2501 = vld [vmem:[%s11] sm:$0x3]
    %v2503 = vlaneseq
    %v2504 = vshrl.u32 %v2503, 7
    %v2505 = vsub.s32 0, %v2504
    %v2506 = vrot.slane %v2501, %v2505
    %v2507 = vlaneseq
    %v2508 = vshrl.u32 %v2507, 7
    %v2509 = vsub.s32 1, %v2508
    %v2510 = vrot.slane %v2501, %v2509
    %v2523 = vcombine.low %v2487, %v2488
    %v2524 = vcombine.low %v2489, %v2490
    %v2525 = vcombine.low %v2491, %v2492
    %v2526 = vcombine.low %v2493, %v2494
    %v2528 = vunpack.c.l.s4 1966171168
    %v2529 = vunpack.c.0.s8 %v2528
    %v2530 = vlaneseq
    %v2531 = vshrl.u32 %v2530, 7
    %v2532 = vsub.s32 %v2529, %v2531
    %v2533 = vrot.slane %v2523, %v2532
    %v2535 = vunpack.c.l.s4 1966171168
    %v2536 = vunpack.c.0.s8 %v2535
    %v2537 = vlaneseq
    %v2538 = vshrl.u32 %v2537, 7
    %v2539 = vsub.s32 %v2536, %v2538
    %v2540 = vrot.slane %v2524, %v2539
    %v2542 = vunpack.c.l.s4 1966171168
    %v2543 = vunpack.c.0.s8 %v2542
    %v2544 = vlaneseq
    %v2545 = vshrl.u32 %v2544, 7
    %v2546 = vsub.s32 %v2543, %v2545
    %v2547 = vrot.slane %v2525, %v2546
    %v2549 = vunpack.c.l.s4 1966171168
    %v2550 = vunpack.c.0.s8 %v2549
    %v2551 = vlaneseq
    %v2552 = vshrl.u32 %v2551, 7
    %v2553 = vsub.s32 %v2550, %v2552
    %v2554 = vrot.slane %v2526, %v2553
    %v2555 = vcombine.low %v2533, %v2540
    %v2556 = vcombine.low %v2547, %v2554
    %v2558 = vunpack.c.l.s4 1966171168
    %v2559 = vunpack.c.0.s8 %v2558
    %v2560 = vlaneseq
    %v2561 = vshrl.u32 %v2560, 7
    %v2562 = vsub.s32 %v2559, %v2561
    %v2563 = vrot.slane %v2555, %v2562
    %v2565 = vunpack.c.l.s4 1966171168
    %v2566 = vunpack.c.0.s8 %v2565
    %v2567 = vlaneseq
    %v2568 = vshrl.u32 %v2567, 7
    %v2569 = vsub.s32 %v2566, %v2568
    %v2570 = vrot.slane %v2556, %v2569
    %v2571 = vcombine.low %v2563, %v2570
    %v2572 = vcombine.low %v2495, %v2496
    %v2574 = vunpack.c.l.s4 1966171168
    %v2575 = vunpack.c.0.s8 %v2574
    %v2576 = vlaneseq
    %v2577 = vshrl.u32 %v2576, 7
    %v2578 = vsub.s32 %v2575, %v2577
    %v2579 = vrot.slane %v2572, %v2578
    %v2581 = vunpack.c.l.s4 1966171168
    %v2582 = vunpack.c.0.s8 %v2581
    %v2583 = vlaneseq
    %v2584 = vshrl.u32 %v2583, 7
    %v2585 = vsub.s32 %v2582, %v2584
    %v2586 = vrot.slane %v2579, %v2585
    %v2591 = vunpack.c.l.b16 %v2497
    %v2592 = vunpack.c.h.b16 %v2497
    %v2593 = vunpack.c.l.b16 %v2498
    %v2594 = vunpack.c.h.b16 %v2498
    %v2595 = vunpack.c.l.b16 %v2499
    %v2596 = vunpack.c.h.b16 %v2499
    %v2597 = vunpack.c.l.b16 %v2500
    %v2598 = vunpack.c.h.b16 %v2500
    %v2599 = vpack.c.b16 %v2593, %v2591
    %v2600 = vpack.c.b16 %v2594, %v2592
    %v2601 = vpack.c.b16 %v2597, %v2595
    %v2602 = vpack.c.b16 %v2598, %v2596
    %v2608 = vsel %vm1211, %v2571, 0
    %v2611 = vsel %vm1211, %v2586, 0
    %2613 = vmatprep.subr.bf16.mxu0 %v2600
    %2614 = vmatpush1.bf16.msra.mxu0 %v2599
    %2615 = vmatprep.subr.bf16.mxu0 %v2602
    %2616 = vmatpush1.bf16.msra.mxu0 %v2601
    %2617 = vmatprep.subr.bf16.mxu0 0
    %2618 = vmatpush1.bf16.msra.mxu0 0
    %2619 = vmatprep.subr.bf16.mxu0 0
    %2620 = vmatpush1.bf16.msra.mxu0 0
    %2621 = vmatprep.subr.bf16.mxu0 0
    %2622 = vmatpush1.bf16.msra.mxu0 0
    %2623 = vmatprep.subr.bf16.mxu0 0
    %2624 = vmatpush1.bf16.msra.mxu0 0
    %2625 = vmatprep.subr.bf16.mxu0 0
    %2626 = vmatpush1.bf16.msra.mxu0 0
    %2627 = vmatprep.subr.bf16.mxu0 0
    %2628 = vmatpush1.bf16.msra.mxu0 0
    %2629 = vmatprep.subr.bf16.mxu0 0
    %2630 = vmatpush1.bf16.msra.mxu0 0
    %2631 = vmatprep.subr.bf16.mxu0 0
    %2632 = vmatpush1.bf16.msra.mxu0 0
    %2633 = vmatprep.subr.bf16.mxu0 0
    %2634 = vmatpush1.bf16.msra.mxu0 0
    %2635 = vmatprep.subr.bf16.mxu0 0
    %2636 = vmatpush1.bf16.msra.mxu0 0
    %2637 = vmatprep.subr.bf16.mxu0 0
    %2638 = vmatpush1.bf16.msra.mxu0 0
    %2639 = vmatprep.subr.bf16.mxu0 0
    %2640 = vmatpush1.bf16.msra.mxu0 0
    %2641 = vmatprep.subr.bf16.mxu0 0
    %2642 = vmatpush1.bf16.msra.mxu0 0
    %2643 = vmatprep.subr.bf16.mxu0 0
    %2644 = vmatpush1.bf16.msra.mxu0 0
    %2645 = vmatprep.mubr.bf16.mxu0 0
    %2646 = vmatmul.mubr.bf16.gmra.mrb[0].mxu0 %v2608
    %v2647 = vpop.f32.mrb[0].mxu0
    %v2648 = vadd.f32 %v2506, %v2647
    %v2649 = vpop.f32.mrb[0].mxu0
    %v2650 = vadd.f32 %v2510, %v2649
    %v2651 = vpop.f32.mrb[0].mxu0
    %v2652 = vadd.f32 %v2506, %v2651
    %v2653 = vpop.f32.mrb[0].mxu0
    %v2654 = vadd.f32 %v2510, %v2653
    %2655 = vmatprep.mubr.bf16.mxu0 0
    %2656 = vmatmul.mubr.bf16.gmra.mrb[0].mxu0 %v2611
    %v2657 = vpop.f32.mrb[0].mxu0
    %v2658 = vadd.f32 %v2506, %v2657
    %v2659 = vpop.f32.mrb[0].mxu0
    %v2660 = vadd.f32 %v2510, %v2659
    %v2661 = vpop.f32.mrb[0].mxu0
    %v2662 = vpop.f32.mrb[0].mxu0
    %2663 = vdwg.mxu0
    %v2664 = vmul.f32 %v2648, 0.5
    %v2665 = vmul.f32 %v2650, 0.5
    %v2666 = vmul.f32 %v2652, 0.5
    %v2667 = vmul.f32 %v2654, 0.5
    %v2668 = vmul.f32 %v2658, 0.5
    %v2669 = vmul.f32 %v2660, 0.5
    %v2670 = vmul.f32 %v2648, 0.70710677
    %v2671 = vmul.f32 %v2650, 0.70710677
    %v2672 = vmul.f32 %v2652, 0.70710677
    %v2673 = vmul.f32 %v2654, 0.70710677
    %v2674 = vmul.f32 %v2658, 0.70710677
    %v2675 = vmul.f32 %v2660, 0.70710677
    %v2676 = verf.f32.pop %v2670
    %v2677 = verf.f32.pop %v2671
    %v2678 = verf.f32.pop %v2672
    %v2679 = verf.f32.pop %v2673
    %v2680 = verf.f32.pop %v2674
    %v2681 = verf.f32.pop %v2675
    %v2682 = vadd.f32 %v2676, 1.0
    %v2683 = vadd.f32 %v2677, 1.0
    %v2684 = vadd.f32 %v2678, 1.0
    %v2685 = vadd.f32 %v2679, 1.0
    %v2686 = vadd.f32 %v2680, 1.0
    %v2687 = vadd.f32 %v2681, 1.0
    %v2688 = vmul.f32 %v2664, %v2682
    %v2689 = vmul.f32 %v2665, %v2683
    %v2690 = vmul.f32 %v2666, %v2684
    %v2691 = vmul.f32 %v2667, %v2685
    %v2692 = vmul.f32 %v2668, %v2686
    %v2693 = vmul.f32 %v2669, %v2687
    %v2694 = vpack.c.bf16 %v2690, %v2688
    %v2695 = vpack.c.bf16 %v2691, %v2689
    %v2696 = vpack.c.bf16 %v2692, %v2692
    %v2697 = vpack.c.bf16 %v2693, %v2693
    %v2698 = vld [vmem:[%s12] sm:$0xff]
    %v2699 = vld [vmem:[%s12 + $0x8] sm:$0xff]
    %v2700 = vld [vmem:[%s12 + $0x10] sm:$0xff]
    %v2701 = vld [vmem:[%s12 + $0x18] sm:$0xff]
    %v2702 = vld [vmem:[%s12 + $0x20] sm:$0xff]
    %v2703 = vld [vmem:[%s12 + $0x28] sm:$0xff]
    %v2704 = vld [vmem:[%s12 + $0x30] sm:$0xff]
    %v2705 = vld [vmem:[%s12 + $0x38] sm:$0xff]
    %v2706 = vld [vmem:[%s12 + $0x40] sm:$0xff]
    %v2707 = vld [vmem:[%s12 + $0x48] sm:$0xff]
    %v2708 = vld [vmem:[%s12 + $0x50] sm:$0xff]
    %v2709 = vld [vmem:[%s12 + $0x58] sm:$0xff]
    %v2710 = vld [vmem:[%s12 + $0x60] sm:$0xff]
    %v2711 = vld [vmem:[%s12 + $0x68] sm:$0xff]
    %v2712 = vld [vmem:[%s12 + $0x70] sm:$0xff]
    %v2713 = vld [vmem:[%s12 + $0x78] sm:$0xff]
    %v2714 = vld [vmem:[%s12 + $0x80] sm:$0xff]
    %v2715 = vld [vmem:[%s12 + $0x88] sm:$0xff]
    %v2716 = vld [vmem:[%s12 + $0x90] sm:$0xff]
    %v2717 = vld [vmem:[%s12 + $0x98] sm:$0xff]
    %v2718 = vld [vmem:[#allocation11] sm:$0x3]
    %v2720 = vlaneseq
    %v2721 = vshrl.u32 %v2720, 7
    %v2722 = vsub.s32 0, %v2721
    %v2723 = vrot.slane %v2718, %v2722
    %v2724 = vlaneseq
    %v2725 = vshrl.u32 %v2724, 7
    %v2726 = vsub.s32 1, %v2725
    %v2727 = vrot.slane %v2718, %v2726
    %v2750 = vunpack.c.l.b16 %v2698
    %v2751 = vunpack.c.h.b16 %v2698
    %v2752 = vunpack.c.l.b16 %v2699
    %v2753 = vunpack.c.h.b16 %v2699
    %v2754 = vunpack.c.l.b16 %v2700
    %v2755 = vunpack.c.h.b16 %v2700
    %v2756 = vunpack.c.l.b16 %v2701
    %v2757 = vunpack.c.h.b16 %v2701
    %v2758 = vunpack.c.l.b16 %v2702
    %v2759 = vunpack.c.h.b16 %v2702
    %v2760 = vunpack.c.l.b16 %v2703
    %v2761 = vunpack.c.h.b16 %v2703
    %v2762 = vunpack.c.l.b16 %v2704
    %v2763 = vunpack.c.h.b16 %v2704
    %v2764 = vunpack.c.l.b16 %v2705
    %v2765 = vunpack.c.h.b16 %v2705
    %v2766 = vunpack.c.l.b16 %v2706
    %v2767 = vunpack.c.h.b16 %v2706
    %v2768 = vunpack.c.l.b16 %v2707
    %v2769 = vunpack.c.h.b16 %v2707
    %v2770 = vunpack.c.l.b16 %v2708
    %v2771 = vunpack.c.h.b16 %v2708
    %v2772 = vunpack.c.l.b16 %v2709
    %v2773 = vunpack.c.h.b16 %v2709
    %v2774 = vunpack.c.l.b16 %v2710
    %v2775 = vunpack.c.h.b16 %v2710
    %v2776 = vunpack.c.l.b16 %v2711
    %v2777 = vunpack.c.h.b16 %v2711
    %v2778 = vunpack.c.l.b16 %v2712
    %v2779 = vunpack.c.h.b16 %v2712
    %v2780 = vunpack.c.l.b16 %v2713
    %v2781 = vunpack.c.h.b16 %v2713
    %v2782 = vunpack.c.l.b16 %v2714
    %v2783 = vunpack.c.h.b16 %v2714
    %v2784 = vunpack.c.l.b16 %v2715
    %v2785 = vunpack.c.h.b16 %v2715
    %v2786 = vunpack.c.l.b16 %v2716
    %v2787 = vunpack.c.h.b16 %v2716
    %v2788 = vunpack.c.l.b16 %v2717
    %v2789 = vunpack.c.h.b16 %v2717
    %v2790 = vpack.c.b16 %v2752, %v2750
    %v2791 = vpack.c.b16 %v2753, %v2751
    %v2792 = vpack.c.b16 %v2756, %v2754
    %v2793 = vpack.c.b16 %v2757, %v2755
    %v2794 = vpack.c.b16 %v2760, %v2758
    %v2795 = vpack.c.b16 %v2761, %v2759
    %v2796 = vpack.c.b16 %v2764, %v2762
    %v2797 = vpack.c.b16 %v2765, %v2763
    %v2798 = vpack.c.b16 %v2768, %v2766
    %v2799 = vpack.c.b16 %v2769, %v2767
    %v2800 = vpack.c.b16 %v2772, %v2770
    %v2801 = vpack.c.b16 %v2773, %v2771
    %v2802 = vpack.c.b16 %v2776, %v2774
    %v2803 = vpack.c.b16 %v2777, %v2775
    %v2804 = vpack.c.b16 %v2780, %v2778
    %v2805 = vpack.c.b16 %v2781, %v2779
    %v2806 = vpack.c.b16 %v2784, %v2782
    %v2807 = vpack.c.b16 %v2785, %v2783
    %v2808 = vpack.c.b16 %v2788, %v2786
    %v2809 = vpack.c.b16 %v2789, %v2787
    %v2831 = vsel %vm1211, %v2695, 0
    %v2834 = vsel %vm1211, %v2697, 0
    %2836 = vmatprep.subr.bf16.mxu0 %v2791
    %2837 = vmatpush1.bf16.msra.mxu0 %v2790
    %2838 = vmatprep.subr.bf16.mxu0 %v2793
    %2839 = vmatpush1.bf16.msra.mxu0 %v2792
    %2840 = vmatprep.subr.bf16.mxu0 %v2795
    %2841 = vmatpush1.bf16.msra.mxu0 %v2794
    %2842 = vmatprep.subr.bf16.mxu0 %v2797
    %2843 = vmatpush1.bf16.msra.mxu0 %v2796
    %2844 = vmatprep.subr.bf16.mxu0 %v2799
    %2845 = vmatpush1.bf16.msra.mxu0 %v2798
    %2846 = vmatprep.subr.bf16.mxu0 %v2801
    %2847 = vmatpush1.bf16.msra.mxu0 %v2800
    %2848 = vmatprep.subr.bf16.mxu0 %v2803
    %2849 = vmatpush1.bf16.msra.mxu0 %v2802
    %2850 = vmatprep.subr.bf16.mxu0 %v2805
    %2851 = vmatpush1.bf16.msra.mxu0 %v2804
    %2852 = vmatprep.subr.bf16.mxu0 %v2807
    %2853 = vmatpush1.bf16.msra.mxu0 %v2806
    %2854 = vmatprep.subr.bf16.mxu0 %v2809
    %2855 = vmatpush1.bf16.msra.mxu0 %v2808
    %2856 = vmatprep.subr.bf16.mxu0 0
    %2857 = vmatpush1.bf16.msra.mxu0 0
    %2858 = vmatprep.subr.bf16.mxu0 0
    %2859 = vmatpush1.bf16.msra.mxu0 0
    %2860 = vmatprep.subr.bf16.mxu0 0
    %2861 = vmatpush1.bf16.msra.mxu0 0
    %2862 = vmatprep.subr.bf16.mxu0 0
    %2863 = vmatpush1.bf16.msra.mxu0 0
    %2864 = vmatprep.subr.bf16.mxu0 0
    %2865 = vmatpush1.bf16.msra.mxu0 0
    %2866 = vmatprep.subr.bf16.mxu0 0
    %2867 = vmatpush1.bf16.msra.mxu0 0
    %2868 = vmatprep.mubr.bf16.mxu0 %v2831
    %2869 = vmatmul.mubr.bf16.gmra.mrb[0].mxu0 %v2694
    %v2870 = vpop.f32.mrb[0].mxu0
    %v2871 = vadd.f32 %v2723, %v2870
    %v2872 = vpop.f32.mrb[0].mxu0
    %v2873 = vadd.f32 %v2727, %v2872
    %v2874 = vpop.f32.mrb[0].mxu0
    %v2875 = vadd.f32 %v2723, %v2874
    %v2876 = vpop.f32.mrb[0].mxu0
    %v2877 = vadd.f32 %v2727, %v2876
    %2878 = vmatprep.mubr.bf16.mxu0 %v2834
    %2879 = vmatmul.mubr.bf16.gmra.mrb[0].mxu0 %v2696
    %v2880 = vpop.f32.mrb[0].mxu0
    %v2881 = vadd.f32 %v2723, %v2880
    %v2882 = vpop.f32.mrb[0].mxu0
    %v2883 = vadd.f32 %v2727, %v2882
    %v2884 = vpop.f32.mrb[0].mxu0
    %v2885 = vpop.f32.mrb[0].mxu0
    %2886 = vdwg.mxu0
    %v2887 = vpack.c.bf16 %v2875, %v2871
    %v2888 = vpack.c.bf16 %v2877, %v2873
    %v2889 = vpack.c.bf16 %v2881, %v2881
    %v2890 = vpack.c.bf16 %v2883, %v2883
    %v2891 = vld [vmem:[%s14] sm:$0xff]
    %v2892 = vld [vmem:[%s14 + $0x8] sm:$0xff]
    %v2893 = vld [vmem:[%s14 + $0x10] sm:$0xff]
    %v2894 = vld [vmem:[%s14 + $0x18] sm:$0xff]
    %v2895 = vld [vmem:[%s14 + $0x20] sm:$0xff]
    %v2896 = vld [vmem:[%s14 + $0x28] sm:$0xff]
    %v2897 = vld [vmem:[%s14 + $0x30] sm:$0xff]
    %v2898 = vld [vmem:[%s14 + $0x38] sm:$0xff]
    %v2899 = vld [vmem:[%s14 + $0x40] sm:$0xff]
    %v2900 = vld [vmem:[%s14 + $0x48] sm:$0xff]
    %v2901 = vld [vmem:[%s14 + $0x50] sm:$0xff]
    %v2902 = vld [vmem:[%s14 + $0x58] sm:$0xff]
    %v2903 = vld [vmem:[%s14 + $0x60] sm:$0xff]
    %v2904 = vld [vmem:[%s14 + $0x68] sm:$0xff]
    %v2905 = vld [vmem:[%s14 + $0x70] sm:$0xff]
    %v2906 = vld [vmem:[%s14 + $0x78] sm:$0xff]
    %v2907 = vld [vmem:[%s14 + $0x80] sm:$0xff]
    %v2908 = vld [vmem:[%s14 + $0x88] sm:$0xff]
    %v2909 = vld [vmem:[%s14 + $0x90] sm:$0xff]
    %v2910 = vld [vmem:[%s14 + $0x98] sm:$0xff]
    %v2911 = vld [vmem:[#allocation13] sm:$0x3]
    %v2913 = vlaneseq
    %v2914 = vshrl.u32 %v2913, 7
    %v2915 = vsub.s32 0, %v2914
    %v2916 = vrot.slane %v2911, %v2915
    %v2917 = vlaneseq
    %v2918 = vshrl.u32 %v2917, 7
    %v2919 = vsub.s32 1, %v2918
    %v2920 = vrot.slane %v2911, %v2919
    %v2921 = vcombine.low %v2916, %v2920
    %v2922 = vcombine.high %v2916, %v2920
    %v2924 = vunpack.c.l.s4 1983009808
    %v2925 = vunpack.c.0.s8 %v2924
    %v2926 = vlaneseq
    %v2927 = vshrl.u32 %v2926, 7
    %v2928 = vsub.s32 %v2925, %v2927
    %v2929 = vrot.slane %v2921, %v2928
    %v2931 = vunpack.c.l.s4 1983009808
    %v2932 = vunpack.c.0.s8 %v2931
    %v2933 = vlaneseq
    %v2934 = vshrl.u32 %v2933, 7
    %v2935 = vsub.s32 %v2932, %v2934
    %v2936 = vrot.slane %v2922, %v2935
    %v2937 = vcombine.high %v2929, %v2929
    %v2938 = vcombine.high %v2936, %v2936
    %v2943 = vmul.f32 %v2459, %v2929
    %v2944 = vmul.f32 %v2462, %v2937
    %v2945 = vmul.f32 %v2465, %v2936
    %v2946 = vmul.f32 %v2468, %v2938
    %v2947 = vmul.f32 %v2471, %v2929
    %v2948 = vmul.f32 %v2474, %v2937
    %v2949 = vmul.f32 %v2477, %v2936
    %v2950 = vmul.f32 %v2480, %v2938
    %v2951 = vmul.f32 %v2483, %v2929
    %v2952 = vmul.f32 %v2486, %v2937
    %v2973 = vunpack.c.l.b16 %v2891
    %v2974 = vunpack.c.h.b16 %v2891
    %v2975 = vunpack.c.l.b16 %v2892
    %v2976 = vunpack.c.h.b16 %v2892
    %v2977 = vunpack.c.l.b16 %v2893
    %v2978 = vunpack.c.h.b16 %v2893
    %v2979 = vunpack.c.l.b16 %v2894
    %v2980 = vunpack.c.h.b16 %v2894
    %v2981 = vunpack.c.l.b16 %v2895
    %v2982 = vunpack.c.h.b16 %v2895
    %v2983 = vunpack.c.l.b16 %v2896
    %v2984 = vunpack.c.h.b16 %v2896
    %v2985 = vunpack.c.l.b16 %v2897
    %v2986 = vunpack.c.h.b16 %v2897
    %v2987 = vunpack.c.l.b16 %v2898
    %v2988 = vunpack.c.h.b16 %v2898
    %v2989 = vunpack.c.l.b16 %v2899
    %v2990 = vunpack.c.h.b16 %v2899
    %v2991 = vunpack.c.l.b16 %v2900
    %v2992 = vunpack.c.h.b16 %v2900
    %v2993 = vunpack.c.l.b16 %v2901
    %v2994 = vunpack.c.h.b16 %v2901
    %v2995 = vunpack.c.l.b16 %v2902
    %v2996 = vunpack.c.h.b16 %v2902
    %v2997 = vunpack.c.l.b16 %v2903
    %v2998 = vunpack.c.h.b16 %v2903
    %v2999 = vunpack.c.l.b16 %v2904
    %v3000 = vunpack.c.h.b16 %v2904
    %v3001 = vunpack.c.l.b16 %v2905
    %v3002 = vunpack.c.h.b16 %v2905
    %v3003 = vunpack.c.l.b16 %v2906
    %v3004 = vunpack.c.h.b16 %v2906
    %v3005 = vunpack.c.l.b16 %v2907
    %v3006 = vunpack.c.h.b16 %v2907
    %v3007 = vunpack.c.l.b16 %v2908
    %v3008 = vunpack.c.h.b16 %v2908
    %v3009 = vunpack.c.l.b16 %v2909
    %v3010 = vunpack.c.h.b16 %v2909
    %v3011 = vunpack.c.l.b16 %v2910
    %v3012 = vunpack.c.h.b16 %v2910
    %v3013 = vpack.c.b16 %v2975, %v2973
    %v3014 = vpack.c.b16 %v2976, %v2974
    %v3015 = vpack.c.b16 %v2979, %v2977
    %v3016 = vpack.c.b16 %v2980, %v2978
    %v3017 = vpack.c.b16 %v2983, %v2981
    %v3018 = vpack.c.b16 %v2984, %v2982
    %v3019 = vpack.c.b16 %v2987, %v2985
    %v3020 = vpack.c.b16 %v2988, %v2986
    %v3021 = vpack.c.b16 %v2991, %v2989
    %v3022 = vpack.c.b16 %v2992, %v2990
    %v3023 = vpack.c.b16 %v2995, %v2993
    %v3024 = vpack.c.b16 %v2996, %v2994
    %v3025 = vpack.c.b16 %v2999, %v2997
    %v3026 = vpack.c.b16 %v3000, %v2998
    %v3027 = vpack.c.b16 %v3003, %v3001
    %v3028 = vpack.c.b16 %v3004, %v3002
    %v3029 = vpack.c.b16 %v3007, %v3005
    %v3030 = vpack.c.b16 %v3008, %v3006
    %v3031 = vpack.c.b16 %v3011, %v3009
    %v3032 = vpack.c.b16 %v3012, %v3010
    %v3063 = vcombine.low %v2943, %v2944
    %v3064 = vcombine.low %v2945, %v2946
    %v3066 = vunpack.c.l.s4 1983009808
    %v3067 = vunpack.c.0.s8 %v3066
    %v3068 = vlaneseq
    %v3069 = vshrl.u32 %v3068, 7
    %v3070 = vsub.s32 %v3067, %v3069
    %v3071 = vrot.slane %v3063, %v3070
    %v3073 = vunpack.c.l.s4 1983009808
    %v3074 = vunpack.c.0.s8 %v3073
    %v3075 = vlaneseq
    %v3076 = vshrl.u32 %v3075, 7
    %v3077 = vsub.s32 %v3074, %v3076
    %v3078 = vrot.slane %v3064, %v3077
    %v3079 = vcombine.low %v3071, %v3078
    %v3080 = vcombine.high %v3071, %v3078
    %v3081 = vcombine.low %v2947, %v2948
    %v3082 = vcombine.low %v2949, %v2950
    %v3084 = vunpack.c.l.s4 1983009808
    %v3085 = vunpack.c.0.s8 %v3084
    %v3086 = vlaneseq
    %v3087 = vshrl.u32 %v3086, 7
    %v3088 = vsub.s32 %v3085, %v3087
    %v3089 = vrot.slane %v3081, %v3088
    %v3091 = vunpack.c.l.s4 1983009808
    %v3092 = vunpack.c.0.s8 %v3091
    %v3093 = vlaneseq
    %v3094 = vshrl.u32 %v3093, 7
    %v3095 = vsub.s32 %v3092, %v3094
    %v3096 = vrot.slane %v3082, %v3095
    %v3097 = vcombine.low %v3089, %v3096
    %v3098 = vcombine.high %v3089, %v3096
    %v3099 = vcombine.low %v2951, %v2952
    %v3101 = vunpack.c.l.s4 1983009808
    %v3102 = vunpack.c.0.s8 %v3101
    %v3103 = vlaneseq
    %v3104 = vshrl.u32 %v3103, 7
    %v3105 = vsub.s32 %v3102, %v3104
    %v3106 = vrot.slane %v3099, %v3105
    %v3107 = vcombine.high %v3106, %v3106
    %v3115 = vsel %vm1211, %v2888, 0
    %v3118 = vsel %vm1211, %v2890, 0
    %3120 = vmatprep.subr.bf16.mxu0 %v3014
    %3121 = vmatpush1.bf16.msra.mxu0 %v3013
    %3122 = vmatprep.subr.bf16.mxu0 %v3016
    %3123 = vmatpush1.bf16.msra.mxu0 %v3015
    %3124 = vmatprep.subr.bf16.mxu0 %v3018
    %3125 = vmatpush1.bf16.msra.mxu0 %v3017
    %3126 = vmatprep.subr.bf16.mxu0 %v3020
    %3127 = vmatpush1.bf16.msra.mxu0 %v3019
    %3128 = vmatprep.subr.bf16.mxu0 %v3022
    %3129 = vmatpush1.bf16.msra.mxu0 %v3021
    %3130 = vmatprep.subr.bf16.mxu0 %v3024
    %3131 = vmatpush1.bf16.msra.mxu0 %v3023
    %3132 = vmatprep.subr.bf16.mxu0 %v3026
    %3133 = vmatpush1.bf16.msra.mxu0 %v3025
    %3134 = vmatprep.subr.bf16.mxu0 %v3028
    %3135 = vmatpush1.bf16.msra.mxu0 %v3027
    %3136 = vmatprep.subr.bf16.mxu0 %v3030
    %3137 = vmatpush1.bf16.msra.mxu0 %v3029
    %3138 = vmatprep.subr.bf16.mxu0 %v3032
    %3139 = vmatpush1.bf16.msra.mxu0 %v3031
    %3140 = vmatprep.subr.bf16.mxu0 0
    %3141 = vmatpush1.bf16.msra.mxu0 0
    %3142 = vmatprep.subr.bf16.mxu0 0
    %3143 = vmatpush1.bf16.msra.mxu0 0
    %3144 = vmatprep.subr.bf16.mxu0 0
    %3145 = vmatpush1.bf16.msra.mxu0 0
    %3146 = vmatprep.subr.bf16.mxu0 0
    %3147 = vmatpush1.bf16.msra.mxu0 0
    %3148 = vmatprep.subr.bf16.mxu0 0
    %3149 = vmatpush1.bf16.msra.mxu0 0
    %3150 = vmatprep.subr.bf16.mxu0 0
    %3151 = vmatpush1.bf16.msra.mxu0 0
    %3152 = vmatprep.mubr.bf16.mxu0 %v3115
    %3153 = vmatmul.mubr.bf16.gmra.mrb[0].mxu0 %v2887
    %v3154 = vpop.f32.mrb[0].mxu0
    %v3155 = vadd.f32 %v3079, %v3154
    %v3156 = vpop.f32.mrb[0].mxu0
    %v3157 = vadd.f32 %v3080, %v3156
    %v3158 = vpop.f32.mrb[0].mxu0
    %v3159 = vadd.f32 %v3097, %v3158
    %v3160 = vpop.f32.mrb[0].mxu0
    %v3161 = vadd.f32 %v3098, %v3160
    %3162 = vmatprep.mubr.bf16.mxu0 %v3118
    %3163 = vmatmul.mubr.bf16.gmra.mrb[0].mxu0 %v2889
    %v3164 = vpop.f32.mrb[0].mxu0
    %v3165 = vadd.f32 %v3106, %v3164
    %v3166 = vpop.f32.mrb[0].mxu0
    %v3167 = vadd.f32 %v3107, %v3166
    %v3168 = vpop.f32.mrb[0].mxu0
    %v3169 = vpop.f32.mrb[0].mxu0
    %3170 = vdwg.mxu0
    %v3171 = vld [vmem:[#allocation14] sm:$0x3]
    %v3173 = vlaneseq
    %v3174 = vshrl.u32 %v3173, 7
    %v3175 = vsub.s32 0, %v3174
    %v3176 = vrot.slane %v3171, %v3175
    %v3177 = vlaneseq
    %v3178 = vshrl.u32 %v3177, 7
    %v3179 = vsub.s32 1, %v3178
    %v3180 = vrot.slane %v3171, %v3179
    %v3183 = vadd.f32 %v3155, %v3176
    %v3184 = vadd.f32 %v3157, %v3180
    %v3185 = vadd.f32 %v3159, %v3176
    %v3186 = vadd.f32 %v3161, %v3180
    %v3187 = vadd.f32 %v3165, %v3176
    %v3188 = vadd.f32 %v3167, %v3180
    %v3189 = vmul.f32 %v3183, 0.5
    %v3190 = vmul.f32 %v3184, 0.5
    %v3191 = vmul.f32 %v3185, 0.5
    %v3192 = vmul.f32 %v3186, 0.5
    %v3193 = vmul.f32 %v3187, 0.5
    %v3194 = vmul.f32 %v3188, 0.5
    %v3195 = vmul.f32 %v3183, 0.70710677
    %v3196 = vmul.f32 %v3184, 0.70710677
    %v3197 = vmul.f32 %v3185, 0.70710677
    %v3198 = vmul.f32 %v3186, 0.70710677
    %v3199 = vmul.f32 %v3187, 0.70710677
    %v3200 = vmul.f32 %v3188, 0.70710677
    %v3201 = verf.f32.pop %v3195
    %v3202 = verf.f32.pop %v3196
    %v3203 = verf.f32.pop %v3197
    %v3204 = verf.f32.pop %v3198
    %v3205 = verf.f32.pop %v3199
    %v3206 = verf.f32.pop %v3200
    %v3207 = vadd.f32 %v3201, 1.0
    %v3208 = vadd.f32 %v3202, 1.0
    %v3209 = vadd.f32 %v3203, 1.0
    %v3210 = vadd.f32 %v3204, 1.0
    %v3211 = vadd.f32 %v3205, 1.0
    %v3212 = vadd.f32 %v3206, 1.0
    %v3213 = vmul.f32 %v3189, %v3207
    %v3214 = vmul.f32 %v3190, %v3208
    %v3215 = vmul.f32 %v3191, %v3209
    %v3216 = vmul.f32 %v3192, %v3210
    %v3217 = vmul.f32 %v3193, %v3211
    %v3218 = vmul.f32 %v3194, %v3212
    %v3219 = vpack.c.bf16 %v3215, %v3213
    %v3220 = vpack.c.bf16 %v3216, %v3214
    %v3221 = vpack.c.bf16 %v3217, %v3217
    %v3222 = vpack.c.bf16 %v3218, %v3218
    %v3223 = vld [vmem:[#allocation16] sm:$0xff]
    %v3224 = vld [vmem:[#allocation16 + $0x8] sm:$0xff]
    %v3225 = vld [vmem:[#allocation16 + $0x10] sm:$0xff]
    %v3226 = vld [vmem:[#allocation16 + $0x18] sm:$0xff]
    %v3227 = vld [vmem:[#allocation16 + $0x20] sm:$0xff]
    %v3228 = vld [vmem:[#allocation16 + $0x28] sm:$0xff]
    %v3229 = vld [vmem:[#allocation16 + $0x30] sm:$0xff]
    %v3230 = vld [vmem:[#allocation16 + $0x38] sm:$0xff]
    %v3231 = vld [vmem:[#allocation16 + $0x40] sm:$0xff]
    %v3232 = vld [vmem:[#allocation16 + $0x48] sm:$0xff]
    %v3233 = vld [vmem:[#allocation16 + $0x50] sm:$0xff]
    %v3234 = vld [vmem:[#allocation16 + $0x58] sm:$0xff]
    %v3235 = vld [vmem:[#allocation16 + $0x60] sm:$0xff]
    %v3236 = vld [vmem:[#allocation16 + $0x68] sm:$0xff]
    %v3237 = vld [vmem:[#allocation16 + $0x70] sm:$0xff]
    %v3238 = vld [vmem:[#allocation16 + $0x78] sm:$0xff]
    %v3239 = vld [vmem:[#allocation16 + $0x80] sm:$0xff]
    %v3240 = vld [vmem:[#allocation16 + $0x88] sm:$0xff]
    %v3241 = vld [vmem:[#allocation16 + $0x90] sm:$0xff]
    %v3242 = vld [vmem:[#allocation17] sm:$0x3]
    %v3244 = vlaneseq
    %v3245 = vshrl.u32 %v3244, 7
    %v3246 = vsub.s32 0, %v3245
    %v3247 = vrot.slane %v3242, %v3246
    %v3248 = vlaneseq
    %v3249 = vshrl.u32 %v3248, 7
    %v3250 = vsub.s32 1, %v3249
    %v3251 = vrot.slane %v3242, %v3250
    %v3273 = vunpack.c.l.b16 %v3223
    %v3274 = vunpack.c.h.b16 %v3223
    %v3275 = vunpack.c.l.b16 %v3224
    %v3276 = vunpack.c.h.b16 %v3224
    %v3277 = vunpack.c.l.b16 %v3225
    %v3278 = vunpack.c.h.b16 %v3225
    %v3279 = vunpack.c.l.b16 %v3226
    %v3280 = vunpack.c.h.b16 %v3226
    %v3281 = vunpack.c.l.b16 %v3227
    %v3282 = vunpack.c.h.b16 %v3227
    %v3283 = vunpack.c.l.b16 %v3228
    %v3284 = vunpack.c.h.b16 %v3228
    %v3285 = vunpack.c.l.b16 %v3229
    %v3286 = vunpack.c.h.b16 %v3229
    %v3287 = vunpack.c.l.b16 %v3230
    %v3288 = vunpack.c.h.b16 %v3230
    %v3289 = vunpack.c.l.b16 %v3231
    %v3290 = vunpack.c.h.b16 %v3231
    %v3291 = vunpack.c.l.b16 %v3232
    %v3292 = vunpack.c.h.b16 %v3232
    %v3293 = vunpack.c.l.b16 %v3233
    %v3294 = vunpack.c.h.b16 %v3233
    %v3295 = vunpack.c.l.b16 %v3234
    %v3296 = vunpack.c.h.b16 %v3234
    %v3297 = vunpack.c.l.b16 %v3235
    %v3298 = vunpack.c.h.b16 %v3235
    %v3299 = vunpack.c.l.b16 %v3236
    %v3300 = vunpack.c.h.b16 %v3236
    %v3301 = vunpack.c.l.b16 %v3237
    %v3302 = vunpack.c.h.b16 %v3237
    %v3303 = vunpack.c.l.b16 %v3238
    %v3304 = vunpack.c.h.b16 %v3238
    %v3305 = vunpack.c.l.b16 %v3239
    %v3306 = vunpack.c.h.b16 %v3239
    %v3307 = vunpack.c.l.b16 %v3240
    %v3308 = vunpack.c.h.b16 %v3240
    %v3309 = vunpack.c.l.b16 %v3241
    %v3310 = vunpack.c.h.b16 %v3241
    %v3311 = vpack.c.b16 %v3275, %v3273
    %v3312 = vpack.c.b16 %v3276, %v3274
    %v3313 = vpack.c.b16 %v3279, %v3277
    %v3314 = vpack.c.b16 %v3280, %v3278
    %v3315 = vpack.c.b16 %v3283, %v3281
    %v3316 = vpack.c.b16 %v3284, %v3282
    %v3317 = vpack.c.b16 %v3287, %v3285
    %v3318 = vpack.c.b16 %v3288, %v3286
    %v3319 = vpack.c.b16 %v3291, %v3289
    %v3320 = vpack.c.b16 %v3292, %v3290
    %v3321 = vpack.c.b16 %v3295, %v3293
    %v3322 = vpack.c.b16 %v3296, %v3294
    %v3323 = vpack.c.b16 %v3299, %v3297
    %v3324 = vpack.c.b16 %v3300, %v3298
    %v3325 = vpack.c.b16 %v3303, %v3301
    %v3326 = vpack.c.b16 %v3304, %v3302
    %v3327 = vpack.c.b16 %v3307, %v3305
    %v3328 = vpack.c.b16 %v3308, %v3306
    %v3329 = vpack.c.b16 %v3309, %v3309
    %v3330 = vpack.c.b16 %v3310, %v3310
    %vm3349 = vcmask 195584
    %v3351 = vsel %vm3349, %v3220, 0
    %v3354 = vsel %vm3349, %v3222, 0
    %v3357 = vsel %vm364, %v3329, 0
    %v3360 = vsel %vm364, %v3330, 0
    %3362 = vmatprep.subr.bf16.mxu0 %v3312
    %3363 = vmatpush1.bf16.msra.mxu0 %v3311
    %3364 = vmatprep.subr.bf16.mxu0 %v3314
    %3365 = vmatpush1.bf16.msra.mxu0 %v3313
    %3366 = vmatprep.subr.bf16.mxu0 %v3316
    %3367 = vmatpush1.bf16.msra.mxu0 %v3315
    %3368 = vmatprep.subr.bf16.mxu0 %v3318
    %3369 = vmatpush1.bf16.msra.mxu0 %v3317
    %3370 = vmatprep.subr.bf16.mxu0 %v3320
    %3371 = vmatpush1.bf16.msra.mxu0 %v3319
    %3372 = vmatprep.subr.bf16.mxu0 %v3322
    %3373 = vmatpush1.bf16.msra.mxu0 %v3321
    %3374 = vmatprep.subr.bf16.mxu0 %v3324
    %3375 = vmatpush1.bf16.msra.mxu0 %v3323
    %3376 = vmatprep.subr.bf16.mxu0 %v3326
    %3377 = vmatpush1.bf16.msra.mxu0 %v3325
    %3378 = vmatprep.subr.bf16.mxu0 %v3328
    %3379 = vmatpush1.bf16.msra.mxu0 %v3327
    %3380 = vmatprep.subr.bf16.mxu0 %v3360
    %3381 = vmatpush1.bf16.msra.mxu0 %v3357
    %3382 = vmatprep.subr.bf16.mxu0 0
    %3383 = vmatpush1.bf16.msra.mxu0 0
    %3384 = vmatprep.subr.bf16.mxu0 0
    %3385 = vmatpush1.bf16.msra.mxu0 0
    %3386 = vmatprep.subr.bf16.mxu0 0
    %3387 = vmatpush1.bf16.msra.mxu0 0
    %3388 = vmatprep.subr.bf16.mxu0 0
    %3389 = vmatpush1.bf16.msra.mxu0 0
    %3390 = vmatprep.subr.bf16.mxu0 0
    %3391 = vmatpush1.bf16.msra.mxu0 0
    %3392 = vmatprep.subr.bf16.mxu0 0
    %3393 = vmatpush1.bf16.msra.mxu0 0
    %3394 = vmatprep.mubr.bf16.mxu0 %v3351
    %3395 = vmatmul.mubr.bf16.gmra.mrb[0].mxu0 %v3219
    %v3396 = vpop.f32.mrb[0].mxu0
    %v3397 = vadd.f32 %v3247, %v3396
    %v3398 = vpop.f32.mrb[0].mxu0
    %v3399 = vadd.f32 %v3251, %v3398
    %v3400 = vpop.f32.mrb[0].mxu0
    %v3401 = vadd.f32 %v3247, %v3400
    %v3402 = vpop.f32.mrb[0].mxu0
    %v3403 = vadd.f32 %v3251, %v3402
    %3404 = vmatprep.mubr.bf16.mxu0 %v3354
    %3405 = vmatmul.mubr.bf16.gmra.mrb[0].mxu0 %v3221
    %v3406 = vpop.f32.mrb[0].mxu0
    %v3407 = vadd.f32 %v3247, %v3406
    %v3408 = vpop.f32.mrb[0].mxu0
    %v3409 = vadd.f32 %v3251, %v3408
    %v3410 = vpop.f32.mrb[0].mxu0
    %v3411 = vpop.f32.mrb[0].mxu0
    %3412 = vdwg.mxu0
    %v3413 = vmul.f32 %v3397, 0.5
    %v3414 = vmul.f32 %v3399, 0.5
    %v3415 = vmul.f32 %v3401, 0.5
    %v3416 = vmul.f32 %v3403, 0.5
    %v3417 = vmul.f32 %v3407, 0.5
    %v3418 = vmul.f32 %v3409, 0.5
    %v3419 = vmul.f32 %v3397, 0.70710677
    %v3420 = vmul.f32 %v3399, 0.70710677
    %v3421 = vmul.f32 %v3401, 0.70710677
    %v3422 = vmul.f32 %v3403, 0.70710677
    %v3423 = vmul.f32 %v3407, 0.70710677
    %v3424 = vmul.f32 %v3409, 0.70710677
    %v3425 = verf.f32.pop %v3419
    %v3426 = verf.f32.pop %v3420
    %v3427 = verf.f32.pop %v3421
    %v3428 = verf.f32.pop %v3422
    %v3429 = verf.f32.pop %v3423
    %v3430 = verf.f32.pop %v3424
    %v3431 = vadd.f32 %v3425, 1.0
    %v3432 = vadd.f32 %v3426, 1.0
    %v3433 = vadd.f32 %v3427, 1.0
    %v3434 = vadd.f32 %v3428, 1.0
    %v3435 = vadd.f32 %v3429, 1.0
    %v3436 = vadd.f32 %v3430, 1.0
    %v3437 = vmul.f32 %v3413, %v3431
    %v3438 = vmul.f32 %v3414, %v3432
    %v3439 = vmul.f32 %v3415, %v3433
    %v3440 = vmul.f32 %v3416, %v3434
    %v3441 = vmul.f32 %v3417, %v3435
    %v3442 = vmul.f32 %v3418, %v3436
    %v3443 = vpack.c.bf16 %v3439, %v3437
    %v3444 = vpack.c.bf16 %v3440, %v3438
    %v3445 = vpack.c.bf16 %v3441, %v3441
    %v3446 = vpack.c.bf16 %v3442, %v3442
    %v3447 = vld [vmem:[#allocation19] sm:$0xf]
    %v3448 = vld [vmem:[#allocation19 + $0x4] sm:$0xf]
    %v3449 = vld [vmem:[#allocation19 + $0x8] sm:$0xf]
    %v3450 = vld [vmem:[#allocation19 + $0xc] sm:$0xf]
    %v3451 = vld [vmem:[#allocation19 + $0x10] sm:$0xf]
    %v3452 = vld [vmem:[#allocation19 + $0x14] sm:$0xf]
    %v3453 = vld [vmem:[#allocation19 + $0x18] sm:$0xf]
    %v3454 = vld [vmem:[#allocation19 + $0x1c] sm:$0xf]
    %v3455 = vld [vmem:[#allocation19 + $0x20] sm:$0xf]
    %v3456 = vld [vmem:[#allocation19 + $0x24] sm:$0xf]
    %v3457 = vld [vmem:[#allocation19 + $0x28] sm:$0xf]
    %v3458 = vld [vmem:[#allocation19 + $0x2c] sm:$0xf]
    %v3459 = vld [vmem:[#allocation19 + $0x30] sm:$0xf]
    %v3460 = vld [vmem:[#allocation19 + $0x34] sm:$0xf]
    %v3461 = vld [vmem:[#allocation19 + $0x38] sm:$0xf]
    %v3462 = vld [vmem:[#allocation19 + $0x3c] sm:$0xf]
    %v3463 = vld [vmem:[#allocation19 + $0x40] sm:$0xf]
    %v3464 = vld [vmem:[#allocation19 + $0x44] sm:$0xf]
    %v3465 = vld [vmem:[#allocation19 + $0x48] sm:$0xf]
    %v3466 = vld [vmem:[#allocation20] sm:$0x1]
    %v3468 = vlaneseq
    %v3469 = vshrl.u32 %v3468, 7
    %v3470 = vsub.s32 0, %v3469
    %v3471 = vrot.slane %v3466, %v3470
    %v3492 = vunpack.c.l.b16 %v3447
    %v3493 = vunpack.c.l.b16 %v3448
    %v3494 = vunpack.c.l.b16 %v3449
    %v3495 = vunpack.c.l.b16 %v3450
    %v3496 = vunpack.c.l.b16 %v3451
    %v3497 = vunpack.c.l.b16 %v3452
    %v3498 = vunpack.c.l.b16 %v3453
    %v3499 = vunpack.c.l.b16 %v3454
    %v3500 = vunpack.c.l.b16 %v3455
    %v3501 = vunpack.c.l.b16 %v3456
    %v3502 = vunpack.c.l.b16 %v3457
    %v3503 = vunpack.c.l.b16 %v3458
    %v3504 = vunpack.c.l.b16 %v3459
    %v3505 = vunpack.c.l.b16 %v3460
    %v3506 = vunpack.c.l.b16 %v3461
    %v3507 = vunpack.c.l.b16 %v3462
    %v3508 = vunpack.c.l.b16 %v3463
    %v3509 = vunpack.c.l.b16 %v3464
    %v3510 = vunpack.c.l.b16 %v3465
    %v3511 = vpack.c.b16 %v3493, %v3492
    %v3512 = vpack.c.b16 %v3495, %v3494
    %v3513 = vpack.c.b16 %v3497, %v3496
    %v3514 = vpack.c.b16 %v3499, %v3498
    %v3515 = vpack.c.b16 %v3501, %v3500
    %v3516 = vpack.c.b16 %v3503, %v3502
    %v3517 = vpack.c.b16 %v3505, %v3504
    %v3518 = vpack.c.b16 %v3507, %v3506
    %v3519 = vpack.c.b16 %v3509, %v3508
    %v3520 = vpack.c.b16 %v3510, %v3510
    %v3531 = vsel %vm3349, %v3444, 0
    %v3534 = vsel %vm3349, %v3446, 0
    %v3537 = vsel %vm364, %v3520, 0
    %3539 = vmatprep.subr.bf16.mxu0 0
    %3540 = vmatpush1.bf16.msra.mxu0 %v3511
    %3541 = vmatprep.subr.bf16.mxu0 0
    %3542 = vmatpush1.bf16.msra.mxu0 %v3512
    %3543 = vmatprep.subr.bf16.mxu0 0
    %3544 = vmatpush1.bf16.msra.mxu0 %v3513
    %3545 = vmatprep.subr.bf16.mxu0 0
    %3546 = vmatpush1.bf16.msra.mxu0 %v3514
    %3547 = vmatprep.subr.bf16.mxu0 0
    %3548 = vmatpush1.bf16.msra.mxu0 %v3515
    %3549 = vmatprep.subr.bf16.mxu0 0
    %3550 = vmatpush1.bf16.msra.mxu0 %v3516
    %3551 = vmatprep.subr.bf16.mxu0 0
    %3552 = vmatpush1.bf16.msra.mxu0 %v3517
    %3553 = vmatprep.subr.bf16.mxu0 0
    %3554 = vmatpush1.bf16.msra.mxu0 %v3518
    %3555 = vmatprep.subr.bf16.mxu0 0
    %3556 = vmatpush1.bf16.msra.mxu0 %v3519
    %3557 = vmatprep.subr.bf16.mxu0 0
    %3558 = vmatpush1.bf16.msra.mxu0 %v3537
    %3559 = vmatprep.subr.bf16.mxu0 0
    %3560 = vmatpush1.bf16.msra.mxu0 0
    %3561 = vmatprep.subr.bf16.mxu0 0
    %3562 = vmatpush1.bf16.msra.mxu0 0
    %3563 = vmatprep.subr.bf16.mxu0 0
    %3564 = vmatpush1.bf16.msra.mxu0 0
    %3565 = vmatprep.subr.bf16.mxu0 0
    %3566 = vmatpush1.bf16.msra.mxu0 0
    %3567 = vmatprep.subr.bf16.mxu0 0
    %3568 = vmatpush1.bf16.msra.mxu0 0
    %3569 = vmatprep.subr.bf16.mxu0 0
    %3570 = vmatpush1.bf16.msra.mxu0 0
    %3571 = vmatprep.mubr.bf16.mxu0 %v3531
    %3572 = vmatmul.mubr.bf16.gmra.mrb[0].mxu0 %v3443
    %v3573 = vpop.f32.mrb[0].mxu0
    %v3574 = vadd.f32 %v3471, %v3573
    %v3575 = vpop.f32.mrb[0].mxu0
    %v3576 = vpop.f32.mrb[0].mxu0
    %v3577 = vadd.f32 %v3471, %v3576
    %v3578 = vpop.f32.mrb[0].mxu0
    %3579 = vmatprep.mubr.bf16.mxu0 %v3534
    %3580 = vmatmul.mubr.bf16.gmra.mrb[0].mxu0 %v3445
    %v3581 = vpop.f32.mrb[0].mxu0
    %v3582 = vadd.f32 %v3471, %v3581
    %v3583 = vpop.f32.mrb[0].mxu0
    %v3584 = vpop.f32.mrb[0].mxu0
    %v3585 = vpop.f32.mrb[0].mxu0
    %3586 = vdwg.mxu0
    %3587 = vmax.xlane.f32.xlu0 %v3574
    %v3588 = vpop.xlane.xlu0 %3587
    %3589 = vmax.xlane.f32.xlu0 %v3577
    %v3590 = vpop.xlane.xlu0 %3589
    %v3591 = vsel %vm364, %v3582, -inf
    %3592 = vmax.xlane.f32.xlu0 %v3591
    %v3593 = vpop.xlane.xlu0 %3592
    %v3594 = vsub.f32 %v3574, %v3588
    %v3595 = vsub.f32 %v3577, %v3590
    %v3596 = vsub.f32 %v3582, %v3593
    %v3597 = vmul.f32 %v3594, 1.442695
    %v3598 = vpow.pop %v3597
    %v3599 = vmul.f32 %v3595, 1.442695
    %v3600 = vpow.pop %v3599
    %v3601 = vmul.f32 %v3596, 1.442695
    %v3602 = vpow.pop %v3601
    %3603 = vadd.xlane.f32.xlu0 %v3598
    %v3604 = vpop.xlane.xlu0 %3603
    %3605 = vadd.xlane.f32.xlu0 %v3600
    %v3606 = vpop.xlane.xlu0 %3605
    %v3607 = vsel %vm364, %v3602, 0.0
    %3608 = vadd.xlane.f32.xlu0 %v3607
    %v3609 = vpop.xlane.xlu0 %3608
    %v3610 = vrcp.pop %v3604
    %v3611 = vrcp.pop %v3606
    %v3612 = vrcp.pop %v3609
    %v3613 = vmul.f32 %v3598, %v3610
    %v3614 = vmul.f32 %v3600, %v3611
    %v3615 = vmul.f32 %v3602, %v3612
    %v3616 = vld [vmem:[%s3] sm:$0x1]
    %v3617 = vld [vmem:[%s3 + $0x1] sm:$0x1]
    %v3618 = vld [vmem:[%s3 + $0x2] sm:$0x1]
    %v3619 = vld [vmem:[%s3 + $0x3] sm:$0x1]
    %v3620 = vld [vmem:[%s3 + $0x4] sm:$0x1]
    %v3621 = vld [vmem:[%s3 + $0x5] sm:$0x1]
    %v3622 = vld [vmem:[%s3 + $0x6] sm:$0x1]
    %v3623 = vld [vmem:[%s3 + $0x7] sm:$0x1]
    %v3624 = vld [vmem:[%s3 + $0x8] sm:$0x1]
    %v3625 = vld [vmem:[%s3 + $0x9] sm:$0x1]
    %v3626 = vld [vmem:[#allocation22] sm:$0xf]
    %v3627 = vld [vmem:[#allocation22 + $0x4] sm:$0x1]
    %v3628 = vld [vmem:[#allocation23] sm:$0x1]
    %v3630 = vlaneseq
    %v3631 = vshrl.u32 %v3630, 7
    %v3632 = vsub.s32 0, %v3631
    %v3633 = vrot.slane %v3628, %v3632
    %v3645 = vcombine.low %v3616, %v3617
    %v3646 = vcombine.low %v3618, %v3619
    %v3647 = vcombine.low %v3620, %v3621
    %v3648 = vcombine.low %v3622, %v3623
    %v3650 = vunpack.c.l.s4 1966171168
    %v3651 = vunpack.c.0.s8 %v3650
    %v3652 = vlaneseq
    %v3653 = vshrl.u32 %v3652, 7
    %v3654 = vsub.s32 %v3651, %v3653
    %v3655 = vrot.slane %v3645, %v3654
    %v3657 = vunpack.c.l.s4 1966171168
    %v3658 = vunpack.c.0.s8 %v3657
    %v3659 = vlaneseq
    %v3660 = vshrl.u32 %v3659, 7
    %v3661 = vsub.s32 %v3658, %v3660
    %v3662 = vrot.slane %v3646, %v3661
    %v3664 = vunpack.c.l.s4 1966171168
    %v3665 = vunpack.c.0.s8 %v3664
    %v3666 = vlaneseq
    %v3667 = vshrl.u32 %v3666, 7
    %v3668 = vsub.s32 %v3665, %v3667
    %v3669 = vrot.slane %v3647, %v3668
    %v3671 = vunpack.c.l.s4 1966171168
    %v3672 = vunpack.c.0.s8 %v3671
    %v3673 = vlaneseq
    %v3674 = vshrl.u32 %v3673, 7
    %v3675 = vsub.s32 %v3672, %v3674
    %v3676 = vrot.slane %v3648, %v3675
    %v3677 = vcombine.low %v3655, %v3662
    %v3678 = vcombine.low %v3669, %v3676
    %v3680 = vunpack.c.l.s4 1966171168
    %v3681 = vunpack.c.0.s8 %v3680
    %v3682 = vlaneseq
    %v3683 = vshrl.u32 %v3682, 7
    %v3684 = vsub.s32 %v3681, %v3683
    %v3685 = vrot.slane %v3677, %v3684
    %v3687 = vunpack.c.l.s4 1966171168
    %v3688 = vunpack.c.0.s8 %v3687
    %v3689 = vlaneseq
    %v3690 = vshrl.u32 %v3689, 7
    %v3691 = vsub.s32 %v3688, %v3690
    %v3692 = vrot.slane %v3678, %v3691
    %v3693 = vcombine.low %v3685, %v3692
    %v3694 = vcombine.low %v3624, %v3625
    %v3696 = vunpack.c.l.s4 1966171168
    %v3697 = vunpack.c.0.s8 %v3696
    %v3698 = vlaneseq
    %v3699 = vshrl.u32 %v3698, 7
    %v3700 = vsub.s32 %v3697, %v3699
    %v3701 = vrot.slane %v3694, %v3700
    %v3703 = vunpack.c.l.s4 1966171168
    %v3704 = vunpack.c.0.s8 %v3703
    %v3705 = vlaneseq
    %v3706 = vshrl.u32 %v3705, 7
    %v3707 = vsub.s32 %v3704, %v3706
    %v3708 = vrot.slane %v3701, %v3707
    %v3711 = vunpack.c.l.b16 %v3626
    %v3712 = vunpack.c.l.b16 %v3627
    %v3713 = vpack.c.b16 %v3712, %v3711
    %vm3714 = vcmask 80896
    %v3716 = vsel %vm3714, %v3693, 0
    %v3719 = vsel %vm3714, %v3708, 0
    %vm3721 = vcmask 1044480
    %v3723 = vsel %vm3721, %v3713, 0
    %3725 = vmatprep.subr.bf16.mxu0 0
    %3726 = vmatpush1.bf16.msra.mxu0 %v3723
    %3727 = vmatprep.subr.bf16.mxu0 0
    %3728 = vmatpush1.bf16.msra.mxu0 0
    %3729 = vmatprep.subr.bf16.mxu0 0
    %3730 = vmatpush1.bf16.msra.mxu0 0
    %3731 = vmatprep.subr.bf16.mxu0 0
    %3732 = vmatpush1.bf16.msra.mxu0 0
    %3733 = vmatprep.subr.bf16.mxu0 0
    %3734 = vmatpush1.bf16.msra.mxu0 0
    %3735 = vmatprep.subr.bf16.mxu0 0
    %3736 = vmatpush1.bf16.msra.mxu0 0
    %3737 = vmatprep.subr.bf16.mxu0 0
    %3738 = vmatpush1.bf16.msra.mxu0 0
    %3739 = vmatprep.subr.bf16.mxu0 0
    %3740 = vmatpush1.bf16.msra.mxu0 0
    %3741 = vmatprep.subr.bf16.mxu0 0
    %3742 = vmatpush1.bf16.msra.mxu0 0
    %3743 = vmatprep.subr.bf16.mxu0 0
    %3744 = vmatpush1.bf16.msra.mxu0 0
    %3745 = vmatprep.subr.bf16.mxu0 0
    %3746 = vmatpush1.bf16.msra.mxu0 0
    %3747 = vmatprep.subr.bf16.mxu0 0
    %3748 = vmatpush1.bf16.msra.mxu0 0
    %3749 = vmatprep.subr.bf16.mxu0 0
    %3750 = vmatpush1.bf16.msra.mxu0 0
    %3751 = vmatprep.subr.bf16.mxu0 0
    %3752 = vmatpush1.bf16.msra.mxu0 0
    %3753 = vmatprep.subr.bf16.mxu0 0
    %3754 = vmatpush1.bf16.msra.mxu0 0
    %3755 = vmatprep.subr.bf16.mxu0 0
    %3756 = vmatpush1.bf16.msra.mxu0 0
    %3757 = vmatprep.mubr.bf16.mxu0 0
    %3758 = vmatmul.mubr.bf16.gmra.mrb[0].mxu0 %v3716
    %v3759 = vpop.f32.mrb[0].mxu0
    %v3760 = vadd.f32 %v3633, %v3759
    %v3761 = vpop.f32.mrb[0].mxu0
    %v3762 = vpop.f32.mrb[0].mxu0
    %v3763 = vadd.f32 %v3633, %v3762
    %v3764 = vpop.f32.mrb[0].mxu0
    %3765 = vmatprep.mubr.bf16.mxu0 0
    %3766 = vmatmul.mubr.bf16.gmra.mrb[0].mxu0 %v3719
    %v3767 = vpop.f32.mrb[0].mxu0
    %v3768 = vadd.f32 %v3633, %v3767
    %v3769 = vpop.f32.mrb[0].mxu0
    %v3770 = vpop.f32.mrb[0].mxu0
    %v3771 = vpop.f32.mrb[0].mxu0
    %3772 = vdwg.mxu0
    %v3773 = vmul.f32 %v3613, %v3760
    %v3774 = vmul.f32 %v3614, %v3763
    %v3775 = vmul.f32 %v3615, %v3768
    %3776 = vadd.xlane.f32.xlu0 %v3773
    %v3777 = vpop.xlane.xlu0 %3776
    %3778 = vadd.xlane.f32.xlu0 %v3774
    %v3779 = vpop.xlane.xlu0 %3778
    %v3780 = vsel %vm364, %v3775, 0.0
    %3781 = vadd.xlane.f32.xlu0 %v3780
    %v3782 = vpop.xlane.xlu0 %3781
    %v3783 = vadd.f32 %v3777, 1e-08
    %v3784 = vadd.f32 %v3779, 1e-08
    %v3785 = vadd.f32 %v3782, 1e-08
    %v3786 = vrcp.pop %v3783
    %v3787 = vrcp.pop %v3784
    %v3788 = vrcp.pop %v3785
    %v3789 = vmul.f32 %v3773, %v3786
    %v3790 = vmul.f32 %v3774, %v3787
    %v3791 = vmul.f32 %v3775, %v3788
    %v3802 = vcombine.low %v2459, %v2462
    %v3803 = vcombine.low %v2465, %v2468
    %v3805 = vunpack.c.l.s4 1983009808
    %v3806 = vunpack.c.0.s8 %v3805
    %v3807 = vlaneseq
    %v3808 = vshrl.u32 %v3807, 7
    %v3809 = vsub.s32 %v3806, %v3808
    %v3810 = vrot.slane %v3802, %v3809
    %v3812 = vunpack.c.l.s4 1983009808
    %v3813 = vunpack.c.0.s8 %v3812
    %v3814 = vlaneseq
    %v3815 = vshrl.u32 %v3814, 7
    %v3816 = vsub.s32 %v3813, %v3815
    %v3817 = vrot.slane %v3803, %v3816
    %v3818 = vcombine.low %v3810, %v3817
    %v3819 = vcombine.low %v2471, %v2474
    %v3820 = vcombine.low %v2477, %v2480
    %v3822 = vunpack.c.l.s4 1983009808
    %v3823 = vunpack.c.0.s8 %v3822
    %v3824 = vlaneseq
    %v3825 = vshrl.u32 %v3824, 7
    %v3826 = vsub.s32 %v3823, %v3825
    %v3827 = vrot.slane %v3819, %v3826
    %v3829 = vunpack.c.l.s4 1983009808
    %v3830 = vunpack.c.0.s8 %v3829
    %v3831 = vlaneseq
    %v3832 = vshrl.u32 %v3831, 7
    %v3833 = vsub.s32 %v3830, %v3832
    %v3834 = vrot.slane %v3820, %v3833
    %v3835 = vcombine.low %v3827, %v3834
    %v3836 = vcombine.low %v2483, %v2486
    %v3838 = vunpack.c.l.s4 1983009808
    %v3839 = vunpack.c.0.s8 %v3838
    %v3840 = vlaneseq
    %v3841 = vshrl.u32 %v3840, 7
    %v3842 = vsub.s32 %v3839, %v3841
    %v3843 = vrot.slane %v3836, %v3842
    %v3847 = vmul.f32 %v3789, %v3818
    %v3848 = vmul.f32 %v3790, %v3835
    %v3849 = vmul.f32 %v3791, %v3843
    %v3853 = vcombine.high %v3847, %v3847
    %v3855 = vunpack.c.l.s4 1983009808
    %v3856 = vunpack.c.0.s8 %v3855
    %v3857 = vlaneseq
    %v3858 = vshrl.u32 %v3857, 7
    %v3859 = vsub.s32 %v3856, %v3858
    %v3860 = vrot.slane %v3847, %v3859
    %v3862 = vunpack.c.l.s4 1983009808
    %v3863 = vunpack.c.0.s8 %v3862
    %v3864 = vlaneseq
    %v3865 = vshrl.u32 %v3864, 7
    %v3866 = vsub.s32 %v3863, %v3865
    %v3867 = vrot.slane %v3853, %v3866
    %v3868 = vcombine.high %v3860, %v3860
    %v3869 = vcombine.high %v3867, %v3867
    %v3870 = vcombine.high %v3848, %v3848
    %v3872 = vunpack.c.l.s4 1983009808
    %v3873 = vunpack.c.0.s8 %v3872
    %v3874 = vlaneseq
    %v3875 = vshrl.u32 %v3874, 7
    %v3876 = vsub.s32 %v3873, %v3875
    %v3877 = vrot.slane %v3848, %v3876
    %v3879 = vunpack.c.l.s4 1983009808
    %v3880 = vunpack.c.0.s8 %v3879
    %v3881 = vlaneseq
    %v3882 = vshrl.u32 %v3881, 7
    %v3883 = vsub.s32 %v3880, %v3882
    %v3884 = vrot.slane %v3870, %v3883
    %v3885 = vcombine.high %v3877, %v3877
    %v3886 = vcombine.high %v3884, %v3884
    %v3888 = vunpack.c.l.s4 1983009808
    %v3889 = vunpack.c.0.s8 %v3888
    %v3890 = vlaneseq
    %v3891 = vshrl.u32 %v3890, 7
    %v3892 = vsub.s32 %v3889, %v3891
    %v3893 = vrot.slane %v3849, %v3892
    %v3894 = vcombine.high %v3893, %v3893
    %vm3905 = vcmask 123904
    %3906 = vst.msk [vmem:[#allocation26] sm:$0x3] %vm3905, %v3860
    %3907 = vst.msk [vmem:[#allocation26 + $0x2] sm:$0x3] %vm3905, %v3868
    %3908 = vst.msk [vmem:[#allocation26 + $0x4] sm:$0x3] %vm3905, %v3867
    %3909 = vst.msk [vmem:[#allocation26 + $0x6] sm:$0x3] %vm3905, %v3869
    %3910 = vst.msk [vmem:[#allocation26 + $0x8] sm:$0x3] %vm3905, %v3877
    %3911 = vst.msk [vmem:[#allocation26 + $0xa] sm:$0x3] %vm3905, %v3885
    %3912 = vst.msk [vmem:[#allocation26 + $0xc] sm:$0x3] %vm3905, %v3884
    %3913 = vst.msk [vmem:[#allocation26 + $0xe] sm:$0x3] %vm3905, %v3886
    %3914 = vst.msk [vmem:[#allocation26 + $0x10] sm:$0x3] %vm3905, %v3893
    %3915 = vst.msk [vmem:[#allocation26 + $0x12] sm:$0x3] %vm3905, %v3894
    // Predicated region
    $region158: #{forward.1} parent=1 // pred_check
      _
    $region159: #{forward.1} parent=1 // pred_check_branch
      %3917 = sbr.rel (0) target = $region161
    $region160: #{forward.1} parent=1 // pred_region
      %s3919 = ssub.s32 320, 320
      %3920 = vsyncadd [#allocation4], %s3919
      %s3921 = sshll.u32 [#allocation26], 4
      %s3922 = int_to_ptr.vmem [resolvable:$true] %s3921
      %3927 = dma.vmem_to_hbm [thread:$0]  %s3922, 320, %s24, [#allocation4], 32, 32, 2
    $region161: #{forward.1} parent=1 // pred_fallthru
      _
    // Predicated region
    $region162: #{forward.1} parent=1 // pred_check
      _
    $region163: #{forward.1} parent=1 // pred_check_branch
      %3929 = sbr.rel (0) target = $region165
    $region164: #{forward.1} parent=1 // pred_region
      %3930 = dma.done [#allocation4], 320
    $region165: #{forward.1} parent=1 // pred_fallthru
      _
    %3931 = vsyncpa [#allocation3], 1
    %3932 = vsyncpa [#allocation6], 1
    %3933 = vsyncpa [#allocation9], 1
    %3934 = vsyncpa [#allocation12], 1
    %3935 = vsyncpa [#allocation15], 1
    %3936 = vsyncpa [#allocation18], 1
    %3937 = vsyncpa [#allocation21], 1
    %3938 = vsyncpa [#allocation24], 1
    %3939 = vsyncpa [#allocation4], 1

</llo_original>
